<compile_context>
chip_gen: v7x
topology: tpu7x:2x2x1
jax: 0.10.0
libtpu: 0.0.40
codegen_flags: <defaults>
</compile_context>

<pallas_src>
import functools

import jax
import jax.numpy as jnp
from jax.experimental import pallas as pl
from jax.experimental.pallas import tpu as pltpu


def base2d_forward_kernel(cond_ref, wi_ref,
                          w1_ref, b1_ref, w2_ref, b2_ref,
                          w3_ref, b3_ref, w4_ref, b4_ref,
                          fac_ref, pdf_ref,
                          out_ref,
                          *, D, angular, res):
    """One batch tile, batch-last (batch on the 128-lane axis).

    cond_ref: (in_dim, TB)      wi_ref: (2, TB)
    wK_ref:   (out_k, in_k)     bK_ref: (out_k, 1)
    fac_ref:  (angular, D, 1)   fac_ref[a, d, 0] == fac[a, d]
    pdf_ref:  (D, res*res, angular)  pdf_ref[d, ty*res+tx, a] == pdf[a, d, ty, tx]
    out_ref:  (1, TB)
    """
    f32 = jnp.float32
    eps = 1e-12
    RR = res * res
    TB = cond_ref.shape[1]

    # ---------------- MLP: 3 x (Linear(32)+ReLU) -> Linear(4*D), batch-last ----------------
    x = cond_ref[...]                                                           # (in_dim, TB)
    h = jnp.maximum(jnp.dot(w1_ref[...], x, preferred_element_type=f32) + b1_ref[...], 0.0)
    h = jnp.maximum(jnp.dot(w2_ref[...], h, preferred_element_type=f32) + b2_ref[...], 0.0)
    h = jnp.maximum(jnp.dot(w3_ref[...], h, preferred_element_type=f32) + b3_ref[...], 0.0)
    feat = jnp.dot(w4_ref[...], h, preferred_element_type=f32) + b4_ref[...]    # (4D, TB)

    # Head rows were permuted in the wrapper to [w | vx | vy | z]: every split is a
    # contiguous sublane slice, no (B, D, 2) reshape needed.
    w_raw = feat[0 * D:1 * D, :]                                                # (D, TB)
    vx = feat[1 * D:2 * D, :]
    vy = feat[2 * D:3 * D, :]
    zz = feat[3 * D:4 * D, :]

    # F.normalize(v, dim=-1, eps=1e-12):  v / max(||v||, eps) == v * rsqrt(max(||v||^2, eps^2))
    inv_vn = jax.lax.rsqrt(jnp.maximum(vx * vx + vy * vy, eps * eps))
    vxn = vx * inv_vn
    vyn = vy * inv_vn

    # angular slice selection: z_idx = round(sigmoid(z) * angular).clamp(0, angular-1)
    z = jax.nn.sigmoid(zz)
    z_idx = jnp.clip(jnp.round(z * angular), 0.0, angular - 1.0).astype(jnp.int32)   # (D, TB)

    # rotate wi into each lobe frame, nearest-texel coordinates
    wi = wi_ref[...]                                                            # (2, TB)
    wix = wi[0:1, :]
    wiy = wi[1:2, :]
    ux = vxn * wix + vyn * wiy                                                  # (D, TB)
    uy = -vyn * wix + vxn * wiy
    # TODO(synk): exact texel-addressing convention of the CUDA fetch_idx_texture_2d
    # extension is not available; a nearest-neighbor fetch with [-1,1] -> [0,res) mapping
    # is used here.
    tx = jnp.clip(jnp.floor((ux * 0.5 + 0.5) * res), 0.0, res - 1.0).astype(jnp.int32)
    ty = jnp.clip(jnp.floor((uy * 0.5 + 0.5) * res), 0.0, res - 1.0).astype(jnp.int32)
    lin = ty * res + tx                                                         # (D, TB)

    # ---------------- per-lobe weights: relu(w) * fac[z_idx, d], L1 norm -------------------
    # fac gather, loop-free: leading-axis one-hot reduce (only a leading-dim broadcast of
    # z_idx and a lane-splat of fac -- cheap, relayout-free).
    a_sel = (jax.lax.broadcasted_iota(jnp.int32, (angular, D, TB), 0) == z_idx[None, :, :])
    fac_g = jnp.sum(jnp.where(a_sel, fac_ref[...], 0.0), axis=0)                # (D, TB)

    w = jnp.maximum(w_raw, 0.0) * fac_g                                         # (D, TB)
    l1 = jnp.sum(jnp.abs(w), axis=0, keepdims=True)                             # (1, TB)

    # ---------------- texture fetch + weighted reduction ----------------------------------
    # Factorized one-hot gather per lobe; every step is a lane-dense (.., TB) 2-D op.
    # Static unroll over D: the only value carried across iterations is the (1, TB)
    # accumulator, so vreg live ranges stay bounded.
    a_iota = jax.lax.broadcasted_iota(jnp.int32, (angular, TB), 0)
    r_iota = jax.lax.broadcasted_iota(jnp.int32, (RR, TB), 0)
    acc = jnp.zeros((1, TB), f32)
    for d in range(D):
        oh_d = (a_iota == z_idx[d:d + 1, :]).astype(f32)                        # (A, TB)
        tex_d = jnp.dot(pdf_ref[d], oh_d, preferred_element_type=f32)           # (RR, TB)
        val_d = jnp.sum(jnp.where(r_iota == lin[d:d + 1, :], tex_d, 0.0),
                        axis=0, keepdims=True)                                  # (1, TB)
        acc = acc + w[d:d + 1, :] * val_d

    # L1 normalization folded into the reduction:
    #   sum_d (w_d / max(|w|_1, eps)) * val_d == acc / max(l1, eps)
    l1c = jnp.maximum(l1, eps)
    inv_l1 = pl.reciprocal(l1c, approx=True)
    inv_l1 = inv_l1 * (2.0 - l1c * inv_l1)        # one Newton step -> ~f32 accuracy
    out_ref[...] = acc * inv_l1


def make_params(key, *, res, angular, D, in_dim=10, hidden=32):
    """Deterministic synthetic parameters matching the torch module's shapes."""
    keys = jax.random.split(key, 10)

    def randn(k, shape, scale):
        return jax.random.normal(k, shape, jnp.float32) * scale

    def linear(kw, kb, fan_in, fan_out):
        lim = 1.0 / (fan_in ** 0.5)
        W = jax.random.uniform(kw, (fan_in, fan_out), jnp.float32, -lim, lim)
        b = jax.random.uniform(kb, (1, fan_out), jnp.float32, -lim, lim)
        return W, b

    pdf = randn(keys[0], (angular, D, res, res), 0.01)
    fac = randn(keys[1], (angular, D), 0.01)
    # mlp(8 + 2, [32]*3, D*4): Linear+ReLU hidden layers, linear output head.
    W1, b1 = linear(keys[2], keys[3], in_dim, hidden)
    W2, b2 = linear(keys[4], keys[5], hidden, hidden)
    W3, b3 = linear(keys[6], keys[7], hidden, hidden)
    W4, b4 = linear(keys[8], keys[9], hidden, 4 * D)
    return dict(pdf=pdf, fac=fac, W1=W1, b1=b1, W2=W2, b2=b2,
                W3=W3, b3=b3, W4=W4, b4=b4)


def base2d_inference_forward(wi, cond, params, *, res, angular, D, block_b=512):
    """Equivalent of Base2DInference.forward(wi, cond, inverse=False) -> (None, pdf_out)."""
    B, in_dim = cond.shape
    RR = res * res

    # batch tile on the lane axis: multiple of 128; batch is padded to a multiple of it
    TB = max(128, (min(block_b, 2048) // 128) * 128)
    B_pad = ((B + TB - 1) // TB) * TB
    grid = (B_pad // TB,)

    # ---- glue: re-layout inputs / parameters for the batch-last kernel (no compute) ----
    cond_t = jnp.pad(cond, ((0, B_pad - B), (0, 0))).T                  # (in_dim, B_pad)
    wi_t = jnp.pad(wi, ((0, B_pad - B), (0, 0))).T                      # (2, B_pad)

    ar = jnp.arange(D)
    # permute head columns: [w(0:D) | v interleaved (D:3D) | z(3D:4D)] -> [w | vx | vy | z]
    perm = jnp.concatenate([ar, D + 2 * ar, D + 2 * ar + 1, 3 * D + ar])
    w1t, b1c = params["W1"].T, params["b1"].T
    w2t, b2c = params["W2"].T, params["b2"].T
    w3t, b3c = params["W3"].T, params["b3"].T
    w4t, b4c = params["W4"][:, perm].T, params["b4"][:, perm].T
    fac_c = params["fac"].reshape(angular, D, 1)                        # fac_c[a, d, 0] = fac[a, d]
    pdf_t = params["pdf"].transpose(1, 2, 3, 0).reshape(D, RR, angular)  # pdf_t[d, r, a]

    kernel = functools.partial(base2d_forward_kernel, D=D, angular=angular, res=res)

    batch_inputs = (cond_t, wi_t)
    const_inputs = (w1t, b1c, w2t, b2c, w3t, b3c, w4t, b4c, fac_c, pdf_t)

    def batch_spec(x):
        return pl.BlockSpec((x.shape[0], TB), lambda i: (0, i))

    def const_spec(x):
        # constant index_map -> DMA'd once, stays VMEM-resident across grid steps
        return pl.BlockSpec(x.shape, lambda i, _n=x.ndim: (0,) * _n)

    out = pl.pallas_call(
        kernel,
        out_shape=jax.ShapeDtypeStruct((1, B_pad), jnp.float32),
        grid=grid,
        in_specs=[batch_spec(x) for x in batch_inputs] + [const_spec(x) for x in const_inputs],
        out_specs=pl.BlockSpec((1, TB), lambda i: (0, i)),
        compiler_params=pltpu.CompilerParams(
            dimension_semantics=("parallel",),          # shard batch tiles across TCs (v7x)
            vmem_limit_bytes=32 * 1024 * 1024,
        ),
    )(*batch_inputs, *const_inputs)

    # TODO(synk): inverse=True path (sample_idx_texture_2d + init_pdf CDF buffers) not implemented.
    return None, out[0, :B]


def reference_forward(wi, cond, params, *, res, angular, D):
    """Pure-JAX reference of the same forward semantics (for validation)."""
    h = jnp.maximum(cond @ params["W1"] + params["b1"], 0.0)
    h = jnp.maximum(h @ params["W2"] + params["b2"], 0.0)
    h = jnp.maximum(h @ params["W3"] + params["b3"], 0.0)
    feat = h @ params["W4"] + params["b4"]
    B = cond.shape[0]
    w_raw = feat[:, :D]
    v = feat[:, D:3 * D].reshape(B, D, 2)
    z = jax.nn.sigmoid(feat[:, 3 * D:])
    v = v / jnp.maximum(jnp.linalg.norm(v, axis=-1, keepdims=True), 1e-12)
    z_idx = jnp.clip(jnp.round(z * angular), 0, angular - 1).astype(jnp.int32)
    fac_g = params["fac"][z_idx, jnp.arange(D)[None, :]]
    w = jnp.maximum(w_raw, 0.0) * fac_g
    w = w / jnp.maximum(jnp.sum(jnp.abs(w), axis=-1, keepdims=True), 1e-12)
    vx, vy = v[..., 0], v[..., 1]
    ux = vx * wi[:, 0:1] + vy * wi[:, 1:2]
    uy = -vy * wi[:, 0:1] + vx * wi[:, 1:2]
    tx = jnp.clip(jnp.floor((ux * 0.5 + 0.5) * res), 0, res - 1).astype(jnp.int32)
    ty = jnp.clip(jnp.floor((uy * 0.5 + 0.5) * res), 0, res - 1).astype(jnp.int32)
    vals = params["pdf"][z_idx, jnp.arange(D)[None, :], ty, tx]
    return jnp.sum(w * vals, axis=-1)


if __name__ == "__main__":
    B, res, angular, D = 500, 16, 8, 8

    key = jax.random.PRNGKey(0)
    k_params, k_cond, k_wi = jax.random.split(key, 3)
    params = make_params(k_params, res=res, angular=angular, D=D)

    cond = jax.random.normal(k_cond, (B, 10), jnp.float32)
    wi = jax.random.uniform(k_wi, (B, 2), jnp.float32, -1.0, 1.0)

    # small tile for the tiny demo so the grid actually iterates (4 tiles of 128 + padding);
    # use the default block_b=512..1024 for production batch sizes.
    _, pdf_out = base2d_inference_forward(wi, cond, params, res=res, angular=angular, D=D,
                                          block_b=128)
    pdf_out = jax.block_until_ready(pdf_out)

    ref = jax.block_until_ready(reference_forward(wi, cond, params, res=res, angular=angular, D=D))

    assert pdf_out.shape == (B,)
    assert bool(jnp.all(jnp.isfinite(pdf_out)))
    # z_idx / texel coordinates are discrete (round / floor): ~1e-6 differences between the
    # in-kernel MXU matmuls and the XLA reference matmul can flip an index that sits exactly
    # on a decision boundary, which changes the gathered texel.  Require that the
    # overwhelming majority of elements match tightly instead of a brittle global allclose.
    close = jnp.isclose(pdf_out, ref, atol=1e-4, rtol=1e-4)
    frac_close = float(jnp.mean(close.astype(jnp.float32)))
    assert frac_close >= 0.99, (frac_close, pdf_out[:8], ref[:8])

    print("KERNEL_OK")
</pallas_src>

<mosaic_0001>
module attributes {stable_mosaic.version = 11 : i64} {
  func.func @base2d_forward_kernel(%arg0: i32, %arg1: memref<10x128xf32, #tpu.memory_space<vmem>>, %arg2: memref<2x128xf32, #tpu.memory_space<vmem>>, %arg3: memref<32x10xf32, #tpu.memory_space<vmem>>, %arg4: memref<32x1xf32, #tpu.memory_space<vmem>>, %arg5: memref<32x32xf32, #tpu.memory_space<vmem>>, %arg6: memref<32x1xf32, #tpu.memory_space<vmem>>, %arg7: memref<32x32xf32, #tpu.memory_space<vmem>>, %arg8: memref<32x1xf32, #tpu.memory_space<vmem>>, %arg9: memref<32x32xf32, #tpu.memory_space<vmem>>, %arg10: memref<32x1xf32, #tpu.memory_space<vmem>>, %arg11: memref<8x8x1xf32, #tpu.memory_space<vmem>>, %arg12: memref<8x256x8xf32, #tpu.memory_space<vmem>>, %arg13: memref<1x128xf32, #tpu.memory_space<vmem>>) attributes {dimension_semantics = [#tpu.dimension_semantics<parallel>], iteration_bounds = array<i64: 4>, scalar_prefetch = 0 : i64, scratch_operands = 0 : i64, tpu.core_type = #tpu.core_type<tc>, window_params = [{transform_indices = @transform_0, window_bounds = array<i64: 10, 128>}, {transform_indices = @transform_1, window_bounds = array<i64: 2, 128>}, {pipeline_mode = #tpu.pipeline_mode<synchronous>, transform_indices = @transform_2, window_bounds = array<i64: 32, 10>}, {pipeline_mode = #tpu.pipeline_mode<synchronous>, transform_indices = @transform_3, window_bounds = array<i64: 32, 1>}, {pipeline_mode = #tpu.pipeline_mode<synchronous>, transform_indices = @transform_4, window_bounds = array<i64: 32, 32>}, {pipeline_mode = #tpu.pipeline_mode<synchronous>, transform_indices = @transform_5, window_bounds = array<i64: 32, 1>}, {pipeline_mode = #tpu.pipeline_mode<synchronous>, transform_indices = @transform_6, window_bounds = array<i64: 32, 32>}, {pipeline_mode = #tpu.pipeline_mode<synchronous>, transform_indices = @transform_7, window_bounds = array<i64: 32, 1>}, {pipeline_mode = #tpu.pipeline_mode<synchronous>, transform_indices = @transform_8, window_bounds = array<i64: 32, 32>}, {pipeline_mode = #tpu.pipeline_mode<synchronous>, transform_indices = @transform_9, window_bounds = array<i64: 32, 1>}, {pipeline_mode = #tpu.pipeline_mode<synchronous>, transform_indices = @transform_10, window_bounds = array<i64: 8, 8, 1>}, {pipeline_mode = #tpu.pipeline_mode<synchronous>, transform_indices = @transform_11, window_bounds = array<i64: 8, 256, 8>}, {transform_indices = @transform_12, window_bounds = array<i64: 1, 128>}]} {
    %c0 = arith.constant 0 : index
    %c0_0 = arith.constant 0 : index
    %0 = vector.load %arg1[%c0, %c0_0] : memref<10x128xf32, #tpu.memory_space<vmem>>, vector<10x128xf32>
    %c0_1 = arith.constant 0 : index
    %c0_2 = arith.constant 0 : index
    %1 = vector.load %arg3[%c0_1, %c0_2] : memref<32x10xf32, #tpu.memory_space<vmem>>, vector<32x10xf32>
    %cst = arith.constant dense<0.000000e+00> : vector<32x128xf32>
    %2 = tpu.matmul %1, %0, %cst {dimension_numbers = #tpu.dot_dimension_numbers<[1], [0], [0], [1], [0, 0, 1, 1], [], []>} : vector<32x10xf32>, vector<10x128xf32>, vector<32x128xf32> -> vector<32x128xf32>
    %c0_3 = arith.constant 0 : index
    %c0_4 = arith.constant 0 : index
    %3 = vector.load %arg4[%c0_3, %c0_4] : memref<32x1xf32, #tpu.memory_space<vmem>>, vector<32x1xf32>
    %4 = vector.broadcast %3 : vector<32x1xf32> to vector<32x128xf32>
    %5 = arith.addf %2, %4 : vector<32x128xf32>
    %cst_5 = arith.constant 0.000000e+00 : f32
    %6 = vector.broadcast %cst_5 : f32 to vector<32x128xf32>
    %7 = arith.maximumf %5, %6 : vector<32x128xf32>
    %c0_6 = arith.constant 0 : index
    %c0_7 = arith.constant 0 : index
    %8 = vector.load %arg5[%c0_6, %c0_7] : memref<32x32xf32, #tpu.memory_space<vmem>>, vector<32x32xf32>
    %cst_8 = arith.constant dense<0.000000e+00> : vector<32x128xf32>
    %9 = tpu.matmul %8, %7, %cst_8 {dimension_numbers = #tpu.dot_dimension_numbers<[1], [0], [0], [1], [0, 0, 1, 1], [], []>} : vector<32x32xf32>, vector<32x128xf32>, vector<32x128xf32> -> vector<32x128xf32>
    %c0_9 = arith.constant 0 : index
    %c0_10 = arith.constant 0 : index
    %10 = vector.load %arg6[%c0_9, %c0_10] : memref<32x1xf32, #tpu.memory_space<vmem>>, vector<32x1xf32>
    %11 = vector.broadcast %10 : vector<32x1xf32> to vector<32x128xf32>
    %12 = arith.addf %9, %11 : vector<32x128xf32>
    %cst_11 = arith.constant 0.000000e+00 : f32
    %13 = vector.broadcast %cst_11 : f32 to vector<32x128xf32>
    %14 = arith.maximumf %12, %13 : vector<32x128xf32>
    %c0_12 = arith.constant 0 : index
    %c0_13 = arith.constant 0 : index
    %15 = vector.load %arg7[%c0_12, %c0_13] : memref<32x32xf32, #tpu.memory_space<vmem>>, vector<32x32xf32>
    %cst_14 = arith.constant dense<0.000000e+00> : vector<32x128xf32>
    %16 = tpu.matmul %15, %14, %cst_14 {dimension_numbers = #tpu.dot_dimension_numbers<[1], [0], [0], [1], [0, 0, 1, 1], [], []>} : vector<32x32xf32>, vector<32x128xf32>, vector<32x128xf32> -> vector<32x128xf32>
    %c0_15 = arith.constant 0 : index
    %c0_16 = arith.constant 0 : index
    %17 = vector.load %arg8[%c0_15, %c0_16] : memref<32x1xf32, #tpu.memory_space<vmem>>, vector<32x1xf32>
    %18 = vector.broadcast %17 : vector<32x1xf32> to vector<32x128xf32>
    %19 = arith.addf %16, %18 : vector<32x128xf32>
    %cst_17 = arith.constant 0.000000e+00 : f32
    %20 = vector.broadcast %cst_17 : f32 to vector<32x128xf32>
    %21 = arith.maximumf %19, %20 : vector<32x128xf32>
    %c0_18 = arith.constant 0 : index
    %c0_19 = arith.constant 0 : index
    %22 = vector.load %arg9[%c0_18, %c0_19] : memref<32x32xf32, #tpu.memory_space<vmem>>, vector<32x32xf32>
    %cst_20 = arith.constant dense<0.000000e+00> : vector<32x128xf32>
    %23 = tpu.matmul %22, %21, %cst_20 {dimension_numbers = #tpu.dot_dimension_numbers<[1], [0], [0], [1], [0, 0, 1, 1], [], []>} : vector<32x32xf32>, vector<32x128xf32>, vector<32x128xf32> -> vector<32x128xf32>
    %c0_21 = arith.constant 0 : index
    %c0_22 = arith.constant 0 : index
    %24 = vector.load %arg10[%c0_21, %c0_22] : memref<32x1xf32, #tpu.memory_space<vmem>>, vector<32x1xf32>
    %25 = vector.broadcast %24 : vector<32x1xf32> to vector<32x128xf32>
    %26 = arith.addf %23, %25 : vector<32x128xf32>
    %27 = vector.extract_strided_slice %26 {offsets = [0, 0], sizes = [8, 128], strides = [1, 1]} : vector<32x128xf32> to vector<8x128xf32>
    %28 = vector.extract_strided_slice %26 {offsets = [8, 0], sizes = [8, 128], strides = [1, 1]} : vector<32x128xf32> to vector<8x128xf32>
    %29 = vector.extract_strided_slice %26 {offsets = [16, 0], sizes = [8, 128], strides = [1, 1]} : vector<32x128xf32> to vector<8x128xf32>
    %30 = vector.extract_strided_slice %26 {offsets = [24, 0], sizes = [8, 128], strides = [1, 1]} : vector<32x128xf32> to vector<8x128xf32>
    %31 = arith.mulf %28, %28 : vector<8x128xf32>
    %32 = arith.mulf %29, %29 : vector<8x128xf32>
    %33 = arith.addf %31, %32 : vector<8x128xf32>
    %cst_23 = arith.constant 1.000000e-24 : f32
    %34 = vector.broadcast %cst_23 : f32 to vector<8x128xf32>
    %35 = arith.maximumf %33, %34 : vector<8x128xf32>
    %36 = math.rsqrt %35 : vector<8x128xf32>
    %37 = arith.mulf %28, %36 : vector<8x128xf32>
    %38 = arith.mulf %29, %36 : vector<8x128xf32>
    %39 = arith.negf %30 : vector<8x128xf32>
    %40 = math.exp %39 : vector<8x128xf32>
    %cst_24 = arith.constant 1.000000e+00 : f32
    %41 = vector.broadcast %cst_24 : f32 to vector<8x128xf32>
    %42 = arith.addf %41, %40 : vector<8x128xf32>
    %43 = arith.divf %41, %42 : vector<8x128xf32>
    %cst_25 = arith.constant 8.000000e+00 : f32
    %44 = vector.broadcast %cst_25 : f32 to vector<8x128xf32>
    %45 = arith.mulf %43, %44 : vector<8x128xf32>
    %46 = math.roundeven %45 : vector<8x128xf32>
    %cst_26 = arith.constant 0.000000e+00 : f32
    %cst_27 = arith.constant 7.000000e+00 : f32
    %47 = vector.broadcast %cst_26 : f32 to vector<8x128xf32>
    %48 = arith.maximumf %47, %46 : vector<8x128xf32>
    %49 = vector.broadcast %cst_27 : f32 to vector<8x128xf32>
    %50 = arith.minimumf %49, %48 : vector<8x128xf32>
    %51 = arith.fptosi %50 : vector<8x128xf32> to vector<8x128xi32>
    %c0_28 = arith.constant 0 : index
    %c0_29 = arith.constant 0 : index
    %52 = vector.load %arg2[%c0_28, %c0_29] : memref<2x128xf32, #tpu.memory_space<vmem>>, vector<2x128xf32>
    %53 = vector.extract_strided_slice %52 {offsets = [0, 0], sizes = [1, 128], strides = [1, 1]} : vector<2x128xf32> to vector<1x128xf32>
    %54 = vector.extract_strided_slice %52 {offsets = [1, 0], sizes = [1, 128], strides = [1, 1]} : vector<2x128xf32> to vector<1x128xf32>
    %55 = vector.broadcast %53 : vector<1x128xf32> to vector<8x128xf32>
    %56 = arith.mulf %37, %55 : vector<8x128xf32>
    %57 = vector.broadcast %54 : vector<1x128xf32> to vector<8x128xf32>
    %58 = arith.mulf %38, %57 : vector<8x128xf32>
    %59 = arith.addf %56, %58 : vector<8x128xf32>
    %cst_30 = arith.constant 0.000000e+00 : f32
    %60 = vector.broadcast %cst_30 : f32 to vector<8x128xf32>
    %61 = arith.subf %60, %38 : vector<8x128xf32>
    %62 = vector.broadcast %53 : vector<1x128xf32> to vector<8x128xf32>
    %63 = arith.mulf %61, %62 : vector<8x128xf32>
    %64 = vector.broadcast %54 : vector<1x128xf32> to vector<8x128xf32>
    %65 = arith.mulf %37, %64 : vector<8x128xf32>
    %66 = arith.addf %63, %65 : vector<8x128xf32>
    %cst_31 = arith.constant 5.000000e-01 : f32
    %67 = vector.broadcast %cst_31 : f32 to vector<8x128xf32>
    %68 = arith.mulf %59, %67 : vector<8x128xf32>
    %cst_32 = arith.constant 5.000000e-01 : f32
    %69 = vector.broadcast %cst_32 : f32 to vector<8x128xf32>
    %70 = arith.addf %68, %69 : vector<8x128xf32>
    %cst_33 = arith.constant 1.600000e+01 : f32
    %71 = vector.broadcast %cst_33 : f32 to vector<8x128xf32>
    %72 = arith.mulf %70, %71 : vector<8x128xf32>
    %73 = math.floor %72 : vector<8x128xf32>
    %cst_34 = arith.constant 0.000000e+00 : f32
    %cst_35 = arith.constant 1.500000e+01 : f32
    %74 = vector.broadcast %cst_34 : f32 to vector<8x128xf32>
    %75 = arith.maximumf %74, %73 : vector<8x128xf32>
    %76 = vector.broadcast %cst_35 : f32 to vector<8x128xf32>
    %77 = arith.minimumf %76, %75 : vector<8x128xf32>
    %78 = arith.fptosi %77 : vector<8x128xf32> to vector<8x128xi32>
    %cst_36 = arith.constant 5.000000e-01 : f32
    %79 = vector.broadcast %cst_36 : f32 to vector<8x128xf32>
    %80 = arith.mulf %66, %79 : vector<8x128xf32>
    %cst_37 = arith.constant 5.000000e-01 : f32
    %81 = vector.broadcast %cst_37 : f32 to vector<8x128xf32>
    %82 = arith.addf %80, %81 : vector<8x128xf32>
    %cst_38 = arith.constant 1.600000e+01 : f32
    %83 = vector.broadcast %cst_38 : f32 to vector<8x128xf32>
    %84 = arith.mulf %82, %83 : vector<8x128xf32>
    %85 = math.floor %84 : vector<8x128xf32>
    %cst_39 = arith.constant 0.000000e+00 : f32
    %cst_40 = arith.constant 1.500000e+01 : f32
    %86 = vector.broadcast %cst_39 : f32 to vector<8x128xf32>
    %87 = arith.maximumf %86, %85 : vector<8x128xf32>
    %88 = vector.broadcast %cst_40 : f32 to vector<8x128xf32>
    %89 = arith.minimumf %88, %87 : vector<8x128xf32>
    %90 = arith.fptosi %89 : vector<8x128xf32> to vector<8x128xi32>
    %c16_i32 = arith.constant 16 : i32
    %91 = vector.broadcast %c16_i32 : i32 to vector<8x128xi32>
    %92 = arith.muli %90, %91 : vector<8x128xi32>
    %93 = arith.addi %92, %78 : vector<8x128xi32>
    %94 = tpu.iota {dimensions = array<i32: 0>} : vector<8x8x128xi32>
    %95 = vector.shape_cast %51 : vector<8x128xi32> to vector<1x8x128xi32>
    %96 = vector.broadcast %95 : vector<1x8x128xi32> to vector<8x8x128xi32>
    %97 = arith.cmpi eq, %94, %96 : vector<8x8x128xi32>
    %c0_41 = arith.constant 0 : index
    %c0_42 = arith.constant 0 : index
    %c0_43 = arith.constant 0 : index
    %98 = vector.load %arg11[%c0_41, %c0_42, %c0_43] : memref<8x8x1xf32, #tpu.memory_space<vmem>>, vector<8x8x1xf32>
    %cst_44 = arith.constant 0.000000e+00 : f32
    %99 = vector.shape_cast %98 : vector<8x8x1xf32> to vector<8x8x1xf32>
    %100 = vector.broadcast %99 : vector<8x8x1xf32> to vector<8x8x128xf32>
    %101 = vector.broadcast %cst_44 : f32 to vector<8x8x128xf32>
    %102 = arith.select %97, %100, %101 : vector<8x8x128xi1>, vector<8x8x128xf32>
    %cst_45 = arith.constant dense<0.000000e+00> : vector<8x128xf32>
    %103 = vector.multi_reduction <add>, %102, %cst_45 [0] : vector<8x8x128xf32> to vector<8x128xf32>
    %cst_46 = arith.constant 0.000000e+00 : f32
    %104 = vector.broadcast %cst_46 : f32 to vector<8x128xf32>
    %105 = arith.maximumf %27, %104 : vector<8x128xf32>
    %106 = arith.mulf %105, %103 : vector<8x128xf32>
    %107 = math.absf %106 : vector<8x128xf32>
    %cst_47 = arith.constant dense<0.000000e+00> : vector<128xf32>
    %108 = vector.multi_reduction <add>, %107, %cst_47 [0] : vector<8x128xf32> to vector<128xf32>
    %109 = vector.shape_cast %108 : vector<128xf32> to vector<1x128xf32>
    %110 = tpu.iota {dimensions = array<i32: 0>} : vector<8x128xi32>
    %111 = tpu.iota {dimensions = array<i32: 0>} : vector<256x128xi32>
    %cst_48 = arith.constant 0.000000e+00 : f32
    %112 = vector.broadcast %cst_48 : f32 to vector<1x128xf32>
    %113 = vector.extract_strided_slice %51 {offsets = [0, 0], sizes = [1, 128], strides = [1, 1]} : vector<8x128xi32> to vector<1x128xi32>
    %114 = vector.broadcast %113 : vector<1x128xi32> to vector<8x128xi32>
    %115 = arith.cmpi eq, %110, %114 : vector<8x128xi32>
    %116 = arith.extui %115 : vector<8x128xi1> to vector<8x128xi32>
    %117 = arith.sitofp %116 : vector<8x128xi32> to vector<8x128xf32>
    %c0_49 = arith.constant 0 : index
    %c0_50 = arith.constant 0 : index
    %c0_51 = arith.constant 0 : index
    %118 = vector.load %arg12[%c0_49, %c0_50, %c0_51] : memref<8x256x8xf32, #tpu.memory_space<vmem>>, vector<1x256x8xf32>
    %119 = vector.shape_cast %118 : vector<1x256x8xf32> to vector<256x8xf32>
    %cst_52 = arith.constant dense<0.000000e+00> : vector<256x128xf32>
    %120 = tpu.matmul %119, %117, %cst_52 {dimension_numbers = #tpu.dot_dimension_numbers<[1], [0], [0], [1], [0, 0, 1, 1], [], []>} : vector<256x8xf32>, vector<8x128xf32>, vector<256x128xf32> -> vector<256x128xf32>
    %121 = vector.extract_strided_slice %93 {offsets = [0, 0], sizes = [1, 128], strides = [1, 1]} : vector<8x128xi32> to vector<1x128xi32>
    %122 = vector.broadcast %121 : vector<1x128xi32> to vector<256x128xi32>
    %123 = arith.cmpi eq, %111, %122 : vector<256x128xi32>
    %cst_53 = arith.constant 0.000000e+00 : f32
    %124 = vector.broadcast %cst_53 : f32 to vector<256x128xf32>
    %125 = arith.select %123, %120, %124 : vector<256x128xi1>, vector<256x128xf32>
    %cst_54 = arith.constant dense<0.000000e+00> : vector<128xf32>
    %126 = vector.multi_reduction <add>, %125, %cst_54 [0] : vector<256x128xf32> to vector<128xf32>
    %127 = vector.shape_cast %126 : vector<128xf32> to vector<1x128xf32>
    %128 = vector.extract_strided_slice %106 {offsets = [0, 0], sizes = [1, 128], strides = [1, 1]} : vector<8x128xf32> to vector<1x128xf32>
    %129 = arith.mulf %128, %127 : vector<1x128xf32>
    %130 = arith.addf %112, %129 : vector<1x128xf32>
    %131 = vector.extract_strided_slice %51 {offsets = [1, 0], sizes = [1, 128], strides = [1, 1]} : vector<8x128xi32> to vector<1x128xi32>
    %132 = vector.broadcast %131 : vector<1x128xi32> to vector<8x128xi32>
    %133 = arith.cmpi eq, %110, %132 : vector<8x128xi32>
    %134 = arith.extui %133 : vector<8x128xi1> to vector<8x128xi32>
    %135 = arith.sitofp %134 : vector<8x128xi32> to vector<8x128xf32>
    %c1 = arith.constant 1 : index
    %c0_55 = arith.constant 0 : index
    %c0_56 = arith.constant 0 : index
    %136 = vector.load %arg12[%c1, %c0_55, %c0_56] : memref<8x256x8xf32, #tpu.memory_space<vmem>>, vector<1x256x8xf32>
    %137 = vector.shape_cast %136 : vector<1x256x8xf32> to vector<256x8xf32>
    %cst_57 = arith.constant dense<0.000000e+00> : vector<256x128xf32>
    %138 = tpu.matmul %137, %135, %cst_57 {dimension_numbers = #tpu.dot_dimension_numbers<[1], [0], [0], [1], [0, 0, 1, 1], [], []>} : vector<256x8xf32>, vector<8x128xf32>, vector<256x128xf32> -> vector<256x128xf32>
    %139 = vector.extract_strided_slice %93 {offsets = [1, 0], sizes = [1, 128], strides = [1, 1]} : vector<8x128xi32> to vector<1x128xi32>
    %140 = vector.broadcast %139 : vector<1x128xi32> to vector<256x128xi32>
    %141 = arith.cmpi eq, %111, %140 : vector<256x128xi32>
    %cst_58 = arith.constant 0.000000e+00 : f32
    %142 = vector.broadcast %cst_58 : f32 to vector<256x128xf32>
    %143 = arith.select %141, %138, %142 : vector<256x128xi1>, vector<256x128xf32>
    %cst_59 = arith.constant dense<0.000000e+00> : vector<128xf32>
    %144 = vector.multi_reduction <add>, %143, %cst_59 [0] : vector<256x128xf32> to vector<128xf32>
    %145 = vector.shape_cast %144 : vector<128xf32> to vector<1x128xf32>
    %146 = vector.extract_strided_slice %106 {offsets = [1, 0], sizes = [1, 128], strides = [1, 1]} : vector<8x128xf32> to vector<1x128xf32>
    %147 = arith.mulf %146, %145 : vector<1x128xf32>
    %148 = arith.addf %130, %147 : vector<1x128xf32>
    %149 = vector.extract_strided_slice %51 {offsets = [2, 0], sizes = [1, 128], strides = [1, 1]} : vector<8x128xi32> to vector<1x128xi32>
    %150 = vector.broadcast %149 : vector<1x128xi32> to vector<8x128xi32>
    %151 = arith.cmpi eq, %110, %150 : vector<8x128xi32>
    %152 = arith.extui %151 : vector<8x128xi1> to vector<8x128xi32>
    %153 = arith.sitofp %152 : vector<8x128xi32> to vector<8x128xf32>
    %c2 = arith.constant 2 : index
    %c0_60 = arith.constant 0 : index
    %c0_61 = arith.constant 0 : index
    %154 = vector.load %arg12[%c2, %c0_60, %c0_61] : memref<8x256x8xf32, #tpu.memory_space<vmem>>, vector<1x256x8xf32>
    %155 = vector.shape_cast %154 : vector<1x256x8xf32> to vector<256x8xf32>
    %cst_62 = arith.constant dense<0.000000e+00> : vector<256x128xf32>
    %156 = tpu.matmul %155, %153, %cst_62 {dimension_numbers = #tpu.dot_dimension_numbers<[1], [0], [0], [1], [0, 0, 1, 1], [], []>} : vector<256x8xf32>, vector<8x128xf32>, vector<256x128xf32> -> vector<256x128xf32>
    %157 = vector.extract_strided_slice %93 {offsets = [2, 0], sizes = [1, 128], strides = [1, 1]} : vector<8x128xi32> to vector<1x128xi32>
    %158 = vector.broadcast %157 : vector<1x128xi32> to vector<256x128xi32>
    %159 = arith.cmpi eq, %111, %158 : vector<256x128xi32>
    %cst_63 = arith.constant 0.000000e+00 : f32
    %160 = vector.broadcast %cst_63 : f32 to vector<256x128xf32>
    %161 = arith.select %159, %156, %160 : vector<256x128xi1>, vector<256x128xf32>
    %cst_64 = arith.constant dense<0.000000e+00> : vector<128xf32>
    %162 = vector.multi_reduction <add>, %161, %cst_64 [0] : vector<256x128xf32> to vector<128xf32>
    %163 = vector.shape_cast %162 : vector<128xf32> to vector<1x128xf32>
    %164 = vector.extract_strided_slice %106 {offsets = [2, 0], sizes = [1, 128], strides = [1, 1]} : vector<8x128xf32> to vector<1x128xf32>
    %165 = arith.mulf %164, %163 : vector<1x128xf32>
    %166 = arith.addf %148, %165 : vector<1x128xf32>
    %167 = vector.extract_strided_slice %51 {offsets = [3, 0], sizes = [1, 128], strides = [1, 1]} : vector<8x128xi32> to vector<1x128xi32>
    %168 = vector.broadcast %167 : vector<1x128xi32> to vector<8x128xi32>
    %169 = arith.cmpi eq, %110, %168 : vector<8x128xi32>
    %170 = arith.extui %169 : vector<8x128xi1> to vector<8x128xi32>
    %171 = arith.sitofp %170 : vector<8x128xi32> to vector<8x128xf32>
    %c3 = arith.constant 3 : index
    %c0_65 = arith.constant 0 : index
    %c0_66 = arith.constant 0 : index
    %172 = vector.load %arg12[%c3, %c0_65, %c0_66] : memref<8x256x8xf32, #tpu.memory_space<vmem>>, vector<1x256x8xf32>
    %173 = vector.shape_cast %172 : vector<1x256x8xf32> to vector<256x8xf32>
    %cst_67 = arith.constant dense<0.000000e+00> : vector<256x128xf32>
    %174 = tpu.matmul %173, %171, %cst_67 {dimension_numbers = #tpu.dot_dimension_numbers<[1], [0], [0], [1], [0, 0, 1, 1], [], []>} : vector<256x8xf32>, vector<8x128xf32>, vector<256x128xf32> -> vector<256x128xf32>
    %175 = vector.extract_strided_slice %93 {offsets = [3, 0], sizes = [1, 128], strides = [1, 1]} : vector<8x128xi32> to vector<1x128xi32>
    %176 = vector.broadcast %175 : vector<1x128xi32> to vector<256x128xi32>
    %177 = arith.cmpi eq, %111, %176 : vector<256x128xi32>
    %cst_68 = arith.constant 0.000000e+00 : f32
    %178 = vector.broadcast %cst_68 : f32 to vector<256x128xf32>
    %179 = arith.select %177, %174, %178 : vector<256x128xi1>, vector<256x128xf32>
    %cst_69 = arith.constant dense<0.000000e+00> : vector<128xf32>
    %180 = vector.multi_reduction <add>, %179, %cst_69 [0] : vector<256x128xf32> to vector<128xf32>
    %181 = vector.shape_cast %180 : vector<128xf32> to vector<1x128xf32>
    %182 = vector.extract_strided_slice %106 {offsets = [3, 0], sizes = [1, 128], strides = [1, 1]} : vector<8x128xf32> to vector<1x128xf32>
    %183 = arith.mulf %182, %181 : vector<1x128xf32>
    %184 = arith.addf %166, %183 : vector<1x128xf32>
    %185 = vector.extract_strided_slice %51 {offsets = [4, 0], sizes = [1, 128], strides = [1, 1]} : vector<8x128xi32> to vector<1x128xi32>
    %186 = vector.broadcast %185 : vector<1x128xi32> to vector<8x128xi32>
    %187 = arith.cmpi eq, %110, %186 : vector<8x128xi32>
    %188 = arith.extui %187 : vector<8x128xi1> to vector<8x128xi32>
    %189 = arith.sitofp %188 : vector<8x128xi32> to vector<8x128xf32>
    %c4 = arith.constant 4 : index
    %c0_70 = arith.constant 0 : index
    %c0_71 = arith.constant 0 : index
    %190 = vector.load %arg12[%c4, %c0_70, %c0_71] : memref<8x256x8xf32, #tpu.memory_space<vmem>>, vector<1x256x8xf32>
    %191 = vector.shape_cast %190 : vector<1x256x8xf32> to vector<256x8xf32>
    %cst_72 = arith.constant dense<0.000000e+00> : vector<256x128xf32>
    %192 = tpu.matmul %191, %189, %cst_72 {dimension_numbers = #tpu.dot_dimension_numbers<[1], [0], [0], [1], [0, 0, 1, 1], [], []>} : vector<256x8xf32>, vector<8x128xf32>, vector<256x128xf32> -> vector<256x128xf32>
    %193 = vector.extract_strided_slice %93 {offsets = [4, 0], sizes = [1, 128], strides = [1, 1]} : vector<8x128xi32> to vector<1x128xi32>
    %194 = vector.broadcast %193 : vector<1x128xi32> to vector<256x128xi32>
    %195 = arith.cmpi eq, %111, %194 : vector<256x128xi32>
    %cst_73 = arith.constant 0.000000e+00 : f32
    %196 = vector.broadcast %cst_73 : f32 to vector<256x128xf32>
    %197 = arith.select %195, %192, %196 : vector<256x128xi1>, vector<256x128xf32>
    %cst_74 = arith.constant dense<0.000000e+00> : vector<128xf32>
    %198 = vector.multi_reduction <add>, %197, %cst_74 [0] : vector<256x128xf32> to vector<128xf32>
    %199 = vector.shape_cast %198 : vector<128xf32> to vector<1x128xf32>
    %200 = vector.extract_strided_slice %106 {offsets = [4, 0], sizes = [1, 128], strides = [1, 1]} : vector<8x128xf32> to vector<1x128xf32>
    %201 = arith.mulf %200, %199 : vector<1x128xf32>
    %202 = arith.addf %184, %201 : vector<1x128xf32>
    %203 = vector.extract_strided_slice %51 {offsets = [5, 0], sizes = [1, 128], strides = [1, 1]} : vector<8x128xi32> to vector<1x128xi32>
    %204 = vector.broadcast %203 : vector<1x128xi32> to vector<8x128xi32>
    %205 = arith.cmpi eq, %110, %204 : vector<8x128xi32>
    %206 = arith.extui %205 : vector<8x128xi1> to vector<8x128xi32>
    %207 = arith.sitofp %206 : vector<8x128xi32> to vector<8x128xf32>
    %c5 = arith.constant 5 : index
    %c0_75 = arith.constant 0 : index
    %c0_76 = arith.constant 0 : index
    %208 = vector.load %arg12[%c5, %c0_75, %c0_76] : memref<8x256x8xf32, #tpu.memory_space<vmem>>, vector<1x256x8xf32>
    %209 = vector.shape_cast %208 : vector<1x256x8xf32> to vector<256x8xf32>
    %cst_77 = arith.constant dense<0.000000e+00> : vector<256x128xf32>
    %210 = tpu.matmul %209, %207, %cst_77 {dimension_numbers = #tpu.dot_dimension_numbers<[1], [0], [0], [1], [0, 0, 1, 1], [], []>} : vector<256x8xf32>, vector<8x128xf32>, vector<256x128xf32> -> vector<256x128xf32>
    %211 = vector.extract_strided_slice %93 {offsets = [5, 0], sizes = [1, 128], strides = [1, 1]} : vector<8x128xi32> to vector<1x128xi32>
    %212 = vector.broadcast %211 : vector<1x128xi32> to vector<256x128xi32>
    %213 = arith.cmpi eq, %111, %212 : vector<256x128xi32>
    %cst_78 = arith.constant 0.000000e+00 : f32
    %214 = vector.broadcast %cst_78 : f32 to vector<256x128xf32>
    %215 = arith.select %213, %210, %214 : vector<256x128xi1>, vector<256x128xf32>
    %cst_79 = arith.constant dense<0.000000e+00> : vector<128xf32>
    %216 = vector.multi_reduction <add>, %215, %cst_79 [0] : vector<256x128xf32> to vector<128xf32>
    %217 = vector.shape_cast %216 : vector<128xf32> to vector<1x128xf32>
    %218 = vector.extract_strided_slice %106 {offsets = [5, 0], sizes = [1, 128], strides = [1, 1]} : vector<8x128xf32> to vector<1x128xf32>
    %219 = arith.mulf %218, %217 : vector<1x128xf32>
    %220 = arith.addf %202, %219 : vector<1x128xf32>
    %221 = vector.extract_strided_slice %51 {offsets = [6, 0], sizes = [1, 128], strides = [1, 1]} : vector<8x128xi32> to vector<1x128xi32>
    %222 = vector.broadcast %221 : vector<1x128xi32> to vector<8x128xi32>
    %223 = arith.cmpi eq, %110, %222 : vector<8x128xi32>
    %224 = arith.extui %223 : vector<8x128xi1> to vector<8x128xi32>
    %225 = arith.sitofp %224 : vector<8x128xi32> to vector<8x128xf32>
    %c6 = arith.constant 6 : index
    %c0_80 = arith.constant 0 : index
    %c0_81 = arith.constant 0 : index
    %226 = vector.load %arg12[%c6, %c0_80, %c0_81] : memref<8x256x8xf32, #tpu.memory_space<vmem>>, vector<1x256x8xf32>
    %227 = vector.shape_cast %226 : vector<1x256x8xf32> to vector<256x8xf32>
    %cst_82 = arith.constant dense<0.000000e+00> : vector<256x128xf32>
    %228 = tpu.matmul %227, %225, %cst_82 {dimension_numbers = #tpu.dot_dimension_numbers<[1], [0], [0], [1], [0, 0, 1, 1], [], []>} : vector<256x8xf32>, vector<8x128xf32>, vector<256x128xf32> -> vector<256x128xf32>
    %229 = vector.extract_strided_slice %93 {offsets = [6, 0], sizes = [1, 128], strides = [1, 1]} : vector<8x128xi32> to vector<1x128xi32>
    %230 = vector.broadcast %229 : vector<1x128xi32> to vector<256x128xi32>
    %231 = arith.cmpi eq, %111, %230 : vector<256x128xi32>
    %cst_83 = arith.constant 0.000000e+00 : f32
    %232 = vector.broadcast %cst_83 : f32 to vector<256x128xf32>
    %233 = arith.select %231, %228, %232 : vector<256x128xi1>, vector<256x128xf32>
    %cst_84 = arith.constant dense<0.000000e+00> : vector<128xf32>
    %234 = vector.multi_reduction <add>, %233, %cst_84 [0] : vector<256x128xf32> to vector<128xf32>
    %235 = vector.shape_cast %234 : vector<128xf32> to vector<1x128xf32>
    %236 = vector.extract_strided_slice %106 {offsets = [6, 0], sizes = [1, 128], strides = [1, 1]} : vector<8x128xf32> to vector<1x128xf32>
    %237 = arith.mulf %236, %235 : vector<1x128xf32>
    %238 = arith.addf %220, %237 : vector<1x128xf32>
    %239 = vector.extract_strided_slice %51 {offsets = [7, 0], sizes = [1, 128], strides = [1, 1]} : vector<8x128xi32> to vector<1x128xi32>
    %240 = vector.broadcast %239 : vector<1x128xi32> to vector<8x128xi32>
    %241 = arith.cmpi eq, %110, %240 : vector<8x128xi32>
    %242 = arith.extui %241 : vector<8x128xi1> to vector<8x128xi32>
    %243 = arith.sitofp %242 : vector<8x128xi32> to vector<8x128xf32>
    %c7 = arith.constant 7 : index
    %c0_85 = arith.constant 0 : index
    %c0_86 = arith.constant 0 : index
    %244 = vector.load %arg12[%c7, %c0_85, %c0_86] : memref<8x256x8xf32, #tpu.memory_space<vmem>>, vector<1x256x8xf32>
    %245 = vector.shape_cast %244 : vector<1x256x8xf32> to vector<256x8xf32>
    %cst_87 = arith.constant dense<0.000000e+00> : vector<256x128xf32>
    %246 = tpu.matmul %245, %243, %cst_87 {dimension_numbers = #tpu.dot_dimension_numbers<[1], [0], [0], [1], [0, 0, 1, 1], [], []>} : vector<256x8xf32>, vector<8x128xf32>, vector<256x128xf32> -> vector<256x128xf32>
    %247 = vector.extract_strided_slice %93 {offsets = [7, 0], sizes = [1, 128], strides = [1, 1]} : vector<8x128xi32> to vector<1x128xi32>
    %248 = vector.broadcast %247 : vector<1x128xi32> to vector<256x128xi32>
    %249 = arith.cmpi eq, %111, %248 : vector<256x128xi32>
    %cst_88 = arith.constant 0.000000e+00 : f32
    %250 = vector.broadcast %cst_88 : f32 to vector<256x128xf32>
    %251 = arith.select %249, %246, %250 : vector<256x128xi1>, vector<256x128xf32>
    %cst_89 = arith.constant dense<0.000000e+00> : vector<128xf32>
    %252 = vector.multi_reduction <add>, %251, %cst_89 [0] : vector<256x128xf32> to vector<128xf32>
    %253 = vector.shape_cast %252 : vector<128xf32> to vector<1x128xf32>
    %254 = vector.extract_strided_slice %106 {offsets = [7, 0], sizes = [1, 128], strides = [1, 1]} : vector<8x128xf32> to vector<1x128xf32>
    %255 = arith.mulf %254, %253 : vector<1x128xf32>
    %256 = arith.addf %238, %255 : vector<1x128xf32>
    %cst_90 = arith.constant 9.99999996E-13 : f32
    %257 = vector.broadcast %cst_90 : f32 to vector<1x128xf32>
    %258 = arith.maximumf %109, %257 : vector<1x128xf32>
    %259 = tpu.reciprocal %258 {approx = true} : vector<1x128xf32> -> vector<1x128xf32>
    %260 = arith.mulf %258, %259 : vector<1x128xf32>
    %cst_91 = arith.constant 2.000000e+00 : f32
    %261 = vector.broadcast %cst_91 : f32 to vector<1x128xf32>
    %262 = arith.subf %261, %260 : vector<1x128xf32>
    %263 = arith.mulf %259, %262 : vector<1x128xf32>
    %264 = arith.mulf %256, %263 : vector<1x128xf32>
    %c0_92 = arith.constant 0 : index
    %c0_93 = arith.constant 0 : index
    %265 = vector.load %arg13[%c0_92, %c0_93] : memref<1x128xf32, #tpu.memory_space<vmem>>, vector<1x128xf32>
    tpu.vector_store %arg13[%c0_92, %c0_93], %264 {strides = array<i32>} : memref<1x128xf32, #tpu.memory_space<vmem>>, vector<1x128xf32>,
    return
  }
  func.func @transform_0(%arg0: i32) -> (i32, i32) {
    %c0_i32 = arith.constant 0 : i32
    %c0_i32_0 = arith.constant 0 : i32
    return %c0_i32, %arg0 : i32, i32
  }
  func.func @transform_1(%arg0: i32) -> (i32, i32) {
    %c0_i32 = arith.constant 0 : i32
    %c0_i32_0 = arith.constant 0 : i32
    return %c0_i32, %arg0 : i32, i32
  }
  func.func @transform_2(%arg0: i32) -> (i32, i32) {
    %c0_i32 = arith.constant 0 : i32
    %c0_i32_0 = arith.constant 0 : i32
    %c0_i32_1 = arith.constant 0 : i32
    return %c0_i32, %c0_i32_0 : i32, i32
  }
  func.func @transform_3(%arg0: i32) -> (i32, i32) {
    %c0_i32 = arith.constant 0 : i32
    %c0_i32_0 = arith.constant 0 : i32
    %c0_i32_1 = arith.constant 0 : i32
    return %c0_i32, %c0_i32_0 : i32, i32
  }
  func.func @transform_4(%arg0: i32) -> (i32, i32) {
    %c0_i32 = arith.constant 0 : i32
    %c0_i32_0 = arith.constant 0 : i32
    %c0_i32_1 = arith.constant 0 : i32
    return %c0_i32, %c0_i32_0 : i32, i32
  }
  func.func @transform_5(%arg0: i32) -> (i32, i32) {
    %c0_i32 = arith.constant 0 : i32
    %c0_i32_0 = arith.constant 0 : i32
    %c0_i32_1 = arith.constant 0 : i32
    return %c0_i32, %c0_i32_0 : i32, i32
  }
  func.func @transform_6(%arg0: i32) -> (i32, i32) {
    %c0_i32 = arith.constant 0 : i32
    %c0_i32_0 = arith.constant 0 : i32
    %c0_i32_1 = arith.constant 0 : i32
    return %c0_i32, %c0_i32_0 : i32, i32
  }
  func.func @transform_7(%arg0: i32) -> (i32, i32) {
    %c0_i32 = arith.constant 0 : i32
    %c0_i32_0 = arith.constant 0 : i32
    %c0_i32_1 = arith.constant 0 : i32
    return %c0_i32, %c0_i32_0 : i32, i32
  }
  func.func @transform_8(%arg0: i32) -> (i32, i32) {
    %c0_i32 = arith.constant 0 : i32
    %c0_i32_0 = arith.constant 0 : i32
    %c0_i32_1 = arith.constant 0 : i32
    return %c0_i32, %c0_i32_0 : i32, i32
  }
  func.func @transform_9(%arg0: i32) -> (i32, i32) {
    %c0_i32 = arith.constant 0 : i32
    %c0_i32_0 = arith.constant 0 : i32
    %c0_i32_1 = arith.constant 0 : i32
    return %c0_i32, %c0_i32_0 : i32, i32
  }
  func.func @transform_10(%arg0: i32) -> (i32, i32, i32) {
    %c0_i32 = arith.constant 0 : i32
    %c0_i32_0 = arith.constant 0 : i32
    %c0_i32_1 = arith.constant 0 : i32
    %c0_i32_2 = arith.constant 0 : i32
    return %c0_i32, %c0_i32_0, %c0_i32_1 : i32, i32, i32
  }
  func.func @transform_11(%arg0: i32) -> (i32, i32, i32) {
    %c0_i32 = arith.constant 0 : i32
    %c0_i32_0 = arith.constant 0 : i32
    %c0_i32_1 = arith.constant 0 : i32
    %c0_i32_2 = arith.constant 0 : i32
    return %c0_i32, %c0_i32_0, %c0_i32_1 : i32, i32, i32
  }
  func.func @transform_12(%arg0: i32) -> (i32, i32) {
    %c0_i32 = arith.constant 0 : i32
    %c0_i32_0 = arith.constant 0 : i32
    return %c0_i32, %arg0 : i32, i32
  }
}

</mosaic_0001>

<llo_original>
// kernel: tpu_custom_call.1
$region0: #{tpu_custom_call.1}
  #allocation0 [shape = 'u32[]', space=smem, size = 0x4, offset = 0x4, fixed_abs, tag = 'smem constant byte address 0x4 - core index']
  #allocation1 [shape = 'u32[144,128]{1,0:T(1,128)}', space=vmem, size = 0x12000, scoped, tag = 'internal scratch']
  %s0 = inlined_call_operand.vmem [shape: f32[10,512], index: 0, kind: input, shape index: {}]
  %s1 = inlined_call_operand.vmem [shape: f32[2,512], index: 1, kind: input, shape index: {}]
  %s2 = inlined_call_operand.vmem [shape: f32[32,10], index: 2, kind: input, shape index: {}]
  %s3 = inlined_call_operand.vmem [shape: f32[32,1], index: 3, kind: input, shape index: {}]
  %s4 = inlined_call_operand.vmem [shape: f32[32,32], index: 4, kind: input, shape index: {}]
  %s5 = inlined_call_operand.vmem [shape: f32[32,1], index: 5, kind: input, shape index: {}]
  %s6 = inlined_call_operand.vmem [shape: f32[32,32], index: 6, kind: input, shape index: {}]
  %s7 = inlined_call_operand.vmem [shape: f32[32,1], index: 7, kind: input, shape index: {}]
  %s8 = inlined_call_operand.vmem [shape: f32[32,32], index: 8, kind: input, shape index: {}]
  %s9 = inlined_call_operand.vmem [shape: f32[32,1], index: 9, kind: input, shape index: {}]
  %s10 = inlined_call_operand.vmem [shape: f32[8,8,1], index: 10, kind: input, shape index: {}]
  %s11 = inlined_call_operand.vmem [shape: f32[8,256,8], index: 11, kind: input, shape index: {}]
  %s12 = inlined_call_operand.hbm [shape: f32[1,512], index: 12, kind: output, shape index: {}]
  %s13 = sld [smem:[#allocation0]]
  $region119: #{tpu_custom_call.1} parent=0
    _
  %s15 = ssub.s32 1, %s13
  %s16 = scalar_select 0, %s15, %s13
  $region1: #{tpu_custom_call.1} parent=0
    #allocation2 [shape = 'u8[16384]{0}', space=vmem, size = 0x4000, scoped, tag = 'input window, operand 0']
    #allocation3 [shape = 'u8[1024]{0}', space=vmem, size = 0x400, scoped, tag = 'output window, operand 0']
    #allocation4 [shape = 's32[2]{0}', space=sflag, size = 0x8, scoped, tag = 'scoped memory for tpu_custom_call.1']
    %17 = vsyncpa [#allocation4], 0
    %s18 = scalar_lea.sflag [#allocation4], 1
    %19 = vsyncpa %s18, 0
    loop: start=0, step=1, limit=6
    $region2: #{tpu_custom_call.1} parent=1 // loop_pre_header
      _
    $region3: #{tpu_custom_call.1} parent=1 // loop_header
      %s21 = sphi 0, %s25
      %p22 = scmp.ge.s32.totalorder %s21, 6
      %s31 = sphi 0, %s33
      %s34 = sphi 0, %s31
      %s35 = sphi 0, %s34
      %s51 = sphi 0, %s35
      %s57 = sphi 0, %s59
      %s60 = sphi 0, %s57
      %s61 = sphi 0, %s60
      %s77 = sphi 0, %s61
      %s81 = sphi 0, %s81
      %s83 = sphi 0, %s81
      %s84 = sphi 0, %s83
      %s98 = sphi 0, %s84
      %s102 = sphi 0, %s102
      %s104 = sphi 0, %s102
      %s105 = sphi 0, %s104
      %s119 = sphi 0, %s105
      %s123 = sphi 0, %s123
      %s125 = sphi 0, %s123
      %s126 = sphi 0, %s125
      %s140 = sphi 0, %s126
      %s144 = sphi 0, %s144
      %s146 = sphi 0, %s144
      %s147 = sphi 0, %s146
      %s161 = sphi 0, %s147
      %s165 = sphi 0, %s165
      %s167 = sphi 0, %s165
      %s168 = sphi 0, %s167
      %s182 = sphi 0, %s168
      %s186 = sphi 0, %s186
      %s188 = sphi 0, %s186
      %s189 = sphi 0, %s188
      %s203 = sphi 0, %s189
      %s207 = sphi 0, %s207
      %s209 = sphi 0, %s207
      %s210 = sphi 0, %s209
      %s224 = sphi 0, %s210
      %s228 = sphi 0, %s228
      %s230 = sphi 0, %s228
      %s231 = sphi 0, %s230
      %s245 = sphi 0, %s231
      %s249 = sphi 0, %s249
      %s251 = sphi 0, %s249
      %s252 = sphi 0, %s251
      %s266 = sphi 0, %s252
      %s270 = sphi 0, %s270
      %s272 = sphi 0, %s270
      %s273 = sphi 0, %s272
      %s287 = sphi 0, %s273
      %s293 = sphi 0, %s295
      %s296 = sphi 0, %s293
      %s297 = sphi 0, %s296
      %s313 = sphi 0, %s297
    $region4: #{tpu_custom_call.1} parent=1 // loop_header_branch
      %24 = sbr.rel (%p22) target = $region8
    $region5: #{tpu_custom_call.1} parent=1 // loop_body
      %s26 = ssub.s32 %s21, 1
      %s27 = ssub.s32 %s21, 2
      %s28 = sadd.s32 %s21, 1
      %s29 = ssub.s32 %s21, %s28
      %p30 = scmp.eq.s32.totalorder %s29, 0
      %s32 = sadd.s32 %s31, 1
      %s33 = scalar_select %p30, %s31, %s32
      %p36 = pneg %p30
      %p37 = scmp.eq.s32.totalorder %s21, 3
      %p38 = por %p36, %p37
      %p39 = scmp.ne.s32.totalorder %s31, %s34
      %p40 = scmp.eq.s32.totalorder %s21, 0
      %p41 = por %p39, %p40
      %p42 = scmp.ne.s32.totalorder %s31, %s34
      %p43 = scmp.eq.s32.totalorder %s26, 3
      %p44 = por %p42, %p43
      %p45 = scmp.ne.s32.totalorder %s34, %s35
      %p46 = scmp.eq.s32.totalorder %s26, 0
      %p47 = por %p45, %p46
      %p48 = scmp.ne.s32.totalorder %s34, %s35
      %p49 = scmp.eq.s32.totalorder %s27, 3
      %p50 = por %p48, %p49
      %p52 = scmp.ne.s32.totalorder %s35, %s51
      %p53 = scmp.eq.s32.totalorder %s27, 0
      %p54 = por %p52, %p53
      %s55 = ssub.s32 %s21, %s28
      %p56 = scmp.eq.s32.totalorder %s55, 0
      %s58 = sadd.s32 %s57, 1
      %s59 = scalar_select %p56, %s57, %s58
      %p62 = pneg %p56
      %p63 = scmp.eq.s32.totalorder %s21, 3
      %p64 = por %p62, %p63
      %p65 = scmp.ne.s32.totalorder %s57, %s60
      %p66 = scmp.eq.s32.totalorder %s21, 0
      %p67 = por %p65, %p66
      %p68 = scmp.ne.s32.totalorder %s57, %s60
      %p69 = scmp.eq.s32.totalorder %s26, 3
      %p70 = por %p68, %p69
      %p71 = scmp.ne.s32.totalorder %s60, %s61
      %p72 = scmp.eq.s32.totalorder %s26, 0
      %p73 = por %p71, %p72
      %p74 = scmp.ne.s32.totalorder %s60, %s61
      %p75 = scmp.eq.s32.totalorder %s27, 3
      %p76 = por %p74, %p75
      %p78 = scmp.ne.s32.totalorder %s61, %s77
      %p79 = scmp.eq.s32.totalorder %s27, 0
      %p80 = por %p78, %p79
      %s82 = sadd.s32 %s81, 1
      %p85 = scmp.eq.s32.totalorder %s21, 3
      %p86 = scmp.ne.s32.totalorder %s81, %s83
      %p87 = scmp.eq.s32.totalorder %s21, 0
      %p88 = por %p86, %p87
      %p89 = scmp.ne.s32.totalorder %s81, %s83
      %p90 = scmp.eq.s32.totalorder %s26, 3
      %p91 = por %p89, %p90
      %p92 = scmp.ne.s32.totalorder %s83, %s84
      %p93 = scmp.eq.s32.totalorder %s26, 0
      %p94 = por %p92, %p93
      %p95 = scmp.ne.s32.totalorder %s83, %s84
      %p96 = scmp.eq.s32.totalorder %s27, 3
      %p97 = por %p95, %p96
      %p99 = scmp.ne.s32.totalorder %s84, %s98
      %p100 = scmp.eq.s32.totalorder %s27, 0
      %p101 = por %p99, %p100
      %s103 = sadd.s32 %s102, 1
      %p106 = scmp.eq.s32.totalorder %s21, 3
      %p107 = scmp.ne.s32.totalorder %s102, %s104
      %p108 = scmp.eq.s32.totalorder %s21, 0
      %p109 = por %p107, %p108
      %p110 = scmp.ne.s32.totalorder %s102, %s104
      %p111 = scmp.eq.s32.totalorder %s26, 3
      %p112 = por %p110, %p111
      %p113 = scmp.ne.s32.totalorder %s104, %s105
      %p114 = scmp.eq.s32.totalorder %s26, 0
      %p115 = por %p113, %p114
      %p116 = scmp.ne.s32.totalorder %s104, %s105
      %p117 = scmp.eq.s32.totalorder %s27, 3
      %p118 = por %p116, %p117
      %p120 = scmp.ne.s32.totalorder %s105, %s119
      %p121 = scmp.eq.s32.totalorder %s27, 0
      %p122 = por %p120, %p121
      %s124 = sadd.s32 %s123, 1
      %p127 = scmp.eq.s32.totalorder %s21, 3
      %p128 = scmp.ne.s32.totalorder %s123, %s125
      %p129 = scmp.eq.s32.totalorder %s21, 0
      %p130 = por %p128, %p129
      %p131 = scmp.ne.s32.totalorder %s123, %s125
      %p132 = scmp.eq.s32.totalorder %s26, 3
      %p133 = por %p131, %p132
      %p134 = scmp.ne.s32.totalorder %s125, %s126
      %p135 = scmp.eq.s32.totalorder %s26, 0
      %p136 = por %p134, %p135
      %p137 = scmp.ne.s32.totalorder %s125, %s126
      %p138 = scmp.eq.s32.totalorder %s27, 3
      %p139 = por %p137, %p138
      %p141 = scmp.ne.s32.totalorder %s126, %s140
      %p142 = scmp.eq.s32.totalorder %s27, 0
      %p143 = por %p141, %p142
      %s145 = sadd.s32 %s144, 1
      %p148 = scmp.eq.s32.totalorder %s21, 3
      %p149 = scmp.ne.s32.totalorder %s144, %s146
      %p150 = scmp.eq.s32.totalorder %s21, 0
      %p151 = por %p149, %p150
      %p152 = scmp.ne.s32.totalorder %s144, %s146
      %p153 = scmp.eq.s32.totalorder %s26, 3
      %p154 = por %p152, %p153
      %p155 = scmp.ne.s32.totalorder %s146, %s147
      %p156 = scmp.eq.s32.totalorder %s26, 0
      %p157 = por %p155, %p156
      %p158 = scmp.ne.s32.totalorder %s146, %s147
      %p159 = scmp.eq.s32.totalorder %s27, 3
      %p160 = por %p158, %p159
      %p162 = scmp.ne.s32.totalorder %s147, %s161
      %p163 = scmp.eq.s32.totalorder %s27, 0
      %p164 = por %p162, %p163
      %s166 = sadd.s32 %s165, 1
      %p169 = scmp.eq.s32.totalorder %s21, 3
      %p170 = scmp.ne.s32.totalorder %s165, %s167
      %p171 = scmp.eq.s32.totalorder %s21, 0
      %p172 = por %p170, %p171
      %p173 = scmp.ne.s32.totalorder %s165, %s167
      %p174 = scmp.eq.s32.totalorder %s26, 3
      %p175 = por %p173, %p174
      %p176 = scmp.ne.s32.totalorder %s167, %s168
      %p177 = scmp.eq.s32.totalorder %s26, 0
      %p178 = por %p176, %p177
      %p179 = scmp.ne.s32.totalorder %s167, %s168
      %p180 = scmp.eq.s32.totalorder %s27, 3
      %p181 = por %p179, %p180
      %p183 = scmp.ne.s32.totalorder %s168, %s182
      %p184 = scmp.eq.s32.totalorder %s27, 0
      %p185 = por %p183, %p184
      %s187 = sadd.s32 %s186, 1
      %p190 = scmp.eq.s32.totalorder %s21, 3
      %p191 = scmp.ne.s32.totalorder %s186, %s188
      %p192 = scmp.eq.s32.totalorder %s21, 0
      %p193 = por %p191, %p192
      %p194 = scmp.ne.s32.totalorder %s186, %s188
      %p195 = scmp.eq.s32.totalorder %s26, 3
      %p196 = por %p194, %p195
      %p197 = scmp.ne.s32.totalorder %s188, %s189
      %p198 = scmp.eq.s32.totalorder %s26, 0
      %p199 = por %p197, %p198
      %p200 = scmp.ne.s32.totalorder %s188, %s189
      %p201 = scmp.eq.s32.totalorder %s27, 3
      %p202 = por %p200, %p201
      %p204 = scmp.ne.s32.totalorder %s189, %s203
      %p205 = scmp.eq.s32.totalorder %s27, 0
      %p206 = por %p204, %p205
      %s208 = sadd.s32 %s207, 1
      %p211 = scmp.eq.s32.totalorder %s21, 3
      %p212 = scmp.ne.s32.totalorder %s207, %s209
      %p213 = scmp.eq.s32.totalorder %s21, 0
      %p214 = por %p212, %p213
      %p215 = scmp.ne.s32.totalorder %s207, %s209
      %p216 = scmp.eq.s32.totalorder %s26, 3
      %p217 = por %p215, %p216
      %p218 = scmp.ne.s32.totalorder %s209, %s210
      %p219 = scmp.eq.s32.totalorder %s26, 0
      %p220 = por %p218, %p219
      %p221 = scmp.ne.s32.totalorder %s209, %s210
      %p222 = scmp.eq.s32.totalorder %s27, 3
      %p223 = por %p221, %p222
      %p225 = scmp.ne.s32.totalorder %s210, %s224
      %p226 = scmp.eq.s32.totalorder %s27, 0
      %p227 = por %p225, %p226
      %s229 = sadd.s32 %s228, 1
      %p232 = scmp.eq.s32.totalorder %s21, 3
      %p233 = scmp.ne.s32.totalorder %s228, %s230
      %p234 = scmp.eq.s32.totalorder %s21, 0
      %p235 = por %p233, %p234
      %p236 = scmp.ne.s32.totalorder %s228, %s230
      %p237 = scmp.eq.s32.totalorder %s26, 3
      %p238 = por %p236, %p237
      %p239 = scmp.ne.s32.totalorder %s230, %s231
      %p240 = scmp.eq.s32.totalorder %s26, 0
      %p241 = por %p239, %p240
      %p242 = scmp.ne.s32.totalorder %s230, %s231
      %p243 = scmp.eq.s32.totalorder %s27, 3
      %p244 = por %p242, %p243
      %p246 = scmp.ne.s32.totalorder %s231, %s245
      %p247 = scmp.eq.s32.totalorder %s27, 0
      %p248 = por %p246, %p247
      %s250 = sadd.s32 %s249, 1
      %p253 = scmp.eq.s32.totalorder %s21, 3
      %p254 = scmp.ne.s32.totalorder %s249, %s251
      %p255 = scmp.eq.s32.totalorder %s21, 0
      %p256 = por %p254, %p255
      %p257 = scmp.ne.s32.totalorder %s249, %s251
      %p258 = scmp.eq.s32.totalorder %s26, 3
      %p259 = por %p257, %p258
      %p260 = scmp.ne.s32.totalorder %s251, %s252
      %p261 = scmp.eq.s32.totalorder %s26, 0
      %p262 = por %p260, %p261
      %p263 = scmp.ne.s32.totalorder %s251, %s252
      %p264 = scmp.eq.s32.totalorder %s27, 3
      %p265 = por %p263, %p264
      %p267 = scmp.ne.s32.totalorder %s252, %s266
      %p268 = scmp.eq.s32.totalorder %s27, 0
      %p269 = por %p267, %p268
      %s271 = sadd.s32 %s270, 1
      %p274 = scmp.eq.s32.totalorder %s21, 3
      %p275 = scmp.ne.s32.totalorder %s270, %s272
      %p276 = scmp.eq.s32.totalorder %s21, 0
      %p277 = por %p275, %p276
      %p278 = scmp.ne.s32.totalorder %s270, %s272
      %p279 = scmp.eq.s32.totalorder %s26, 3
      %p280 = por %p278, %p279
      %p281 = scmp.ne.s32.totalorder %s272, %s273
      %p282 = scmp.eq.s32.totalorder %s26, 0
      %p283 = por %p281, %p282
      %p284 = scmp.ne.s32.totalorder %s272, %s273
      %p285 = scmp.eq.s32.totalorder %s27, 3
      %p286 = por %p284, %p285
      %p288 = scmp.ne.s32.totalorder %s273, %s287
      %p289 = scmp.eq.s32.totalorder %s27, 0
      %p290 = por %p288, %p289
      %s291 = ssub.s32 %s21, %s28
      %p292 = scmp.eq.s32.totalorder %s291, 0
      %s294 = sadd.s32 %s293, 1
      %s295 = scalar_select %p292, %s293, %s294
      %p298 = pneg %p292
      %p299 = scmp.eq.s32.totalorder %s21, 3
      %p300 = por %p298, %p299
      %p301 = scmp.ne.s32.totalorder %s293, %s296
      %p302 = scmp.eq.s32.totalorder %s21, 0
      %p303 = por %p301, %p302
      %p304 = scmp.ne.s32.totalorder %s293, %s296
      %p305 = scmp.eq.s32.totalorder %s26, 3
      %p306 = por %p304, %p305
      %p307 = scmp.ne.s32.totalorder %s296, %s297
      %p308 = scmp.eq.s32.totalorder %s26, 0
      %p309 = por %p307, %p308
      %p310 = scmp.ne.s32.totalorder %s296, %s297
      %p311 = scmp.eq.s32.totalorder %s27, 3
      %p312 = por %p310, %p311
      %p314 = scmp.ne.s32.totalorder %s297, %s313
      %p315 = scmp.eq.s32.totalorder %s27, 0
      %p316 = por %p314, %p315
      %p317 = scmp.le.s32.totalorder 1, %s21
      %p318 = scmp.lt.s32.totalorder %s21, 5
      %p319 = pnand %p317, %p318
      %p320 = pneg %p319
      // Predicated region
      $region9: #{tpu_custom_call.1} parent=5 // pred_check
        _
      $region10: #{tpu_custom_call.1} parent=5 // pred_check_branch
        %322 = sbr.rel (%p319) target = $region12
      $region11: #{tpu_custom_call.1} parent=5 // pred_region
        %s323 = ssub.s32 %s21, 1
        // Predicated region
        $region13: #{tpu_custom_call.1} parent=11 // pred_check
          %p324 = pneg %p94
        $region14: #{tpu_custom_call.1} parent=11 // pred_check_branch
          %326 = sbr.rel (%p324) target = $region16
        $region15: #{tpu_custom_call.1} parent=11 // pred_region
          _
        $region16: #{tpu_custom_call.1} parent=11 // pred_fallthru
          _
        // Predicated region
        $region17: #{tpu_custom_call.1} parent=11 // pred_check
          %p327 = pneg %p115
        $region18: #{tpu_custom_call.1} parent=11 // pred_check_branch
          %329 = sbr.rel (%p327) target = $region20
        $region19: #{tpu_custom_call.1} parent=11 // pred_region
          _
        $region20: #{tpu_custom_call.1} parent=11 // pred_fallthru
          _
        // Predicated region
        $region21: #{tpu_custom_call.1} parent=11 // pred_check
          %p330 = pneg %p136
        $region22: #{tpu_custom_call.1} parent=11 // pred_check_branch
          %332 = sbr.rel (%p330) target = $region24
        $region23: #{tpu_custom_call.1} parent=11 // pred_region
          _
        $region24: #{tpu_custom_call.1} parent=11 // pred_fallthru
          _
        // Predicated region
        $region25: #{tpu_custom_call.1} parent=11 // pred_check
          %p333 = pneg %p157
        $region26: #{tpu_custom_call.1} parent=11 // pred_check_branch
          %335 = sbr.rel (%p333) target = $region28
        $region27: #{tpu_custom_call.1} parent=11 // pred_region
          _
        $region28: #{tpu_custom_call.1} parent=11 // pred_fallthru
          _
        // Predicated region
        $region29: #{tpu_custom_call.1} parent=11 // pred_check
          %p336 = pneg %p178
        $region30: #{tpu_custom_call.1} parent=11 // pred_check_branch
          %338 = sbr.rel (%p336) target = $region32
        $region31: #{tpu_custom_call.1} parent=11 // pred_region
          _
        $region32: #{tpu_custom_call.1} parent=11 // pred_fallthru
          _
        // Predicated region
        $region33: #{tpu_custom_call.1} parent=11 // pred_check
          %p339 = pneg %p199
        $region34: #{tpu_custom_call.1} parent=11 // pred_check_branch
          %341 = sbr.rel (%p339) target = $region36
        $region35: #{tpu_custom_call.1} parent=11 // pred_region
          _
        $region36: #{tpu_custom_call.1} parent=11 // pred_fallthru
          _
        // Predicated region
        $region37: #{tpu_custom_call.1} parent=11 // pred_check
          %p342 = pneg %p220
        $region38: #{tpu_custom_call.1} parent=11 // pred_check_branch
          %344 = sbr.rel (%p342) target = $region40
        $region39: #{tpu_custom_call.1} parent=11 // pred_region
          _
        $region40: #{tpu_custom_call.1} parent=11 // pred_fallthru
          _
        // Predicated region
        $region41: #{tpu_custom_call.1} parent=11 // pred_check
          %p345 = pneg %p241
        $region42: #{tpu_custom_call.1} parent=11 // pred_check_branch
          %347 = sbr.rel (%p345) target = $region44
        $region43: #{tpu_custom_call.1} parent=11 // pred_region
          _
        $region44: #{tpu_custom_call.1} parent=11 // pred_fallthru
          _
        // Predicated region
        $region45: #{tpu_custom_call.1} parent=11 // pred_check
          %p348 = pneg %p262
        $region46: #{tpu_custom_call.1} parent=11 // pred_check_branch
          %350 = sbr.rel (%p348) target = $region48
        $region47: #{tpu_custom_call.1} parent=11 // pred_region
          _
        $region48: #{tpu_custom_call.1} parent=11 // pred_fallthru
          _
        // Predicated region
        $region49: #{tpu_custom_call.1} parent=11 // pred_check
          %p351 = pneg %p283
        $region50: #{tpu_custom_call.1} parent=11 // pred_check_branch
          %353 = sbr.rel (%p351) target = $region52
        $region51: #{tpu_custom_call.1} parent=11 // pred_region
          _
        $region52: #{tpu_custom_call.1} parent=11 // pred_fallthru
          _
      $region12: #{tpu_custom_call.1} parent=5 // pred_fallthru
        _
      %p354 = scmp.lt.s32.totalorder %s21, 4
      // Predicated region
      $region53: #{tpu_custom_call.1} parent=5 // pred_check
        %p355 = pneg %p354
      $region54: #{tpu_custom_call.1} parent=5 // pred_check_branch
        %357 = sbr.rel (%p355) target = $region56
      $region55: #{tpu_custom_call.1} parent=5 // pred_region
        // Predicated region
        $region57: #{tpu_custom_call.1} parent=55 // pred_check
          %p358 = pneg %p41
        $region58: #{tpu_custom_call.1} parent=55 // pred_check_branch
          %360 = sbr.rel (%p358) target = $region60
        $region59: #{tpu_custom_call.1} parent=55 // pred_region
          %s361 = sand.u32 %s31, 1
          %s362 = sand.u32 %s31, 1
          %s363 = smul.addr %s362, 16
          %s364 = scalar_lea.vmem [#allocation2], %s363
          %s365 = smul.addr %s21, 8
          %s366 = scalar_lea.vmem %s0, %s365
          // Predicated region
          $region61: #{tpu_custom_call.1} parent=59 // pred_check
            _
          $region62: #{tpu_custom_call.1} parent=59 // pred_check_branch
            %368 = sbr.rel (0) target = $region64
          $region63: #{tpu_custom_call.1} parent=59 // pred_region
            // Predicated region
            $region65: #{tpu_custom_call.1} parent=63 // pred_check
              _
            $region66: #{tpu_custom_call.1} parent=63 // pred_check_branch
              %370 = sbr.rel (0) target = $region68
            $region67: #{tpu_custom_call.1} parent=63 // pred_region
              // Predicated region
              $region80: #{tpu_custom_call.1} parent=67 // pred_check
                _
              $region81: #{tpu_custom_call.1} parent=67 // pred_check_branch
                %387 = sbr.rel (0) target = $region83
              $region82: #{tpu_custom_call.1} parent=67 // pred_region
                loop: start=0, step=1, limit=1
                $region84: #{tpu_custom_call.1} parent=82 // loop_pre_header
                  _
                $region85: #{tpu_custom_call.1} parent=82 // loop_header
                  %s389 = sphi 0, %s393
                  %p390 = scmp.ge.s32.totalorder %s389, 1
                  %s394 = sphi %s366, %s366
                  %s395 = sphi %s364, %s364
                $region86: #{tpu_custom_call.1} parent=82 // loop_header_branch
                  %392 = sbr.rel (%p390) target = $region90
                $region87: #{tpu_custom_call.1} parent=82 // loop_body
                  %v396 = vld [vmem:[%s394] sm:$0xff]
                  %397 = vst [vmem:[%s395] sm:$0xff] %v396
                  %v398 = vld [vmem:[%s394 + $0x20] sm:$0xff]
                  %399 = vst [vmem:[%s395 + $0x8] sm:$0xff] %v398
                $region88: #{tpu_custom_call.1} parent=82 // loop_footer
                  %s393 = sadd.s32 1, %s389
                $region89: #{tpu_custom_call.1} parent=82 // loop_footer_branch
                  %388 = sbr.rel target = $region85
                $region90: #{tpu_custom_call.1} parent=82 // loop_exit
                  _
              $region83: #{tpu_custom_call.1} parent=67 // pred_fallthru
                _
              // Predicated region
              $region91: #{tpu_custom_call.1} parent=67 // pred_check
                _
              $region92: #{tpu_custom_call.1} parent=67 // pred_check_branch
                %401 = sbr.rel target = $region94
              $region93: #{tpu_custom_call.1} parent=67 // pred_region
                _
              $region94: #{tpu_custom_call.1} parent=67 // pred_fallthru
                _
            $region68: #{tpu_custom_call.1} parent=63 // pred_fallthru
              _
            // Predicated region
            $region69: #{tpu_custom_call.1} parent=63 // pred_check
              _
            $region70: #{tpu_custom_call.1} parent=63 // pred_check_branch
              %372 = sbr.rel target = $region72
            $region71: #{tpu_custom_call.1} parent=63 // pred_region
              loop: start=0, step=1, limit=1
              $region73: #{tpu_custom_call.1} parent=71 // loop_pre_header
                _
              $region74: #{tpu_custom_call.1} parent=71 // loop_header
                %s375 = sphi 0, %s379
                %p376 = scmp.ge.s32.totalorder %s375, 1
                %s380 = sphi %s366, %s366
                %s381 = sphi %s364, %s364
              $region75: #{tpu_custom_call.1} parent=71 // loop_header_branch
                %378 = sbr.rel (%p376) target = $region79
              $region76: #{tpu_custom_call.1} parent=71 // loop_body
                %v382 = vld [vmem:[%s380] sm:$0xff]
                %383 = vst [vmem:[%s381] sm:$0xff] %v382
                %v384 = vld [vmem:[%s380 + $0x20] sm:$0xff]
                %385 = vst [vmem:[%s381 + $0x8] sm:$0xff] %v384
              $region77: #{tpu_custom_call.1} parent=71 // loop_footer
                %s379 = sadd.s32 1, %s375
              $region78: #{tpu_custom_call.1} parent=71 // loop_footer_branch
                %374 = sbr.rel target = $region74
              $region79: #{tpu_custom_call.1} parent=71 // loop_exit
                _
            $region72: #{tpu_custom_call.1} parent=63 // pred_fallthru
              _
          $region64: #{tpu_custom_call.1} parent=59 // pred_fallthru
            _
          %402 = vnop
        $region60: #{tpu_custom_call.1} parent=55 // pred_fallthru
          _
        // Predicated region
        $region95: #{tpu_custom_call.1} parent=55 // pred_check
          %p403 = pneg %p67
        $region96: #{tpu_custom_call.1} parent=55 // pred_check_branch
          %405 = sbr.rel (%p403) target = $region98
        $region97: #{tpu_custom_call.1} parent=55 // pred_region
          %p406 = scmp.lt.s32.totalorder %s21, 3
          %s407 = scalar_select %p406, %s21, 3
          %s408 = smul.addr %s407, 2
          %s409 = scalar_lea.vmem %s1, %s408
        $region98: #{tpu_custom_call.1} parent=55 // pred_fallthru
          _
      $region56: #{tpu_custom_call.1} parent=5 // pred_fallthru
        _
      %p410 = scmp.le.s32.totalorder 1, %s21
      %p411 = scmp.lt.s32.totalorder %s21, 5
      %p412 = pnand %p410, %p411
      %p413 = pneg %p412
      // Predicated region
      $region99: #{tpu_custom_call.1} parent=5 // pred_check
        _
      $region100: #{tpu_custom_call.1} parent=5 // pred_check_branch
        %415 = sbr.rel (%p412) target = $region102
      $region101: #{tpu_custom_call.1} parent=5 // pred_region
        %s416 = ssub.s32 %s21, 1
        %s417 = sand.u32 %s34, 1
        %s418 = sand.u32 %s34, 1
        %s419 = smul.addr %s418, 16
        %s420 = scalar_lea.vmem [#allocation2], %s419
        // Predicated region
        $region103: #{tpu_custom_call.1} parent=101 // pred_check
          %p421 = pneg %p47
        $region104: #{tpu_custom_call.1} parent=101 // pred_check_branch
          %423 = sbr.rel (%p421) target = $region106
        $region105: #{tpu_custom_call.1} parent=101 // pred_region
          _
        $region106: #{tpu_custom_call.1} parent=101 // pred_fallthru
          _
        %s424 = sand.u32 %s34, 1
        %s425 = sand.u32 %s34, 1
        %s426 = smul.addr %s425, 16
        %s427 = scalar_lea.vmem [#allocation2], %s426
        %p428 = pneg %p47
        %p429 = pneg %p44
        %p430 = scmp.lt.s32.totalorder %s26, 3
        %s431 = scalar_select %p430, %s26, 3
        %s432 = smul.addr %s431, 2
        %s433 = scalar_lea.vmem %s1, %s432
        %p434 = pneg %p73
        %p435 = pneg %p70
        %p436 = pneg %p94
        %p437 = pneg %p91
        %p438 = pneg %p115
        %p439 = pneg %p112
        %p440 = pneg %p136
        %p441 = pneg %p133
        %p442 = pneg %p157
        %p443 = pneg %p154
        %p444 = pneg %p178
        %p445 = pneg %p175
        %p446 = pneg %p199
        %p447 = pneg %p196
        %p448 = pneg %p220
        %p449 = pneg %p217
        %p450 = pneg %p241
        %p451 = pneg %p238
        %p452 = pneg %p262
        %p453 = pneg %p259
        %p454 = pneg %p283
        %p455 = pneg %p280
        %p456 = pneg %p309
        %p457 = pneg %p306
        %s458 = sand.u32 %s296, 1
        %s459 = scalar_lea.sflag [#allocation4], %s458
        %s460 = sand.u32 %s296, 1
        %s461 = scalar_lea.vmem [#allocation3], %s460
        %p462 = scmp.lt.s32.totalorder %s26, 3
        %s463 = scalar_select %p462, %s26, 3
        %s464 = smul.addr %s463, 2
        %s465 = scalar_lea.vmem %s1, %s464
        %v466 = vld [vmem:[%s420] sm:$0xff]
        %v467 = vld [vmem:[%s420 + $0x8] sm:$0x3]
        %v468 = vld [vmem:[%s2] sm:$0xff]
        %v469 = vld [vmem:[%s2 + $0x8] sm:$0xff]
        %v470 = vld [vmem:[%s2 + $0x10] sm:$0xff]
        %v471 = vld [vmem:[%s2 + $0x18] sm:$0xff]
        %v472 = vld [vmem:[%s3] sm:$0xff]
        %v473 = vld [vmem:[%s3 + $0x8] sm:$0xff]
        %v474 = vld [vmem:[%s3 + $0x10] sm:$0xff]
        %v475 = vld [vmem:[%s3 + $0x18] sm:$0xff]
        %477 = vset.pattern.permute.xlu0 0
        %478 = vperm.xlu0 %477, %v472
        %v479 = vpop.permute.xlu0 %478
        %482 = vset.pattern.permute.xlu0 0
        %483 = vperm.xlu0 %482, %v473
        %v484 = vpop.permute.xlu0 %483
        %487 = vset.pattern.permute.xlu0 0
        %488 = vperm.xlu0 %487, %v474
        %v489 = vpop.permute.xlu0 %488
        %492 = vset.pattern.permute.xlu0 0
        %493 = vperm.xlu0 %492, %v475
        %v494 = vpop.permute.xlu0 %493
        %vm496 = vcmask 80896
        %v498 = vsel %vm496, %v468, 0
        %v501 = vsel %vm496, %v469, 0
        %v504 = vsel %vm496, %v470, 0
        %v507 = vsel %vm496, %v471, 0
        %vm509 = vcmask 1041408
        %v511 = vsel %vm509, %v467, 0
        %513 = vmatprep.subr.mxu0 0.0
        %514 = vmatpush1.msra.mxu0 %v466
        %515 = vmatprep.subr.mxu0 0.0
        %516 = vmatpush1.msra.mxu0 %v511
        %517 = vmatprep.subr.mxu0 0.0
        %518 = vmatpush1.msra.mxu0 0.0
        %519 = vmatprep.subr.mxu0 0.0
        %520 = vmatpush1.msra.mxu0 0.0
        %521 = vmatprep.subr.mxu0 0.0
        %522 = vmatpush1.msra.mxu0 0.0
        %523 = vmatprep.subr.mxu0 0.0
        %524 = vmatpush1.msra.mxu0 0.0
        %525 = vmatprep.subr.mxu0 0.0
        %526 = vmatpush1.msra.mxu0 0.0
        %527 = vmatprep.subr.mxu0 0.0
        %528 = vmatpush1.msra.mxu0 0.0
        %529 = vmatprep.subr.mxu0 0.0
        %530 = vmatpush1.msra.mxu0 0.0
        %531 = vmatprep.subr.mxu0 0.0
        %532 = vmatpush1.msra.mxu0 0.0
        %533 = vmatprep.subr.mxu0 0.0
        %534 = vmatpush1.msra.mxu0 0.0
        %535 = vmatprep.subr.mxu0 0.0
        %536 = vmatpush1.msra.mxu0 0.0
        %537 = vmatprep.subr.mxu0 0.0
        %538 = vmatpush1.msra.mxu0 0.0
        %539 = vmatprep.subr.mxu0 0.0
        %540 = vmatpush1.msra.mxu0 0.0
        %541 = vmatprep.subr.mxu0 0.0
        %542 = vmatpush1.msra.mxu0 0.0
        %543 = vmatprep.subr.mxu0 0.0
        %544 = vmatpush1.msra.mxu0 0.0
        %545 = vmatprep.subr.mxu0 0.0
        %546 = vmatpush1.msra.mxu0 0.0
        %547 = vmatprep.subr.mxu0 0.0
        %548 = vmatpush1.msra.mxu0 0.0
        %549 = vmatprep.subr.mxu0 0.0
        %550 = vmatpush1.msra.mxu0 0.0
        %551 = vmatprep.subr.mxu0 0.0
        %552 = vmatpush1.msra.mxu0 0.0
        %553 = vmatprep.subr.mxu0 0.0
        %554 = vmatpush1.msra.mxu0 0.0
        %555 = vmatprep.subr.mxu0 0.0
        %556 = vmatpush1.msra.mxu0 0.0
        %557 = vmatprep.subr.mxu0 0.0
        %558 = vmatpush1.msra.mxu0 0.0
        %559 = vmatprep.subr.mxu0 0.0
        %560 = vmatpush1.msra.mxu0 0.0
        %561 = vmatprep.subr.mxu0 0.0
        %562 = vmatpush1.msra.mxu0 0.0
        %563 = vmatprep.subr.mxu0 0.0
        %564 = vmatpush1.msra.mxu0 0.0
        %565 = vmatprep.subr.mxu0 0.0
        %566 = vmatpush1.msra.mxu0 0.0
        %567 = vmatprep.subr.mxu0 0.0
        %568 = vmatpush1.msra.mxu0 0.0
        %569 = vmatprep.subr.mxu0 0.0
        %570 = vmatpush1.msra.mxu0 0.0
        %571 = vmatprep.subr.mxu0 0.0
        %572 = vmatpush1.msra.mxu0 0.0
        %573 = vmatprep.subr.mxu0 0.0
        %574 = vmatpush1.msra.mxu0 0.0
        %575 = vmatprep.subr.mxu0 0.0
        %576 = vmatpush1.msra.mxu0 0.0
        %577 = vmatprep.mubr.f32.mxu0 0.0
        %578 = vmatmul.mubr.f32.gmra.mrb[0].mxu0 %v498
        %v579 = vpop.f32.mrb[0].mxu0
        %v580 = vadd.f32 %v479, %v579
        %v581 = vpop.f32.mrb[0].mxu0
        %582 = vmatprep.mubr.f32.mxu0 0.0
        %583 = vmatmul.mubr.f32.gmra.mrb[0].mxu0 %v501
        %v584 = vpop.f32.mrb[0].mxu0
        %v585 = vadd.f32 %v484, %v584
        %v586 = vpop.f32.mrb[0].mxu0
        %587 = vmatprep.mubr.f32.mxu0 0.0
        %588 = vmatmul.mubr.f32.gmra.mrb[0].mxu0 %v504
        %v589 = vpop.f32.mrb[0].mxu0
        %v590 = vadd.f32 %v489, %v589
        %v591 = vpop.f32.mrb[0].mxu0
        %592 = vmatprep.mubr.f32.mxu0 0.0
        %593 = vmatmul.mubr.f32.gmra.mrb[0].mxu0 %v507
        %v594 = vpop.f32.mrb[0].mxu0
        %v595 = vadd.f32 %v494, %v594
        %v596 = vpop.f32.mrb[0].mxu0
        %597 = vdwg.mxu0
        %v598 = vmax.f32 %v580, 0.0
        %v599 = vmax.f32 %v585, 0.0
        %v600 = vmax.f32 %v590, 0.0
        %v601 = vmax.f32 %v595, 0.0
        %v602 = vld [vmem:[%s4] sm:$0xff]
        %v603 = vld [vmem:[%s4 + $0x8] sm:$0xff]
        %v604 = vld [vmem:[%s4 + $0x10] sm:$0xff]
        %v605 = vld [vmem:[%s4 + $0x18] sm:$0xff]
        %v606 = vld [vmem:[%s5] sm:$0xff]
        %v607 = vld [vmem:[%s5 + $0x8] sm:$0xff]
        %v608 = vld [vmem:[%s5 + $0x10] sm:$0xff]
        %v609 = vld [vmem:[%s5 + $0x18] sm:$0xff]
        %611 = vset.pattern.permute.xlu0 0
        %612 = vperm.xlu0 %611, %v606
        %v613 = vpop.permute.xlu0 %612
        %616 = vset.pattern.permute.xlu0 0
        %617 = vperm.xlu0 %616, %v607
        %v618 = vpop.permute.xlu0 %617
        %621 = vset.pattern.permute.xlu0 0
        %622 = vperm.xlu0 %621, %v608
        %v623 = vpop.permute.xlu0 %622
        %626 = vset.pattern.permute.xlu0 0
        %627 = vperm.xlu0 %626, %v609
        %v628 = vpop.permute.xlu0 %627
        %vm630 = vcmask 261120
        %v632 = vsel %vm630, %v602, 0
        %v635 = vsel %vm630, %v603, 0
        %v638 = vsel %vm630, %v604, 0
        %v641 = vsel %vm630, %v605, 0
        %643 = vmatprep.subr.mxu0 0.0
        %644 = vmatpush1.msra.mxu0 %v598
        %645 = vmatprep.subr.mxu0 0.0
        %646 = vmatpush1.msra.mxu0 %v599
        %647 = vmatprep.subr.mxu0 0.0
        %648 = vmatpush1.msra.mxu0 %v600
        %649 = vmatprep.subr.mxu0 0.0
        %650 = vmatpush1.msra.mxu0 %v601
        %651 = vmatprep.subr.mxu0 0.0
        %652 = vmatpush1.msra.mxu0 0.0
        %653 = vmatprep.subr.mxu0 0.0
        %654 = vmatpush1.msra.mxu0 0.0
        %655 = vmatprep.subr.mxu0 0.0
        %656 = vmatpush1.msra.mxu0 0.0
        %657 = vmatprep.subr.mxu0 0.0
        %658 = vmatpush1.msra.mxu0 0.0
        %659 = vmatprep.subr.mxu0 0.0
        %660 = vmatpush1.msra.mxu0 0.0
        %661 = vmatprep.subr.mxu0 0.0
        %662 = vmatpush1.msra.mxu0 0.0
        %663 = vmatprep.subr.mxu0 0.0
        %664 = vmatpush1.msra.mxu0 0.0
        %665 = vmatprep.subr.mxu0 0.0
        %666 = vmatpush1.msra.mxu0 0.0
        %667 = vmatprep.subr.mxu0 0.0
        %668 = vmatpush1.msra.mxu0 0.0
        %669 = vmatprep.subr.mxu0 0.0
        %670 = vmatpush1.msra.mxu0 0.0
        %671 = vmatprep.subr.mxu0 0.0
        %672 = vmatpush1.msra.mxu0 0.0
        %673 = vmatprep.subr.mxu0 0.0
        %674 = vmatpush1.msra.mxu0 0.0
        %675 = vmatprep.subr.mxu0 0.0
        %676 = vmatpush1.msra.mxu0 0.0
        %677 = vmatprep.subr.mxu0 0.0
        %678 = vmatpush1.msra.mxu0 0.0
        %679 = vmatprep.subr.mxu0 0.0
        %680 = vmatpush1.msra.mxu0 0.0
        %681 = vmatprep.subr.mxu0 0.0
        %682 = vmatpush1.msra.mxu0 0.0
        %683 = vmatprep.subr.mxu0 0.0
        %684 = vmatpush1.msra.mxu0 0.0
        %685 = vmatprep.subr.mxu0 0.0
        %686 = vmatpush1.msra.mxu0 0.0
        %687 = vmatprep.subr.mxu0 0.0
        %688 = vmatpush1.msra.mxu0 0.0
        %689 = vmatprep.subr.mxu0 0.0
        %690 = vmatpush1.msra.mxu0 0.0
        %691 = vmatprep.subr.mxu0 0.0
        %692 = vmatpush1.msra.mxu0 0.0
        %693 = vmatprep.subr.mxu0 0.0
        %694 = vmatpush1.msra.mxu0 0.0
        %695 = vmatprep.subr.mxu0 0.0
        %696 = vmatpush1.msra.mxu0 0.0
        %697 = vmatprep.subr.mxu0 0.0
        %698 = vmatpush1.msra.mxu0 0.0
        %699 = vmatprep.subr.mxu0 0.0
        %700 = vmatpush1.msra.mxu0 0.0
        %701 = vmatprep.subr.mxu0 0.0
        %702 = vmatpush1.msra.mxu0 0.0
        %703 = vmatprep.subr.mxu0 0.0
        %704 = vmatpush1.msra.mxu0 0.0
        %705 = vmatprep.subr.mxu0 0.0
        %706 = vmatpush1.msra.mxu0 0.0
        %707 = vmatprep.mubr.f32.mxu0 0.0
        %708 = vmatmul.mubr.f32.gmra.mrb[0].mxu0 %v632
        %v709 = vpop.f32.mrb[0].mxu0
        %v710 = vadd.f32 %v613, %v709
        %v711 = vpop.f32.mrb[0].mxu0
        %712 = vmatprep.mubr.f32.mxu0 0.0
        %713 = vmatmul.mubr.f32.gmra.mrb[0].mxu0 %v635
        %v714 = vpop.f32.mrb[0].mxu0
        %v715 = vadd.f32 %v618, %v714
        %v716 = vpop.f32.mrb[0].mxu0
        %717 = vmatprep.mubr.f32.mxu0 0.0
        %718 = vmatmul.mubr.f32.gmra.mrb[0].mxu0 %v638
        %v719 = vpop.f32.mrb[0].mxu0
        %v720 = vadd.f32 %v623, %v719
        %v721 = vpop.f32.mrb[0].mxu0
        %722 = vmatprep.mubr.f32.mxu0 0.0
        %723 = vmatmul.mubr.f32.gmra.mrb[0].mxu0 %v641
        %v724 = vpop.f32.mrb[0].mxu0
        %v725 = vadd.f32 %v628, %v724
        %v726 = vpop.f32.mrb[0].mxu0
        %727 = vdwg.mxu0
        %v728 = vmax.f32 %v710, 0.0
        %v729 = vmax.f32 %v715, 0.0
        %v730 = vmax.f32 %v720, 0.0
        %v731 = vmax.f32 %v725, 0.0
        %v732 = vld [vmem:[%s6] sm:$0xff]
        %v733 = vld [vmem:[%s6 + $0x8] sm:$0xff]
        %v734 = vld [vmem:[%s6 + $0x10] sm:$0xff]
        %v735 = vld [vmem:[%s6 + $0x18] sm:$0xff]
        %v736 = vld [vmem:[%s7] sm:$0xff]
        %v737 = vld [vmem:[%s7 + $0x8] sm:$0xff]
        %v738 = vld [vmem:[%s7 + $0x10] sm:$0xff]
        %v739 = vld [vmem:[%s7 + $0x18] sm:$0xff]
        %741 = vset.pattern.permute.xlu0 0
        %742 = vperm.xlu0 %741, %v736
        %v743 = vpop.permute.xlu0 %742
        %746 = vset.pattern.permute.xlu0 0
        %747 = vperm.xlu0 %746, %v737
        %v748 = vpop.permute.xlu0 %747
        %751 = vset.pattern.permute.xlu0 0
        %752 = vperm.xlu0 %751, %v738
        %v753 = vpop.permute.xlu0 %752
        %756 = vset.pattern.permute.xlu0 0
        %757 = vperm.xlu0 %756, %v739
        %v758 = vpop.permute.xlu0 %757
        %v761 = vsel %vm630, %v732, 0
        %v764 = vsel %vm630, %v733, 0
        %v767 = vsel %vm630, %v734, 0
        %v770 = vsel %vm630, %v735, 0
        %772 = vmatprep.subr.mxu0 0.0
        %773 = vmatpush1.msra.mxu0 %v728
        %774 = vmatprep.subr.mxu0 0.0
        %775 = vmatpush1.msra.mxu0 %v729
        %776 = vmatprep.subr.mxu0 0.0
        %777 = vmatpush1.msra.mxu0 %v730
        %778 = vmatprep.subr.mxu0 0.0
        %779 = vmatpush1.msra.mxu0 %v731
        %780 = vmatprep.subr.mxu0 0.0
        %781 = vmatpush1.msra.mxu0 0.0
        %782 = vmatprep.subr.mxu0 0.0
        %783 = vmatpush1.msra.mxu0 0.0
        %784 = vmatprep.subr.mxu0 0.0
        %785 = vmatpush1.msra.mxu0 0.0
        %786 = vmatprep.subr.mxu0 0.0
        %787 = vmatpush1.msra.mxu0 0.0
        %788 = vmatprep.subr.mxu0 0.0
        %789 = vmatpush1.msra.mxu0 0.0
        %790 = vmatprep.subr.mxu0 0.0
        %791 = vmatpush1.msra.mxu0 0.0
        %792 = vmatprep.subr.mxu0 0.0
        %793 = vmatpush1.msra.mxu0 0.0
        %794 = vmatprep.subr.mxu0 0.0
        %795 = vmatpush1.msra.mxu0 0.0
        %796 = vmatprep.subr.mxu0 0.0
        %797 = vmatpush1.msra.mxu0 0.0
        %798 = vmatprep.subr.mxu0 0.0
        %799 = vmatpush1.msra.mxu0 0.0
        %800 = vmatprep.subr.mxu0 0.0
        %801 = vmatpush1.msra.mxu0 0.0
        %802 = vmatprep.subr.mxu0 0.0
        %803 = vmatpush1.msra.mxu0 0.0
        %804 = vmatprep.subr.mxu0 0.0
        %805 = vmatpush1.msra.mxu0 0.0
        %806 = vmatprep.subr.mxu0 0.0
        %807 = vmatpush1.msra.mxu0 0.0
        %808 = vmatprep.subr.mxu0 0.0
        %809 = vmatpush1.msra.mxu0 0.0
        %810 = vmatprep.subr.mxu0 0.0
        %811 = vmatpush1.msra.mxu0 0.0
        %812 = vmatprep.subr.mxu0 0.0
        %813 = vmatpush1.msra.mxu0 0.0
        %814 = vmatprep.subr.mxu0 0.0
        %815 = vmatpush1.msra.mxu0 0.0
        %816 = vmatprep.subr.mxu0 0.0
        %817 = vmatpush1.msra.mxu0 0.0
        %818 = vmatprep.subr.mxu0 0.0
        %819 = vmatpush1.msra.mxu0 0.0
        %820 = vmatprep.subr.mxu0 0.0
        %821 = vmatpush1.msra.mxu0 0.0
        %822 = vmatprep.subr.mxu0 0.0
        %823 = vmatpush1.msra.mxu0 0.0
        %824 = vmatprep.subr.mxu0 0.0
        %825 = vmatpush1.msra.mxu0 0.0
        %826 = vmatprep.subr.mxu0 0.0
        %827 = vmatpush1.msra.mxu0 0.0
        %828 = vmatprep.subr.mxu0 0.0
        %829 = vmatpush1.msra.mxu0 0.0
        %830 = vmatprep.subr.mxu0 0.0
        %831 = vmatpush1.msra.mxu0 0.0
        %832 = vmatprep.subr.mxu0 0.0
        %833 = vmatpush1.msra.mxu0 0.0
        %834 = vmatprep.subr.mxu0 0.0
        %835 = vmatpush1.msra.mxu0 0.0
        %836 = vmatprep.mubr.f32.mxu0 0.0
        %837 = vmatmul.mubr.f32.gmra.mrb[0].mxu0 %v761
        %v838 = vpop.f32.mrb[0].mxu0
        %v839 = vadd.f32 %v743, %v838
        %v840 = vpop.f32.mrb[0].mxu0
        %841 = vmatprep.mubr.f32.mxu0 0.0
        %842 = vmatmul.mubr.f32.gmra.mrb[0].mxu0 %v764
        %v843 = vpop.f32.mrb[0].mxu0
        %v844 = vadd.f32 %v748, %v843
        %v845 = vpop.f32.mrb[0].mxu0
        %846 = vmatprep.mubr.f32.mxu0 0.0
        %847 = vmatmul.mubr.f32.gmra.mrb[0].mxu0 %v767
        %v848 = vpop.f32.mrb[0].mxu0
        %v849 = vadd.f32 %v753, %v848
        %v850 = vpop.f32.mrb[0].mxu0
        %851 = vmatprep.mubr.f32.mxu0 0.0
        %852 = vmatmul.mubr.f32.gmra.mrb[0].mxu0 %v770
        %v853 = vpop.f32.mrb[0].mxu0
        %v854 = vadd.f32 %v758, %v853
        %v855 = vpop.f32.mrb[0].mxu0
        %856 = vdwg.mxu0
        %v857 = vmax.f32 %v839, 0.0
        %v858 = vmax.f32 %v844, 0.0
        %v859 = vmax.f32 %v849, 0.0
        %v860 = vmax.f32 %v854, 0.0
        %v861 = vld [vmem:[%s8] sm:$0xff]
        %v862 = vld [vmem:[%s8 + $0x8] sm:$0xff]
        %v863 = vld [vmem:[%s8 + $0x10] sm:$0xff]
        %v864 = vld [vmem:[%s8 + $0x18] sm:$0xff]
        %v865 = vld [vmem:[%s9] sm:$0xff]
        %v866 = vld [vmem:[%s9 + $0x8] sm:$0xff]
        %v867 = vld [vmem:[%s9 + $0x10] sm:$0xff]
        %v868 = vld [vmem:[%s9 + $0x18] sm:$0xff]
        %870 = vset.pattern.permute.xlu0 0
        %871 = vperm.xlu0 %870, %v865
        %v872 = vpop.permute.xlu0 %871
        %875 = vset.pattern.permute.xlu0 0
        %876 = vperm.xlu0 %875, %v866
        %v877 = vpop.permute.xlu0 %876
        %880 = vset.pattern.permute.xlu0 0
        %881 = vperm.xlu0 %880, %v867
        %v882 = vpop.permute.xlu0 %881
        %885 = vset.pattern.permute.xlu0 0
        %886 = vperm.xlu0 %885, %v868
        %v887 = vpop.permute.xlu0 %886
        %v890 = vsel %vm630, %v861, 0
        %v893 = vsel %vm630, %v862, 0
        %v896 = vsel %vm630, %v863, 0
        %v899 = vsel %vm630, %v864, 0
        %901 = vmatprep.subr.mxu0 0.0
        %902 = vmatpush1.msra.mxu0 %v857
        %903 = vmatprep.subr.mxu0 0.0
        %904 = vmatpush1.msra.mxu0 %v858
        %905 = vmatprep.subr.mxu0 0.0
        %906 = vmatpush1.msra.mxu0 %v859
        %907 = vmatprep.subr.mxu0 0.0
        %908 = vmatpush1.msra.mxu0 %v860
        %909 = vmatprep.subr.mxu0 0.0
        %910 = vmatpush1.msra.mxu0 0.0
        %911 = vmatprep.subr.mxu0 0.0
        %912 = vmatpush1.msra.mxu0 0.0
        %913 = vmatprep.subr.mxu0 0.0
        %914 = vmatpush1.msra.mxu0 0.0
        %915 = vmatprep.subr.mxu0 0.0
        %916 = vmatpush1.msra.mxu0 0.0
        %917 = vmatprep.subr.mxu0 0.0
        %918 = vmatpush1.msra.mxu0 0.0
        %919 = vmatprep.subr.mxu0 0.0
        %920 = vmatpush1.msra.mxu0 0.0
        %921 = vmatprep.subr.mxu0 0.0
        %922 = vmatpush1.msra.mxu0 0.0
        %923 = vmatprep.subr.mxu0 0.0
        %924 = vmatpush1.msra.mxu0 0.0
        %925 = vmatprep.subr.mxu0 0.0
        %926 = vmatpush1.msra.mxu0 0.0
        %927 = vmatprep.subr.mxu0 0.0
        %928 = vmatpush1.msra.mxu0 0.0
        %929 = vmatprep.subr.mxu0 0.0
        %930 = vmatpush1.msra.mxu0 0.0
        %931 = vmatprep.subr.mxu0 0.0
        %932 = vmatpush1.msra.mxu0 0.0
        %933 = vmatprep.subr.mxu0 0.0
        %934 = vmatpush1.msra.mxu0 0.0
        %935 = vmatprep.subr.mxu0 0.0
        %936 = vmatpush1.msra.mxu0 0.0
        %937 = vmatprep.subr.mxu0 0.0
        %938 = vmatpush1.msra.mxu0 0.0
        %939 = vmatprep.subr.mxu0 0.0
        %940 = vmatpush1.msra.mxu0 0.0
        %941 = vmatprep.subr.mxu0 0.0
        %942 = vmatpush1.msra.mxu0 0.0
        %943 = vmatprep.subr.mxu0 0.0
        %944 = vmatpush1.msra.mxu0 0.0
        %945 = vmatprep.subr.mxu0 0.0
        %946 = vmatpush1.msra.mxu0 0.0
        %947 = vmatprep.subr.mxu0 0.0
        %948 = vmatpush1.msra.mxu0 0.0
        %949 = vmatprep.subr.mxu0 0.0
        %950 = vmatpush1.msra.mxu0 0.0
        %951 = vmatprep.subr.mxu0 0.0
        %952 = vmatpush1.msra.mxu0 0.0
        %953 = vmatprep.subr.mxu0 0.0
        %954 = vmatpush1.msra.mxu0 0.0
        %955 = vmatprep.subr.mxu0 0.0
        %956 = vmatpush1.msra.mxu0 0.0
        %957 = vmatprep.subr.mxu0 0.0
        %958 = vmatpush1.msra.mxu0 0.0
        %959 = vmatprep.subr.mxu0 0.0
        %960 = vmatpush1.msra.mxu0 0.0
        %961 = vmatprep.subr.mxu0 0.0
        %962 = vmatpush1.msra.mxu0 0.0
        %963 = vmatprep.subr.mxu0 0.0
        %964 = vmatpush1.msra.mxu0 0.0
        %965 = vmatprep.mubr.f32.mxu0 0.0
        %966 = vmatmul.mubr.f32.gmra.mrb[0].mxu0 %v890
        %v967 = vpop.f32.mrb[0].mxu0
        %v968 = vadd.f32 %v872, %v967
        %v969 = vpop.f32.mrb[0].mxu0
        %970 = vmatprep.mubr.f32.mxu0 0.0
        %971 = vmatmul.mubr.f32.gmra.mrb[0].mxu0 %v893
        %v972 = vpop.f32.mrb[0].mxu0
        %v973 = vadd.f32 %v877, %v972
        %v974 = vpop.f32.mrb[0].mxu0
        %975 = vmatprep.mubr.f32.mxu0 0.0
        %976 = vmatmul.mubr.f32.gmra.mrb[0].mxu0 %v896
        %v977 = vpop.f32.mrb[0].mxu0
        %v978 = vadd.f32 %v882, %v977
        %v979 = vpop.f32.mrb[0].mxu0
        %980 = vmatprep.mubr.f32.mxu0 0.0
        %981 = vmatmul.mubr.f32.gmra.mrb[0].mxu0 %v899
        %v982 = vpop.f32.mrb[0].mxu0
        %v983 = vadd.f32 %v887, %v982
        %v984 = vpop.f32.mrb[0].mxu0
        %985 = vdwg.mxu0
        %v986 = vmul.f32 %v973, %v973
        %v987 = vmul.f32 %v978, %v978
        %v988 = vadd.f32 %v986, %v987
        %v989 = vmax.f32 %v988, 1e-24
        %v990 = vrsqrt.pop %v989
        %v991 = vmul.f32 %v973, %v990
        %v992 = vmul.f32 %v978, %v990
        %v993 = vxor.u32 %v983, 2147483648
        %v994 = vmul.f32 %v993, 1.442695
        %v995 = vpow.pop %v994
        %v996 = vadd.f32 %v995, 1.0
        %v997 = vrcp.pop %v996
        %v998 = vmul.f32 1.0, %v997
        %v999 = vmul.f32 %v998, 8.0
        %v1000 = vround.ne.pseudo %v999
        %v1001 = vmax.f32 %v1000, 0.0
        %v1002 = vmin.f32 %v1001, 7.0
        %v1003 = vcvt.f32.s32.to.zero.pseudo %v1002
        %v1004 = vld [vmem:[%s465] sm:$0x3]
        %v1005 = vlaneseq
        %v1006 = vshrl.u32 %v1005, 7
        %v1007 = vsub.s32 0, %v1006
        %v1008 = vrot.slane %v1004, %v1007
        %v1009 = vmul.f32 %v991, %v1008
        %v1010 = vlaneseq
        %v1011 = vshrl.u32 %v1010, 7
        %v1012 = vsub.s32 1, %v1011
        %v1013 = vrot.slane %v1004, %v1012
        %v1014 = vmul.f32 %v992, %v1013
        %v1015 = vadd.f32 %v1009, %v1014
        %v1016 = vsub.f32 0.0, %v992
        %v1017 = vmul.f32 %v1016, %v1008
        %v1018 = vmul.f32 %v991, %v1013
        %v1019 = vadd.f32 %v1017, %v1018
        %v1020 = vmul.f32 %v1015, 0.5
        %v1021 = vadd.f32 %v1020, 0.5
        %v1022 = vmul.f32 %v1021, 16.0
        %v1023 = vfloor.f32 %v1022
        %v1024 = vmax.f32 %v1023, 0.0
        %v1025 = vmin.f32 %v1024, 15.0
        %v1026 = vcvt.f32.s32.to.zero.pseudo %v1025
        %v1027 = vmul.f32 %v1019, 0.5
        %v1028 = vadd.f32 %v1027, 0.5
        %v1029 = vmul.f32 %v1028, 16.0
        %v1030 = vfloor.f32 %v1029
        %v1031 = vmax.f32 %v1030, 0.0
        %v1032 = vmin.f32 %v1031, 15.0
        %v1033 = vcvt.f32.s32.to.zero.pseudo %v1032
        %v1034 = vmul.u32 %v1033, 16
        %v1035 = vadd.s32 %v1034, %v1026
        %vm1036 = vcmp.eq.s32.totalorder %v1003, 0
        %vm1037 = vcmp.eq.s32.totalorder %v1003, 1
        %vm1038 = vcmp.eq.s32.totalorder %v1003, 2
        %vm1039 = vcmp.eq.s32.totalorder %v1003, 3
        %vm1040 = vcmp.eq.s32.totalorder %v1003, 4
        %vm1041 = vcmp.eq.s32.totalorder %v1003, 5
        %vm1042 = vcmp.eq.s32.totalorder %v1003, 6
        %vm1043 = vcmp.eq.s32.totalorder %v1003, 7
        %v1044 = vld [vmem:[%s10] sm:$0xff]
        %v1045 = vld [vmem:[%s10 + $0x8] sm:$0xff]
        %v1046 = vld [vmem:[%s10 + $0x10] sm:$0xff]
        %v1047 = vld [vmem:[%s10 + $0x18] sm:$0xff]
        %v1048 = vld [vmem:[%s10 + $0x20] sm:$0xff]
        %v1049 = vld [vmem:[%s10 + $0x28] sm:$0xff]
        %v1050 = vld [vmem:[%s10 + $0x30] sm:$0xff]
        %v1051 = vld [vmem:[%s10 + $0x38] sm:$0xff]
        %1053 = vset.pattern.permute.xlu0 0
        %1054 = vperm.xlu0 %1053, %v1044
        %v1055 = vpop.permute.xlu0 %1054
        %1058 = vset.pattern.permute.xlu0 0
        %1059 = vperm.xlu0 %1058, %v1045
        %v1060 = vpop.permute.xlu0 %1059
        %1063 = vset.pattern.permute.xlu0 0
        %1064 = vperm.xlu0 %1063, %v1046
        %v1065 = vpop.permute.xlu0 %1064
        %1068 = vset.pattern.permute.xlu0 0
        %1069 = vperm.xlu0 %1068, %v1047
        %v1070 = vpop.permute.xlu0 %1069
        %1073 = vset.pattern.permute.xlu0 0
        %1074 = vperm.xlu0 %1073, %v1048
        %v1075 = vpop.permute.xlu0 %1074
        %1078 = vset.pattern.permute.xlu0 0
        %1079 = vperm.xlu0 %1078, %v1049
        %v1080 = vpop.permute.xlu0 %1079
        %1083 = vset.pattern.permute.xlu0 0
        %1084 = vperm.xlu0 %1083, %v1050
        %v1085 = vpop.permute.xlu0 %1084
        %1088 = vset.pattern.permute.xlu0 0
        %1089 = vperm.xlu0 %1088, %v1051
        %v1090 = vpop.permute.xlu0 %1089
        %v1092 = vsel %vm1036, %v1055, 0.0
        %v1093 = vsel %vm1037, %v1060, 0.0
        %v1094 = vsel %vm1038, %v1065, 0.0
        %v1095 = vsel %vm1039, %v1070, 0.0
        %v1096 = vsel %vm1040, %v1075, 0.0
        %v1097 = vsel %vm1041, %v1080, 0.0
        %v1098 = vsel %vm1042, %v1085, 0.0
        %v1099 = vsel %vm1043, %v1090, 0.0
        %v1100 = vadd.f32 %v1092, %v1093
        %v1101 = vadd.f32 %v1100, %v1094
        %v1102 = vadd.f32 %v1101, %v1095
        %v1103 = vadd.f32 %v1102, %v1096
        %v1104 = vadd.f32 %v1103, %v1097
        %v1105 = vadd.f32 %v1104, %v1098
        %v1106 = vadd.f32 %v1105, %v1099
        %v1107 = vmax.f32 %v968, 0.0
        %v1108 = vmul.f32 %v1107, %v1106
        %v1109 = vand.u32 2147483647, %v1108
        %v1110 = vrot.slane %v1109, 4
        %v1111 = vadd.f32 %v1109, %v1110
        %v1112 = vrot.slane %v1111, 2
        %v1113 = vadd.f32 %v1111, %v1112
        %v1114 = vrot.slane %v1113, 1
        %v1115 = vadd.f32 %v1113, %v1114
        %v1116 = vlaneseq
        %v1117 = vshrl.u32 %v1116, 7
        %v1118 = vadd.s32 %v1117, 8
        %v1119 = vadd.s32 %v1117, 16
        %v1120 = vadd.s32 %v1117, 24
        %v1121 = vadd.s32 %v1117, 32
        %v1122 = vadd.s32 %v1117, 40
        %v1123 = vadd.s32 %v1117, 48
        %v1124 = vadd.s32 %v1117, 56
        %v1125 = vadd.s32 %v1117, 64
        %v1126 = vadd.s32 %v1117, 72
        %v1127 = vadd.s32 %v1117, 80
        %v1128 = vadd.s32 %v1117, 88
        %v1129 = vadd.s32 %v1117, 96
        %v1130 = vadd.s32 %v1117, 104
        %v1131 = vadd.s32 %v1117, 112
        %v1132 = vadd.s32 %v1117, 120
        %v1133 = vadd.s32 %v1117, 128
        %v1134 = vadd.s32 %v1117, 136
        %v1135 = vadd.s32 %v1117, 144
        %v1136 = vadd.s32 %v1117, 152
        %v1137 = vadd.s32 %v1117, 160
        %v1138 = vadd.s32 %v1117, 168
        %v1139 = vadd.s32 %v1117, 176
        %v1140 = vadd.s32 %v1117, 184
        %v1141 = vadd.s32 %v1117, 192
        %v1142 = vadd.s32 %v1117, 200
        %v1143 = vadd.s32 %v1117, 208
        %v1144 = vadd.s32 %v1117, 216
        %v1145 = vadd.s32 %v1117, 224
        %v1146 = vadd.s32 %v1117, 232
        %v1147 = vadd.s32 %v1117, 240
        %v1148 = vadd.s32 %v1117, 248
        %v1149 = vlaneseq
        %v1150 = vshrl.u32 %v1149, 7
        %v1151 = vsub.s32 0, %v1150
        %v1152 = vrot.slane %v1003, %v1151
        %vm1153 = vcmp.eq.s32.totalorder %v1117, %v1152
        %v1154 = vsel %vm1153, 1, 0
        %v1155 = vcvt.s32.f32 %v1154
        %v1156 = vld [vmem:[%s11] sm:$0xff]
        %v1157 = vld [vmem:[%s11 + $0x8] sm:$0xff]
        %v1158 = vld [vmem:[%s11 + $0x10] sm:$0xff]
        %v1159 = vld [vmem:[%s11 + $0x18] sm:$0xff]
        %v1160 = vld [vmem:[%s11 + $0x20] sm:$0xff]
        %v1161 = vld [vmem:[%s11 + $0x28] sm:$0xff]
        %v1162 = vld [vmem:[%s11 + $0x30] sm:$0xff]
        %v1163 = vld [vmem:[%s11 + $0x38] sm:$0xff]
        %v1164 = vld [vmem:[%s11 + $0x40] sm:$0xff]
        %v1165 = vld [vmem:[%s11 + $0x48] sm:$0xff]
        %v1166 = vld [vmem:[%s11 + $0x50] sm:$0xff]
        %v1167 = vld [vmem:[%s11 + $0x58] sm:$0xff]
        %v1168 = vld [vmem:[%s11 + $0x60] sm:$0xff]
        %v1169 = vld [vmem:[%s11 + $0x68] sm:$0xff]
        %v1170 = vld [vmem:[%s11 + $0x70] sm:$0xff]
        %v1171 = vld [vmem:[%s11 + $0x78] sm:$0xff]
        %v1172 = vld [vmem:[%s11 + $0x80] sm:$0xff]
        %v1173 = vld [vmem:[%s11 + $0x88] sm:$0xff]
        %v1174 = vld [vmem:[%s11 + $0x90] sm:$0xff]
        %v1175 = vld [vmem:[%s11 + $0x98] sm:$0xff]
        %v1176 = vld [vmem:[%s11 + $0xa0] sm:$0xff]
        %v1177 = vld [vmem:[%s11 + $0xa8] sm:$0xff]
        %v1178 = vld [vmem:[%s11 + $0xb0] sm:$0xff]
        %v1179 = vld [vmem:[%s11 + $0xb8] sm:$0xff]
        %v1180 = vld [vmem:[%s11 + $0xc0] sm:$0xff]
        %v1181 = vld [vmem:[%s11 + $0xc8] sm:$0xff]
        %v1182 = vld [vmem:[%s11 + $0xd0] sm:$0xff]
        %v1183 = vld [vmem:[%s11 + $0xd8] sm:$0xff]
        %v1184 = vld [vmem:[%s11 + $0xe0] sm:$0xff]
        %v1185 = vld [vmem:[%s11 + $0xe8] sm:$0xff]
        %v1186 = vld [vmem:[%s11 + $0xf0] sm:$0xff]
        %v1187 = vld [vmem:[%s11 + $0xf8] sm:$0xff]
        %vm1188 = vcmask 64512
        %v1190 = vsel %vm1188, %v1156, 0
        %v1193 = vsel %vm1188, %v1157, 0
        %v1196 = vsel %vm1188, %v1158, 0
        %v1199 = vsel %vm1188, %v1159, 0
        %v1202 = vsel %vm1188, %v1160, 0
        %v1205 = vsel %vm1188, %v1161, 0
        %v1208 = vsel %vm1188, %v1162, 0
        %v1211 = vsel %vm1188, %v1163, 0
        %v1214 = vsel %vm1188, %v1164, 0
        %v1217 = vsel %vm1188, %v1165, 0
        %v1220 = vsel %vm1188, %v1166, 0
        %v1223 = vsel %vm1188, %v1167, 0
        %v1226 = vsel %vm1188, %v1168, 0
        %v1229 = vsel %vm1188, %v1169, 0
        %v1232 = vsel %vm1188, %v1170, 0
        %v1235 = vsel %vm1188, %v1171, 0
        %v1238 = vsel %vm1188, %v1172, 0
        %v1241 = vsel %vm1188, %v1173, 0
        %v1244 = vsel %vm1188, %v1174, 0
        %v1247 = vsel %vm1188, %v1175, 0
        %v1250 = vsel %vm1188, %v1176, 0
        %v1253 = vsel %vm1188, %v1177, 0
        %v1256 = vsel %vm1188, %v1178, 0
        %v1259 = vsel %vm1188, %v1179, 0
        %v1262 = vsel %vm1188, %v1180, 0
        %v1265 = vsel %vm1188, %v1181, 0
        %v1268 = vsel %vm1188, %v1182, 0
        %v1271 = vsel %vm1188, %v1183, 0
        %v1274 = vsel %vm1188, %v1184, 0
        %v1277 = vsel %vm1188, %v1185, 0
        %v1280 = vsel %vm1188, %v1186, 0
        %v1283 = vsel %vm1188, %v1187, 0
        %1285 = vmatprep.subr.mxu0 0.0
        %1286 = vmatpush1.msra.mxu0 %v1155
        %1287 = vmatprep.subr.mxu0 0.0
        %1288 = vmatpush1.msra.mxu0 0.0
        %1289 = vmatprep.subr.mxu0 0.0
        %1290 = vmatpush1.msra.mxu0 0.0
        %1291 = vmatprep.subr.mxu0 0.0
        %1292 = vmatpush1.msra.mxu0 0.0
        %1293 = vmatprep.subr.mxu0 0.0
        %1294 = vmatpush1.msra.mxu0 0.0
        %1295 = vmatprep.subr.mxu0 0.0
        %1296 = vmatpush1.msra.mxu0 0.0
        %1297 = vmatprep.subr.mxu0 0.0
        %1298 = vmatpush1.msra.mxu0 0.0
        %1299 = vmatprep.subr.mxu0 0.0
        %1300 = vmatpush1.msra.mxu0 0.0
        %1301 = vmatprep.subr.mxu0 0.0
        %1302 = vmatpush1.msra.mxu0 0.0
        %1303 = vmatprep.subr.mxu0 0.0
        %1304 = vmatpush1.msra.mxu0 0.0
        %1305 = vmatprep.subr.mxu0 0.0
        %1306 = vmatpush1.msra.mxu0 0.0
        %1307 = vmatprep.subr.mxu0 0.0
        %1308 = vmatpush1.msra.mxu0 0.0
        %1309 = vmatprep.subr.mxu0 0.0
        %1310 = vmatpush1.msra.mxu0 0.0
        %1311 = vmatprep.subr.mxu0 0.0
        %1312 = vmatpush1.msra.mxu0 0.0
        %1313 = vmatprep.subr.mxu0 0.0
        %1314 = vmatpush1.msra.mxu0 0.0
        %1315 = vmatprep.subr.mxu0 0.0
        %1316 = vmatpush1.msra.mxu0 0.0
        %1317 = vmatprep.subr.mxu0 0.0
        %1318 = vmatpush1.msra.mxu0 0.0
        %1319 = vmatprep.subr.mxu0 0.0
        %1320 = vmatpush1.msra.mxu0 0.0
        %1321 = vmatprep.subr.mxu0 0.0
        %1322 = vmatpush1.msra.mxu0 0.0
        %1323 = vmatprep.subr.mxu0 0.0
        %1324 = vmatpush1.msra.mxu0 0.0
        %1325 = vmatprep.subr.mxu0 0.0
        %1326 = vmatpush1.msra.mxu0 0.0
        %1327 = vmatprep.subr.mxu0 0.0
        %1328 = vmatpush1.msra.mxu0 0.0
        %1329 = vmatprep.subr.mxu0 0.0
        %1330 = vmatpush1.msra.mxu0 0.0
        %1331 = vmatprep.subr.mxu0 0.0
        %1332 = vmatpush1.msra.mxu0 0.0
        %1333 = vmatprep.subr.mxu0 0.0
        %1334 = vmatpush1.msra.mxu0 0.0
        %1335 = vmatprep.subr.mxu0 0.0
        %1336 = vmatpush1.msra.mxu0 0.0
        %1337 = vmatprep.subr.mxu0 0.0
        %1338 = vmatpush1.msra.mxu0 0.0
        %1339 = vmatprep.subr.mxu0 0.0
        %1340 = vmatpush1.msra.mxu0 0.0
        %1341 = vmatprep.subr.mxu0 0.0
        %1342 = vmatpush1.msra.mxu0 0.0
        %1343 = vmatprep.subr.mxu0 0.0
        %1344 = vmatpush1.msra.mxu0 0.0
        %1345 = vmatprep.subr.mxu0 0.0
        %1346 = vmatpush1.msra.mxu0 0.0
        %1347 = vmatprep.subr.mxu0 0.0
        %1348 = vmatpush1.msra.mxu0 0.0
        %1349 = vmatprep.mubr.f32.mxu0 0.0
        %1350 = vmatmul.mubr.f32.gmra.mrb[0].mxu0 %v1190
        %v1351 = vpop.f32.mrb[0].mxu0
        %v1352 = vadd.f32 0.0, %v1351
        %v1353 = vpop.f32.mrb[0].mxu0
        %1354 = vmatprep.mubr.f32.mxu0 0.0
        %1355 = vmatmul.mubr.f32.gmra.mrb[0].mxu0 %v1193
        %v1356 = vpop.f32.mrb[0].mxu0
        %v1357 = vadd.f32 0.0, %v1356
        %v1358 = vpop.f32.mrb[0].mxu0
        %1359 = vmatprep.mubr.f32.mxu0 0.0
        %1360 = vmatmul.mubr.f32.gmra.mrb[0].mxu0 %v1196
        %v1361 = vpop.f32.mrb[0].mxu0
        %v1362 = vadd.f32 0.0, %v1361
        %v1363 = vpop.f32.mrb[0].mxu0
        %1364 = vmatprep.mubr.f32.mxu0 0.0
        %1365 = vmatmul.mubr.f32.gmra.mrb[0].mxu0 %v1199
        %v1366 = vpop.f32.mrb[0].mxu0
        %v1367 = vadd.f32 0.0, %v1366
        %v1368 = vpop.f32.mrb[0].mxu0
        %1369 = vmatprep.mubr.f32.mxu0 0.0
        %1370 = vmatmul.mubr.f32.gmra.mrb[0].mxu0 %v1202
        %v1371 = vpop.f32.mrb[0].mxu0
        %v1372 = vadd.f32 0.0, %v1371
        %v1373 = vpop.f32.mrb[0].mxu0
        %1374 = vmatprep.mubr.f32.mxu0 0.0
        %1375 = vmatmul.mubr.f32.gmra.mrb[0].mxu0 %v1205
        %v1376 = vpop.f32.mrb[0].mxu0
        %v1377 = vadd.f32 0.0, %v1376
        %v1378 = vpop.f32.mrb[0].mxu0
        %1379 = vmatprep.mubr.f32.mxu0 0.0
        %1380 = vmatmul.mubr.f32.gmra.mrb[0].mxu0 %v1208
        %v1381 = vpop.f32.mrb[0].mxu0
        %v1382 = vadd.f32 0.0, %v1381
        %v1383 = vpop.f32.mrb[0].mxu0
        %1384 = vmatprep.mubr.f32.mxu0 0.0
        %1385 = vmatmul.mubr.f32.gmra.mrb[0].mxu0 %v1211
        %v1386 = vpop.f32.mrb[0].mxu0
        %v1387 = vadd.f32 0.0, %v1386
        %v1388 = vpop.f32.mrb[0].mxu0
        %1389 = vmatprep.mubr.f32.mxu0 0.0
        %1390 = vmatmul.mubr.f32.gmra.mrb[0].mxu0 %v1214
        %v1391 = vpop.f32.mrb[0].mxu0
        %v1392 = vadd.f32 0.0, %v1391
        %v1393 = vpop.f32.mrb[0].mxu0
        %1394 = vmatprep.mubr.f32.mxu0 0.0
        %1395 = vmatmul.mubr.f32.gmra.mrb[0].mxu0 %v1217
        %v1396 = vpop.f32.mrb[0].mxu0
        %v1397 = vadd.f32 0.0, %v1396
        %v1398 = vpop.f32.mrb[0].mxu0
        %1399 = vmatprep.mubr.f32.mxu0 0.0
        %1400 = vmatmul.mubr.f32.gmra.mrb[0].mxu0 %v1220
        %v1401 = vpop.f32.mrb[0].mxu0
        %v1402 = vadd.f32 0.0, %v1401
        %v1403 = vpop.f32.mrb[0].mxu0
        %1404 = vmatprep.mubr.f32.mxu0 0.0
        %1405 = vmatmul.mubr.f32.gmra.mrb[0].mxu0 %v1223
        %v1406 = vpop.f32.mrb[0].mxu0
        %v1407 = vadd.f32 0.0, %v1406
        %v1408 = vpop.f32.mrb[0].mxu0
        %1409 = vmatprep.mubr.f32.mxu0 0.0
        %1410 = vmatmul.mubr.f32.gmra.mrb[0].mxu0 %v1226
        %v1411 = vpop.f32.mrb[0].mxu0
        %v1412 = vadd.f32 0.0, %v1411
        %v1413 = vpop.f32.mrb[0].mxu0
        %1414 = vmatprep.mubr.f32.mxu0 0.0
        %1415 = vmatmul.mubr.f32.gmra.mrb[0].mxu0 %v1229
        %v1416 = vpop.f32.mrb[0].mxu0
        %v1417 = vadd.f32 0.0, %v1416
        %v1418 = vpop.f32.mrb[0].mxu0
        %1419 = vmatprep.mubr.f32.mxu0 0.0
        %1420 = vmatmul.mubr.f32.gmra.mrb[0].mxu0 %v1232
        %v1421 = vpop.f32.mrb[0].mxu0
        %v1422 = vadd.f32 0.0, %v1421
        %v1423 = vpop.f32.mrb[0].mxu0
        %1424 = vmatprep.mubr.f32.mxu0 0.0
        %1425 = vmatmul.mubr.f32.gmra.mrb[0].mxu0 %v1235
        %v1426 = vpop.f32.mrb[0].mxu0
        %v1427 = vadd.f32 0.0, %v1426
        %v1428 = vpop.f32.mrb[0].mxu0
        %1429 = vmatprep.mubr.f32.mxu0 0.0
        %1430 = vmatmul.mubr.f32.gmra.mrb[0].mxu0 %v1238
        %v1431 = vpop.f32.mrb[0].mxu0
        %v1432 = vadd.f32 0.0, %v1431
        %v1433 = vpop.f32.mrb[0].mxu0
        %1434 = vmatprep.mubr.f32.mxu0 0.0
        %1435 = vmatmul.mubr.f32.gmra.mrb[0].mxu0 %v1241
        %v1436 = vpop.f32.mrb[0].mxu0
        %v1437 = vadd.f32 0.0, %v1436
        %v1438 = vpop.f32.mrb[0].mxu0
        %1439 = vmatprep.mubr.f32.mxu0 0.0
        %1440 = vmatmul.mubr.f32.gmra.mrb[0].mxu0 %v1244
        %v1441 = vpop.f32.mrb[0].mxu0
        %v1442 = vadd.f32 0.0, %v1441
        %v1443 = vpop.f32.mrb[0].mxu0
        %1444 = vmatprep.mubr.f32.mxu0 0.0
        %1445 = vmatmul.mubr.f32.gmra.mrb[0].mxu0 %v1247
        %v1446 = vpop.f32.mrb[0].mxu0
        %v1447 = vadd.f32 0.0, %v1446
        %v1448 = vpop.f32.mrb[0].mxu0
        %1449 = vmatprep.mubr.f32.mxu0 0.0
        %1450 = vmatmul.mubr.f32.gmra.mrb[0].mxu0 %v1250
        %v1451 = vpop.f32.mrb[0].mxu0
        %v1452 = vadd.f32 0.0, %v1451
        %v1453 = vpop.f32.mrb[0].mxu0
        %1454 = vmatprep.mubr.f32.mxu0 0.0
        %1455 = vmatmul.mubr.f32.gmra.mrb[0].mxu0 %v1253
        %v1456 = vpop.f32.mrb[0].mxu0
        %v1457 = vadd.f32 0.0, %v1456
        %v1458 = vpop.f32.mrb[0].mxu0
        %1459 = vmatprep.mubr.f32.mxu0 0.0
        %1460 = vmatmul.mubr.f32.gmra.mrb[0].mxu0 %v1256
        %v1461 = vpop.f32.mrb[0].mxu0
        %v1462 = vadd.f32 0.0, %v1461
        %v1463 = vpop.f32.mrb[0].mxu0
        %1464 = vmatprep.mubr.f32.mxu0 0.0
        %1465 = vmatmul.mubr.f32.gmra.mrb[0].mxu0 %v1259
        %v1466 = vpop.f32.mrb[0].mxu0
        %v1467 = vadd.f32 0.0, %v1466
        %v1468 = vpop.f32.mrb[0].mxu0
        %1469 = vmatprep.mubr.f32.mxu0 0.0
        %1470 = vmatmul.mubr.f32.gmra.mrb[0].mxu0 %v1262
        %v1471 = vpop.f32.mrb[0].mxu0
        %v1472 = vadd.f32 0.0, %v1471
        %v1473 = vpop.f32.mrb[0].mxu0
        %1474 = vmatprep.mubr.f32.mxu0 0.0
        %1475 = vmatmul.mubr.f32.gmra.mrb[0].mxu0 %v1265
        %v1476 = vpop.f32.mrb[0].mxu0
        %v1477 = vadd.f32 0.0, %v1476
        %v1478 = vpop.f32.mrb[0].mxu0
        %1479 = vmatprep.mubr.f32.mxu0 0.0
        %1480 = vmatmul.mubr.f32.gmra.mrb[0].mxu0 %v1268
        %v1481 = vpop.f32.mrb[0].mxu0
        %v1482 = vadd.f32 0.0, %v1481
        %v1483 = vpop.f32.mrb[0].mxu0
        %1484 = vmatprep.mubr.f32.mxu0 0.0
        %1485 = vmatmul.mubr.f32.gmra.mrb[0].mxu0 %v1271
        %v1486 = vpop.f32.mrb[0].mxu0
        %v1487 = vadd.f32 0.0, %v1486
        %v1488 = vpop.f32.mrb[0].mxu0
        %1489 = vmatprep.mubr.f32.mxu0 0.0
        %1490 = vmatmul.mubr.f32.gmra.mrb[0].mxu0 %v1274
        %v1491 = vpop.f32.mrb[0].mxu0
        %v1492 = vadd.f32 0.0, %v1491
        %v1493 = vpop.f32.mrb[0].mxu0
        %1494 = vmatprep.mubr.f32.mxu0 0.0
        %1495 = vmatmul.mubr.f32.gmra.mrb[0].mxu0 %v1277
        %v1496 = vpop.f32.mrb[0].mxu0
        %v1497 = vadd.f32 0.0, %v1496
        %v1498 = vpop.f32.mrb[0].mxu0
        %1499 = vmatprep.mubr.f32.mxu0 0.0
        %1500 = vmatmul.mubr.f32.gmra.mrb[0].mxu0 %v1280
        %v1501 = vpop.f32.mrb[0].mxu0
        %v1502 = vadd.f32 0.0, %v1501
        %v1503 = vpop.f32.mrb[0].mxu0
        %1504 = vmatprep.mubr.f32.mxu0 0.0
        %1505 = vmatmul.mubr.f32.gmra.mrb[0].mxu0 %v1283
        %v1506 = vpop.f32.mrb[0].mxu0
        %v1507 = vadd.f32 0.0, %v1506
        %v1508 = vpop.f32.mrb[0].mxu0
        %1509 = vdwg.mxu0
        %v1510 = vlaneseq
        %v1511 = vshrl.u32 %v1510, 7
        %v1512 = vsub.s32 0, %v1511
        %v1513 = vrot.slane %v1035, %v1512
        %vm1514 = vcmp.eq.s32.totalorder %v1117, %v1513
        %vm1515 = vcmp.eq.s32.totalorder %v1118, %v1513
        %vm1516 = vcmp.eq.s32.totalorder %v1119, %v1513
        %vm1517 = vcmp.eq.s32.totalorder %v1120, %v1513
        %vm1518 = vcmp.eq.s32.totalorder %v1121, %v1513
        %vm1519 = vcmp.eq.s32.totalorder %v1122, %v1513
        %vm1520 = vcmp.eq.s32.totalorder %v1123, %v1513
        %vm1521 = vcmp.eq.s32.totalorder %v1124, %v1513
        %vm1522 = vcmp.eq.s32.totalorder %v1125, %v1513
        %vm1523 = vcmp.eq.s32.totalorder %v1126, %v1513
        %vm1524 = vcmp.eq.s32.totalorder %v1127, %v1513
        %vm1525 = vcmp.eq.s32.totalorder %v1128, %v1513
        %vm1526 = vcmp.eq.s32.totalorder %v1129, %v1513
        %vm1527 = vcmp.eq.s32.totalorder %v1130, %v1513
        %vm1528 = vcmp.eq.s32.totalorder %v1131, %v1513
        %vm1529 = vcmp.eq.s32.totalorder %v1132, %v1513
        %vm1530 = vcmp.eq.s32.totalorder %v1133, %v1513
        %vm1531 = vcmp.eq.s32.totalorder %v1134, %v1513
        %vm1532 = vcmp.eq.s32.totalorder %v1135, %v1513
        %vm1533 = vcmp.eq.s32.totalorder %v1136, %v1513
        %vm1534 = vcmp.eq.s32.totalorder %v1137, %v1513
        %vm1535 = vcmp.eq.s32.totalorder %v1138, %v1513
        %vm1536 = vcmp.eq.s32.totalorder %v1139, %v1513
        %vm1537 = vcmp.eq.s32.totalorder %v1140, %v1513
        %vm1538 = vcmp.eq.s32.totalorder %v1141, %v1513
        %vm1539 = vcmp.eq.s32.totalorder %v1142, %v1513
        %vm1540 = vcmp.eq.s32.totalorder %v1143, %v1513
        %vm1541 = vcmp.eq.s32.totalorder %v1144, %v1513
        %vm1542 = vcmp.eq.s32.totalorder %v1145, %v1513
        %vm1543 = vcmp.eq.s32.totalorder %v1146, %v1513
        %vm1544 = vcmp.eq.s32.totalorder %v1147, %v1513
        %vm1545 = vcmp.eq.s32.totalorder %v1148, %v1513
        %v1546 = vsel %vm1514, %v1352, 0.0
        %v1547 = vsel %vm1515, %v1357, 0.0
        %v1548 = vsel %vm1516, %v1362, 0.0
        %v1549 = vsel %vm1517, %v1367, 0.0
        %v1550 = vsel %vm1518, %v1372, 0.0
        %v1551 = vsel %vm1519, %v1377, 0.0
        %v1552 = vsel %vm1520, %v1382, 0.0
        %v1553 = vsel %vm1521, %v1387, 0.0
        %v1554 = vsel %vm1522, %v1392, 0.0
        %v1555 = vsel %vm1523, %v1397, 0.0
        %v1556 = vsel %vm1524, %v1402, 0.0
        %v1557 = vsel %vm1525, %v1407, 0.0
        %v1558 = vsel %vm1526, %v1412, 0.0
        %v1559 = vsel %vm1527, %v1417, 0.0
        %v1560 = vsel %vm1528, %v1422, 0.0
        %v1561 = vsel %vm1529, %v1427, 0.0
        %v1562 = vsel %vm1530, %v1432, 0.0
        %v1563 = vsel %vm1531, %v1437, 0.0
        %v1564 = vsel %vm1532, %v1442, 0.0
        %v1565 = vsel %vm1533, %v1447, 0.0
        %v1566 = vsel %vm1534, %v1452, 0.0
        %v1567 = vsel %vm1535, %v1457, 0.0
        %v1568 = vsel %vm1536, %v1462, 0.0
        %v1569 = vsel %vm1537, %v1467, 0.0
        %v1570 = vsel %vm1538, %v1472, 0.0
        %v1571 = vsel %vm1539, %v1477, 0.0
        %v1572 = vsel %vm1540, %v1482, 0.0
        %v1573 = vsel %vm1541, %v1487, 0.0
        %v1574 = vsel %vm1542, %v1492, 0.0
        %v1575 = vsel %vm1543, %v1497, 0.0
        %v1576 = vsel %vm1544, %v1502, 0.0
        %v1577 = vsel %vm1545, %v1507, 0.0
        %v1578 = vadd.f32 %v1546, %v1547
        %v1579 = vadd.f32 %v1578, %v1548
        %v1580 = vadd.f32 %v1579, %v1549
        %v1581 = vadd.f32 %v1580, %v1550
        %v1582 = vadd.f32 %v1581, %v1551
        %v1583 = vadd.f32 %v1582, %v1552
        %v1584 = vadd.f32 %v1583, %v1553
        %v1585 = vadd.f32 %v1584, %v1554
        %v1586 = vadd.f32 %v1585, %v1555
        %v1587 = vadd.f32 %v1586, %v1556
        %v1588 = vadd.f32 %v1587, %v1557
        %v1589 = vadd.f32 %v1588, %v1558
        %v1590 = vadd.f32 %v1589, %v1559
        %v1591 = vadd.f32 %v1590, %v1560
        %v1592 = vadd.f32 %v1591, %v1561
        %v1593 = vadd.f32 %v1592, %v1562
        %v1594 = vadd.f32 %v1593, %v1563
        %v1595 = vadd.f32 %v1594, %v1564
        %v1596 = vadd.f32 %v1595, %v1565
        %v1597 = vadd.f32 %v1596, %v1566
        %v1598 = vadd.f32 %v1597, %v1567
        %v1599 = vadd.f32 %v1598, %v1568
        %v1600 = vadd.f32 %v1599, %v1569
        %v1601 = vadd.f32 %v1600, %v1570
        %v1602 = vadd.f32 %v1601, %v1571
        %v1603 = vadd.f32 %v1602, %v1572
        %v1604 = vadd.f32 %v1603, %v1573
        %v1605 = vadd.f32 %v1604, %v1574
        %v1606 = vadd.f32 %v1605, %v1575
        %v1607 = vadd.f32 %v1606, %v1576
        %v1608 = vadd.f32 %v1607, %v1577
        %v1609 = vrot.slane %v1608, 4
        %v1610 = vadd.f32 %v1608, %v1609
        %v1611 = vrot.slane %v1610, 2
        %v1612 = vadd.f32 %v1610, %v1611
        %v1613 = vrot.slane %v1612, 1
        %v1614 = vadd.f32 %v1612, %v1613
        %v1615 = vmul.f32 %v1108, %v1614
        %v1616 = vadd.f32 %v1615, 0.0
        %v1617 = vlaneseq
        %v1618 = vshrl.u32 %v1617, 7
        %v1619 = vsub.s32 1, %v1618
        %v1620 = vrot.slane %v1003, %v1619
        %vm1621 = vcmp.eq.s32.totalorder %v1117, %v1620
        %v1622 = vsel %vm1621, 1, 0
        %v1623 = vcvt.s32.f32 %v1622
        %s1624 = scalar_lea.vmem %s11, 256
        %v1625 = vld [vmem:[%s1624] sm:$0xff]
        %v1626 = vld [vmem:[%s1624 + $0x8] sm:$0xff]
        %v1627 = vld [vmem:[%s1624 + $0x10] sm:$0xff]
        %v1628 = vld [vmem:[%s1624 + $0x18] sm:$0xff]
        %v1629 = vld [vmem:[%s1624 + $0x20] sm:$0xff]
        %v1630 = vld [vmem:[%s1624 + $0x28] sm:$0xff]
        %v1631 = vld [vmem:[%s1624 + $0x30] sm:$0xff]
        %v1632 = vld [vmem:[%s1624 + $0x38] sm:$0xff]
        %v1633 = vld [vmem:[%s1624 + $0x40] sm:$0xff]
        %v1634 = vld [vmem:[%s1624 + $0x48] sm:$0xff]
        %v1635 = vld [vmem:[%s1624 + $0x50] sm:$0xff]
        %v1636 = vld [vmem:[%s1624 + $0x58] sm:$0xff]
        %v1637 = vld [vmem:[%s1624 + $0x60] sm:$0xff]
        %v1638 = vld [vmem:[%s1624 + $0x68] sm:$0xff]
        %v1639 = vld [vmem:[%s1624 + $0x70] sm:$0xff]
        %v1640 = vld [vmem:[%s1624 + $0x78] sm:$0xff]
        %v1641 = vld [vmem:[%s1624 + $0x80] sm:$0xff]
        %v1642 = vld [vmem:[%s1624 + $0x88] sm:$0xff]
        %v1643 = vld [vmem:[%s1624 + $0x90] sm:$0xff]
        %v1644 = vld [vmem:[%s1624 + $0x98] sm:$0xff]
        %v1645 = vld [vmem:[%s1624 + $0xa0] sm:$0xff]
        %v1646 = vld [vmem:[%s1624 + $0xa8] sm:$0xff]
        %v1647 = vld [vmem:[%s1624 + $0xb0] sm:$0xff]
        %v1648 = vld [vmem:[%s1624 + $0xb8] sm:$0xff]
        %v1649 = vld [vmem:[%s1624 + $0xc0] sm:$0xff]
        %v1650 = vld [vmem:[%s1624 + $0xc8] sm:$0xff]
        %v1651 = vld [vmem:[%s1624 + $0xd0] sm:$0xff]
        %v1652 = vld [vmem:[%s1624 + $0xd8] sm:$0xff]
        %v1653 = vld [vmem:[%s1624 + $0xe0] sm:$0xff]
        %v1654 = vld [vmem:[%s1624 + $0xe8] sm:$0xff]
        %v1655 = vld [vmem:[%s1624 + $0xf0] sm:$0xff]
        %v1656 = vld [vmem:[%s1624 + $0xf8] sm:$0xff]
        %v1658 = vsel %vm1188, %v1625, 0
        %v1661 = vsel %vm1188, %v1626, 0
        %v1664 = vsel %vm1188, %v1627, 0
        %v1667 = vsel %vm1188, %v1628, 0
        %v1670 = vsel %vm1188, %v1629, 0
        %v1673 = vsel %vm1188, %v1630, 0
        %v1676 = vsel %vm1188, %v1631, 0
        %v1679 = vsel %vm1188, %v1632, 0
        %v1682 = vsel %vm1188, %v1633, 0
        %v1685 = vsel %vm1188, %v1634, 0
        %v1688 = vsel %vm1188, %v1635, 0
        %v1691 = vsel %vm1188, %v1636, 0
        %v1694 = vsel %vm1188, %v1637, 0
        %v1697 = vsel %vm1188, %v1638, 0
        %v1700 = vsel %vm1188, %v1639, 0
        %v1703 = vsel %vm1188, %v1640, 0
        %v1706 = vsel %vm1188, %v1641, 0
        %v1709 = vsel %vm1188, %v1642, 0
        %v1712 = vsel %vm1188, %v1643, 0
        %v1715 = vsel %vm1188, %v1644, 0
        %v1718 = vsel %vm1188, %v1645, 0
        %v1721 = vsel %vm1188, %v1646, 0
        %v1724 = vsel %vm1188, %v1647, 0
        %v1727 = vsel %vm1188, %v1648, 0
        %v1730 = vsel %vm1188, %v1649, 0
        %v1733 = vsel %vm1188, %v1650, 0
        %v1736 = vsel %vm1188, %v1651, 0
        %v1739 = vsel %vm1188, %v1652, 0
        %v1742 = vsel %vm1188, %v1653, 0
        %v1745 = vsel %vm1188, %v1654, 0
        %v1748 = vsel %vm1188, %v1655, 0
        %v1751 = vsel %vm1188, %v1656, 0
        %1753 = vmatprep.subr.mxu0 0.0
        %1754 = vmatpush1.msra.mxu0 %v1623
        %1755 = vmatprep.subr.mxu0 0.0
        %1756 = vmatpush1.msra.mxu0 0.0
        %1757 = vmatprep.subr.mxu0 0.0
        %1758 = vmatpush1.msra.mxu0 0.0
        %1759 = vmatprep.subr.mxu0 0.0
        %1760 = vmatpush1.msra.mxu0 0.0
        %1761 = vmatprep.subr.mxu0 0.0
        %1762 = vmatpush1.msra.mxu0 0.0
        %1763 = vmatprep.subr.mxu0 0.0
        %1764 = vmatpush1.msra.mxu0 0.0
        %1765 = vmatprep.subr.mxu0 0.0
        %1766 = vmatpush1.msra.mxu0 0.0
        %1767 = vmatprep.subr.mxu0 0.0
        %1768 = vmatpush1.msra.mxu0 0.0
        %1769 = vmatprep.subr.mxu0 0.0
        %1770 = vmatpush1.msra.mxu0 0.0
        %1771 = vmatprep.subr.mxu0 0.0
        %1772 = vmatpush1.msra.mxu0 0.0
        %1773 = vmatprep.subr.mxu0 0.0
        %1774 = vmatpush1.msra.mxu0 0.0
        %1775 = vmatprep.subr.mxu0 0.0
        %1776 = vmatpush1.msra.mxu0 0.0
        %1777 = vmatprep.subr.mxu0 0.0
        %1778 = vmatpush1.msra.mxu0 0.0
        %1779 = vmatprep.subr.mxu0 0.0
        %1780 = vmatpush1.msra.mxu0 0.0
        %1781 = vmatprep.subr.mxu0 0.0
        %1782 = vmatpush1.msra.mxu0 0.0
        %1783 = vmatprep.subr.mxu0 0.0
        %1784 = vmatpush1.msra.mxu0 0.0
        %1785 = vmatprep.subr.mxu0 0.0
        %1786 = vmatpush1.msra.mxu0 0.0
        %1787 = vmatprep.subr.mxu0 0.0
        %1788 = vmatpush1.msra.mxu0 0.0
        %1789 = vmatprep.subr.mxu0 0.0
        %1790 = vmatpush1.msra.mxu0 0.0
        %1791 = vmatprep.subr.mxu0 0.0
        %1792 = vmatpush1.msra.mxu0 0.0
        %1793 = vmatprep.subr.mxu0 0.0
        %1794 = vmatpush1.msra.mxu0 0.0
        %1795 = vmatprep.subr.mxu0 0.0
        %1796 = vmatpush1.msra.mxu0 0.0
        %1797 = vmatprep.subr.mxu0 0.0
        %1798 = vmatpush1.msra.mxu0 0.0
        %1799 = vmatprep.subr.mxu0 0.0
        %1800 = vmatpush1.msra.mxu0 0.0
        %1801 = vmatprep.subr.mxu0 0.0
        %1802 = vmatpush1.msra.mxu0 0.0
        %1803 = vmatprep.subr.mxu0 0.0
        %1804 = vmatpush1.msra.mxu0 0.0
        %1805 = vmatprep.subr.mxu0 0.0
        %1806 = vmatpush1.msra.mxu0 0.0
        %1807 = vmatprep.subr.mxu0 0.0
        %1808 = vmatpush1.msra.mxu0 0.0
        %1809 = vmatprep.subr.mxu0 0.0
        %1810 = vmatpush1.msra.mxu0 0.0
        %1811 = vmatprep.subr.mxu0 0.0
        %1812 = vmatpush1.msra.mxu0 0.0
        %1813 = vmatprep.subr.mxu0 0.0
        %1814 = vmatpush1.msra.mxu0 0.0
        %1815 = vmatprep.subr.mxu0 0.0
        %1816 = vmatpush1.msra.mxu0 0.0
        %1817 = vmatprep.mubr.f32.mxu0 0.0
        %1818 = vmatmul.mubr.f32.gmra.mrb[0].mxu0 %v1658
        %v1819 = vpop.f32.mrb[0].mxu0
        %v1820 = vadd.f32 0.0, %v1819
        %v1821 = vpop.f32.mrb[0].mxu0
        %1822 = vmatprep.mubr.f32.mxu0 0.0
        %1823 = vmatmul.mubr.f32.gmra.mrb[0].mxu0 %v1661
        %v1824 = vpop.f32.mrb[0].mxu0
        %v1825 = vadd.f32 0.0, %v1824
        %v1826 = vpop.f32.mrb[0].mxu0
        %1827 = vmatprep.mubr.f32.mxu0 0.0
        %1828 = vmatmul.mubr.f32.gmra.mrb[0].mxu0 %v1664
        %v1829 = vpop.f32.mrb[0].mxu0
        %v1830 = vadd.f32 0.0, %v1829
        %v1831 = vpop.f32.mrb[0].mxu0
        %1832 = vmatprep.mubr.f32.mxu0 0.0
        %1833 = vmatmul.mubr.f32.gmra.mrb[0].mxu0 %v1667
        %v1834 = vpop.f32.mrb[0].mxu0
        %v1835 = vadd.f32 0.0, %v1834
        %v1836 = vpop.f32.mrb[0].mxu0
        %1837 = vmatprep.mubr.f32.mxu0 0.0
        %1838 = vmatmul.mubr.f32.gmra.mrb[0].mxu0 %v1670
        %v1839 = vpop.f32.mrb[0].mxu0
        %v1840 = vadd.f32 0.0, %v1839
        %v1841 = vpop.f32.mrb[0].mxu0
        %1842 = vmatprep.mubr.f32.mxu0 0.0
        %1843 = vmatmul.mubr.f32.gmra.mrb[0].mxu0 %v1673
        %v1844 = vpop.f32.mrb[0].mxu0
        %v1845 = vadd.f32 0.0, %v1844
        %v1846 = vpop.f32.mrb[0].mxu0
        %1847 = vmatprep.mubr.f32.mxu0 0.0
        %1848 = vmatmul.mubr.f32.gmra.mrb[0].mxu0 %v1676
        %v1849 = vpop.f32.mrb[0].mxu0
        %v1850 = vadd.f32 0.0, %v1849
        %v1851 = vpop.f32.mrb[0].mxu0
        %1852 = vmatprep.mubr.f32.mxu0 0.0
        %1853 = vmatmul.mubr.f32.gmra.mrb[0].mxu0 %v1679
        %v1854 = vpop.f32.mrb[0].mxu0
        %v1855 = vadd.f32 0.0, %v1854
        %v1856 = vpop.f32.mrb[0].mxu0
        %1857 = vmatprep.mubr.f32.mxu0 0.0
        %1858 = vmatmul.mubr.f32.gmra.mrb[0].mxu0 %v1682
        %v1859 = vpop.f32.mrb[0].mxu0
        %v1860 = vadd.f32 0.0, %v1859
        %v1861 = vpop.f32.mrb[0].mxu0
        %1862 = vmatprep.mubr.f32.mxu0 0.0
        %1863 = vmatmul.mubr.f32.gmra.mrb[0].mxu0 %v1685
        %v1864 = vpop.f32.mrb[0].mxu0
        %v1865 = vadd.f32 0.0, %v1864
        %v1866 = vpop.f32.mrb[0].mxu0
        %1867 = vmatprep.mubr.f32.mxu0 0.0
        %1868 = vmatmul.mubr.f32.gmra.mrb[0].mxu0 %v1688
        %v1869 = vpop.f32.mrb[0].mxu0
        %v1870 = vadd.f32 0.0, %v1869
        %v1871 = vpop.f32.mrb[0].mxu0
        %1872 = vmatprep.mubr.f32.mxu0 0.0
        %1873 = vmatmul.mubr.f32.gmra.mrb[0].mxu0 %v1691
        %v1874 = vpop.f32.mrb[0].mxu0
        %v1875 = vadd.f32 0.0, %v1874
        %v1876 = vpop.f32.mrb[0].mxu0
        %1877 = vmatprep.mubr.f32.mxu0 0.0
        %1878 = vmatmul.mubr.f32.gmra.mrb[0].mxu0 %v1694
        %v1879 = vpop.f32.mrb[0].mxu0
        %v1880 = vadd.f32 0.0, %v1879
        %v1881 = vpop.f32.mrb[0].mxu0
        %1882 = vmatprep.mubr.f32.mxu0 0.0
        %1883 = vmatmul.mubr.f32.gmra.mrb[0].mxu0 %v1697
        %v1884 = vpop.f32.mrb[0].mxu0
        %v1885 = vadd.f32 0.0, %v1884
        %v1886 = vpop.f32.mrb[0].mxu0
        %1887 = vmatprep.mubr.f32.mxu0 0.0
        %1888 = vmatmul.mubr.f32.gmra.mrb[0].mxu0 %v1700
        %v1889 = vpop.f32.mrb[0].mxu0
        %v1890 = vadd.f32 0.0, %v1889
        %v1891 = vpop.f32.mrb[0].mxu0
        %1892 = vmatprep.mubr.f32.mxu0 0.0
        %1893 = vmatmul.mubr.f32.gmra.mrb[0].mxu0 %v1703
        %v1894 = vpop.f32.mrb[0].mxu0
        %v1895 = vadd.f32 0.0, %v1894
        %v1896 = vpop.f32.mrb[0].mxu0
        %1897 = vmatprep.mubr.f32.mxu0 0.0
        %1898 = vmatmul.mubr.f32.gmra.mrb[0].mxu0 %v1706
        %v1899 = vpop.f32.mrb[0].mxu0
        %v1900 = vadd.f32 0.0, %v1899
        %v1901 = vpop.f32.mrb[0].mxu0
        %1902 = vmatprep.mubr.f32.mxu0 0.0
        %1903 = vmatmul.mubr.f32.gmra.mrb[0].mxu0 %v1709
        %v1904 = vpop.f32.mrb[0].mxu0
        %v1905 = vadd.f32 0.0, %v1904
        %v1906 = vpop.f32.mrb[0].mxu0
        %1907 = vmatprep.mubr.f32.mxu0 0.0
        %1908 = vmatmul.mubr.f32.gmra.mrb[0].mxu0 %v1712
        %v1909 = vpop.f32.mrb[0].mxu0
        %v1910 = vadd.f32 0.0, %v1909
        %v1911 = vpop.f32.mrb[0].mxu0
        %1912 = vmatprep.mubr.f32.mxu0 0.0
        %1913 = vmatmul.mubr.f32.gmra.mrb[0].mxu0 %v1715
        %v1914 = vpop.f32.mrb[0].mxu0
        %v1915 = vadd.f32 0.0, %v1914
        %v1916 = vpop.f32.mrb[0].mxu0
        %1917 = vmatprep.mubr.f32.mxu0 0.0
        %1918 = vmatmul.mubr.f32.gmra.mrb[0].mxu0 %v1718
        %v1919 = vpop.f32.mrb[0].mxu0
        %v1920 = vadd.f32 0.0, %v1919
        %v1921 = vpop.f32.mrb[0].mxu0
        %1922 = vmatprep.mubr.f32.mxu0 0.0
        %1923 = vmatmul.mubr.f32.gmra.mrb[0].mxu0 %v1721
        %v1924 = vpop.f32.mrb[0].mxu0
        %v1925 = vadd.f32 0.0, %v1924
        %v1926 = vpop.f32.mrb[0].mxu0
        %1927 = vmatprep.mubr.f32.mxu0 0.0
        %1928 = vmatmul.mubr.f32.gmra.mrb[0].mxu0 %v1724
        %v1929 = vpop.f32.mrb[0].mxu0
        %v1930 = vadd.f32 0.0, %v1929
        %v1931 = vpop.f32.mrb[0].mxu0
        %1932 = vmatprep.mubr.f32.mxu0 0.0
        %1933 = vmatmul.mubr.f32.gmra.mrb[0].mxu0 %v1727
        %v1934 = vpop.f32.mrb[0].mxu0
        %v1935 = vadd.f32 0.0, %v1934
        %v1936 = vpop.f32.mrb[0].mxu0
        %1937 = vmatprep.mubr.f32.mxu0 0.0
        %1938 = vmatmul.mubr.f32.gmra.mrb[0].mxu0 %v1730
        %v1939 = vpop.f32.mrb[0].mxu0
        %v1940 = vadd.f32 0.0, %v1939
        %v1941 = vpop.f32.mrb[0].mxu0
        %1942 = vmatprep.mubr.f32.mxu0 0.0
        %1943 = vmatmul.mubr.f32.gmra.mrb[0].mxu0 %v1733
        %v1944 = vpop.f32.mrb[0].mxu0
        %v1945 = vadd.f32 0.0, %v1944
        %v1946 = vpop.f32.mrb[0].mxu0
        %1947 = vmatprep.mubr.f32.mxu0 0.0
        %1948 = vmatmul.mubr.f32.gmra.mrb[0].mxu0 %v1736
        %v1949 = vpop.f32.mrb[0].mxu0
        %v1950 = vadd.f32 0.0, %v1949
        %v1951 = vpop.f32.mrb[0].mxu0
        %1952 = vmatprep.mubr.f32.mxu0 0.0
        %1953 = vmatmul.mubr.f32.gmra.mrb[0].mxu0 %v1739
        %v1954 = vpop.f32.mrb[0].mxu0
        %v1955 = vadd.f32 0.0, %v1954
        %v1956 = vpop.f32.mrb[0].mxu0
        %1957 = vmatprep.mubr.f32.mxu0 0.0
        %1958 = vmatmul.mubr.f32.gmra.mrb[0].mxu0 %v1742
        %v1959 = vpop.f32.mrb[0].mxu0
        %v1960 = vadd.f32 0.0, %v1959
        %v1961 = vpop.f32.mrb[0].mxu0
        %1962 = vmatprep.mubr.f32.mxu0 0.0
        %1963 = vmatmul.mubr.f32.gmra.mrb[0].mxu0 %v1745
        %v1964 = vpop.f32.mrb[0].mxu0
        %v1965 = vadd.f32 0.0, %v1964
        %v1966 = vpop.f32.mrb[0].mxu0
        %1967 = vmatprep.mubr.f32.mxu0 0.0
        %1968 = vmatmul.mubr.f32.gmra.mrb[0].mxu0 %v1748
        %v1969 = vpop.f32.mrb[0].mxu0
        %v1970 = vadd.f32 0.0, %v1969
        %v1971 = vpop.f32.mrb[0].mxu0
        %1972 = vmatprep.mubr.f32.mxu0 0.0
        %1973 = vmatmul.mubr.f32.gmra.mrb[0].mxu0 %v1751
        %v1974 = vpop.f32.mrb[0].mxu0
        %v1975 = vadd.f32 0.0, %v1974
        %v1976 = vpop.f32.mrb[0].mxu0
        %1977 = vdwg.mxu0
        %v1978 = vlaneseq
        %v1979 = vshrl.u32 %v1978, 7
        %v1980 = vsub.s32 1, %v1979
        %v1981 = vrot.slane %v1035, %v1980
        %vm1982 = vcmp.eq.s32.totalorder %v1117, %v1981
        %vm1983 = vcmp.eq.s32.totalorder %v1118, %v1981
        %vm1984 = vcmp.eq.s32.totalorder %v1119, %v1981
        %vm1985 = vcmp.eq.s32.totalorder %v1120, %v1981
        %vm1986 = vcmp.eq.s32.totalorder %v1121, %v1981
        %vm1987 = vcmp.eq.s32.totalorder %v1122, %v1981
        %vm1988 = vcmp.eq.s32.totalorder %v1123, %v1981
        %vm1989 = vcmp.eq.s32.totalorder %v1124, %v1981
        %vm1990 = vcmp.eq.s32.totalorder %v1125, %v1981
        %vm1991 = vcmp.eq.s32.totalorder %v1126, %v1981
        %vm1992 = vcmp.eq.s32.totalorder %v1127, %v1981
        %vm1993 = vcmp.eq.s32.totalorder %v1128, %v1981
        %vm1994 = vcmp.eq.s32.totalorder %v1129, %v1981
        %vm1995 = vcmp.eq.s32.totalorder %v1130, %v1981
        %vm1996 = vcmp.eq.s32.totalorder %v1131, %v1981
        %vm1997 = vcmp.eq.s32.totalorder %v1132, %v1981
        %vm1998 = vcmp.eq.s32.totalorder %v1133, %v1981
        %vm1999 = vcmp.eq.s32.totalorder %v1134, %v1981
        %vm2000 = vcmp.eq.s32.totalorder %v1135, %v1981
        %vm2001 = vcmp.eq.s32.totalorder %v1136, %v1981
        %vm2002 = vcmp.eq.s32.totalorder %v1137, %v1981
        %vm2003 = vcmp.eq.s32.totalorder %v1138, %v1981
        %vm2004 = vcmp.eq.s32.totalorder %v1139, %v1981
        %vm2005 = vcmp.eq.s32.totalorder %v1140, %v1981
        %vm2006 = vcmp.eq.s32.totalorder %v1141, %v1981
        %vm2007 = vcmp.eq.s32.totalorder %v1142, %v1981
        %vm2008 = vcmp.eq.s32.totalorder %v1143, %v1981
        %vm2009 = vcmp.eq.s32.totalorder %v1144, %v1981
        %vm2010 = vcmp.eq.s32.totalorder %v1145, %v1981
        %vm2011 = vcmp.eq.s32.totalorder %v1146, %v1981
        %vm2012 = vcmp.eq.s32.totalorder %v1147, %v1981
        %vm2013 = vcmp.eq.s32.totalorder %v1148, %v1981
        %v2014 = vsel %vm1982, %v1820, 0.0
        %v2015 = vsel %vm1983, %v1825, 0.0
        %v2016 = vsel %vm1984, %v1830, 0.0
        %v2017 = vsel %vm1985, %v1835, 0.0
        %v2018 = vsel %vm1986, %v1840, 0.0
        %v2019 = vsel %vm1987, %v1845, 0.0
        %v2020 = vsel %vm1988, %v1850, 0.0
        %v2021 = vsel %vm1989, %v1855, 0.0
        %v2022 = vsel %vm1990, %v1860, 0.0
        %v2023 = vsel %vm1991, %v1865, 0.0
        %v2024 = vsel %vm1992, %v1870, 0.0
        %v2025 = vsel %vm1993, %v1875, 0.0
        %v2026 = vsel %vm1994, %v1880, 0.0
        %v2027 = vsel %vm1995, %v1885, 0.0
        %v2028 = vsel %vm1996, %v1890, 0.0
        %v2029 = vsel %vm1997, %v1895, 0.0
        %v2030 = vsel %vm1998, %v1900, 0.0
        %v2031 = vsel %vm1999, %v1905, 0.0
        %v2032 = vsel %vm2000, %v1910, 0.0
        %v2033 = vsel %vm2001, %v1915, 0.0
        %v2034 = vsel %vm2002, %v1920, 0.0
        %v2035 = vsel %vm2003, %v1925, 0.0
        %v2036 = vsel %vm2004, %v1930, 0.0
        %v2037 = vsel %vm2005, %v1935, 0.0
        %v2038 = vsel %vm2006, %v1940, 0.0
        %v2039 = vsel %vm2007, %v1945, 0.0
        %v2040 = vsel %vm2008, %v1950, 0.0
        %v2041 = vsel %vm2009, %v1955, 0.0
        %v2042 = vsel %vm2010, %v1960, 0.0
        %v2043 = vsel %vm2011, %v1965, 0.0
        %v2044 = vsel %vm2012, %v1970, 0.0
        %v2045 = vsel %vm2013, %v1975, 0.0
        %v2046 = vadd.f32 %v2014, %v2015
        %v2047 = vadd.f32 %v2046, %v2016
        %v2048 = vadd.f32 %v2047, %v2017
        %v2049 = vadd.f32 %v2048, %v2018
        %v2050 = vadd.f32 %v2049, %v2019
        %v2051 = vadd.f32 %v2050, %v2020
        %v2052 = vadd.f32 %v2051, %v2021
        %v2053 = vadd.f32 %v2052, %v2022
        %v2054 = vadd.f32 %v2053, %v2023
        %v2055 = vadd.f32 %v2054, %v2024
        %v2056 = vadd.f32 %v2055, %v2025
        %v2057 = vadd.f32 %v2056, %v2026
        %v2058 = vadd.f32 %v2057, %v2027
        %v2059 = vadd.f32 %v2058, %v2028
        %v2060 = vadd.f32 %v2059, %v2029
        %v2061 = vadd.f32 %v2060, %v2030
        %v2062 = vadd.f32 %v2061, %v2031
        %v2063 = vadd.f32 %v2062, %v2032
        %v2064 = vadd.f32 %v2063, %v2033
        %v2065 = vadd.f32 %v2064, %v2034
        %v2066 = vadd.f32 %v2065, %v2035
        %v2067 = vadd.f32 %v2066, %v2036
        %v2068 = vadd.f32 %v2067, %v2037
        %v2069 = vadd.f32 %v2068, %v2038
        %v2070 = vadd.f32 %v2069, %v2039
        %v2071 = vadd.f32 %v2070, %v2040
        %v2072 = vadd.f32 %v2071, %v2041
        %v2073 = vadd.f32 %v2072, %v2042
        %v2074 = vadd.f32 %v2073, %v2043
        %v2075 = vadd.f32 %v2074, %v2044
        %v2076 = vadd.f32 %v2075, %v2045
        %v2077 = vrot.slane %v2076, 4
        %v2078 = vadd.f32 %v2076, %v2077
        %v2079 = vrot.slane %v2078, 2
        %v2080 = vadd.f32 %v2078, %v2079
        %v2081 = vrot.slane %v2080, 1
        %v2082 = vadd.f32 %v2080, %v2081
        %v2083 = vmul.f32 %v1108, %v2082
        %v2085 = vrot.slane %v2083, 1
        %v2087 = vadd.f32 %v1616, %v2085
        %v2088 = vlaneseq
        %v2089 = vshrl.u32 %v2088, 7
        %v2090 = vsub.s32 2, %v2089
        %v2091 = vrot.slane %v1003, %v2090
        %vm2092 = vcmp.eq.s32.totalorder %v1117, %v2091
        %v2093 = vsel %vm2092, 1, 0
        %v2094 = vcvt.s32.f32 %v2093
        %s2095 = scalar_lea.vmem %s11, 512
        %v2096 = vld [vmem:[%s2095] sm:$0xff]
        %v2097 = vld [vmem:[%s2095 + $0x8] sm:$0xff]
        %v2098 = vld [vmem:[%s2095 + $0x10] sm:$0xff]
        %v2099 = vld [vmem:[%s2095 + $0x18] sm:$0xff]
        %v2100 = vld [vmem:[%s2095 + $0x20] sm:$0xff]
        %v2101 = vld [vmem:[%s2095 + $0x28] sm:$0xff]
        %v2102 = vld [vmem:[%s2095 + $0x30] sm:$0xff]
        %v2103 = vld [vmem:[%s2095 + $0x38] sm:$0xff]
        %v2104 = vld [vmem:[%s2095 + $0x40] sm:$0xff]
        %v2105 = vld [vmem:[%s2095 + $0x48] sm:$0xff]
        %v2106 = vld [vmem:[%s2095 + $0x50] sm:$0xff]
        %v2107 = vld [vmem:[%s2095 + $0x58] sm:$0xff]
        %v2108 = vld [vmem:[%s2095 + $0x60] sm:$0xff]
        %v2109 = vld [vmem:[%s2095 + $0x68] sm:$0xff]
        %v2110 = vld [vmem:[%s2095 + $0x70] sm:$0xff]
        %v2111 = vld [vmem:[%s2095 + $0x78] sm:$0xff]
        %v2112 = vld [vmem:[%s2095 + $0x80] sm:$0xff]
        %v2113 = vld [vmem:[%s2095 + $0x88] sm:$0xff]
        %v2114 = vld [vmem:[%s2095 + $0x90] sm:$0xff]
        %v2115 = vld [vmem:[%s2095 + $0x98] sm:$0xff]
        %v2116 = vld [vmem:[%s2095 + $0xa0] sm:$0xff]
        %v2117 = vld [vmem:[%s2095 + $0xa8] sm:$0xff]
        %v2118 = vld [vmem:[%s2095 + $0xb0] sm:$0xff]
        %v2119 = vld [vmem:[%s2095 + $0xb8] sm:$0xff]
        %v2120 = vld [vmem:[%s2095 + $0xc0] sm:$0xff]
        %v2121 = vld [vmem:[%s2095 + $0xc8] sm:$0xff]
        %v2122 = vld [vmem:[%s2095 + $0xd0] sm:$0xff]
        %v2123 = vld [vmem:[%s2095 + $0xd8] sm:$0xff]
        %v2124 = vld [vmem:[%s2095 + $0xe0] sm:$0xff]
        %v2125 = vld [vmem:[%s2095 + $0xe8] sm:$0xff]
        %v2126 = vld [vmem:[%s2095 + $0xf0] sm:$0xff]
        %v2127 = vld [vmem:[%s2095 + $0xf8] sm:$0xff]
        %v2129 = vsel %vm1188, %v2096, 0
        %v2132 = vsel %vm1188, %v2097, 0
        %v2135 = vsel %vm1188, %v2098, 0
        %v2138 = vsel %vm1188, %v2099, 0
        %v2141 = vsel %vm1188, %v2100, 0
        %v2144 = vsel %vm1188, %v2101, 0
        %v2147 = vsel %vm1188, %v2102, 0
        %v2150 = vsel %vm1188, %v2103, 0
        %v2153 = vsel %vm1188, %v2104, 0
        %v2156 = vsel %vm1188, %v2105, 0
        %v2159 = vsel %vm1188, %v2106, 0
        %v2162 = vsel %vm1188, %v2107, 0
        %v2165 = vsel %vm1188, %v2108, 0
        %v2168 = vsel %vm1188, %v2109, 0
        %v2171 = vsel %vm1188, %v2110, 0
        %v2174 = vsel %vm1188, %v2111, 0
        %v2177 = vsel %vm1188, %v2112, 0
        %v2180 = vsel %vm1188, %v2113, 0
        %v2183 = vsel %vm1188, %v2114, 0
        %v2186 = vsel %vm1188, %v2115, 0
        %v2189 = vsel %vm1188, %v2116, 0
        %v2192 = vsel %vm1188, %v2117, 0
        %v2195 = vsel %vm1188, %v2118, 0
        %v2198 = vsel %vm1188, %v2119, 0
        %v2201 = vsel %vm1188, %v2120, 0
        %v2204 = vsel %vm1188, %v2121, 0
        %v2207 = vsel %vm1188, %v2122, 0
        %v2210 = vsel %vm1188, %v2123, 0
        %v2213 = vsel %vm1188, %v2124, 0
        %v2216 = vsel %vm1188, %v2125, 0
        %v2219 = vsel %vm1188, %v2126, 0
        %v2222 = vsel %vm1188, %v2127, 0
        %2224 = vmatprep.subr.mxu0 0.0
        %2225 = vmatpush1.msra.mxu0 %v2094
        %2226 = vmatprep.subr.mxu0 0.0
        %2227 = vmatpush1.msra.mxu0 0.0
        %2228 = vmatprep.subr.mxu0 0.0
        %2229 = vmatpush1.msra.mxu0 0.0
        %2230 = vmatprep.subr.mxu0 0.0
        %2231 = vmatpush1.msra.mxu0 0.0
        %2232 = vmatprep.subr.mxu0 0.0
        %2233 = vmatpush1.msra.mxu0 0.0
        %2234 = vmatprep.subr.mxu0 0.0
        %2235 = vmatpush1.msra.mxu0 0.0
        %2236 = vmatprep.subr.mxu0 0.0
        %2237 = vmatpush1.msra.mxu0 0.0
        %2238 = vmatprep.subr.mxu0 0.0
        %2239 = vmatpush1.msra.mxu0 0.0
        %2240 = vmatprep.subr.mxu0 0.0
        %2241 = vmatpush1.msra.mxu0 0.0
        %2242 = vmatprep.subr.mxu0 0.0
        %2243 = vmatpush1.msra.mxu0 0.0
        %2244 = vmatprep.subr.mxu0 0.0
        %2245 = vmatpush1.msra.mxu0 0.0
        %2246 = vmatprep.subr.mxu0 0.0
        %2247 = vmatpush1.msra.mxu0 0.0
        %2248 = vmatprep.subr.mxu0 0.0
        %2249 = vmatpush1.msra.mxu0 0.0
        %2250 = vmatprep.subr.mxu0 0.0
        %2251 = vmatpush1.msra.mxu0 0.0
        %2252 = vmatprep.subr.mxu0 0.0
        %2253 = vmatpush1.msra.mxu0 0.0
        %2254 = vmatprep.subr.mxu0 0.0
        %2255 = vmatpush1.msra.mxu0 0.0
        %2256 = vmatprep.subr.mxu0 0.0
        %2257 = vmatpush1.msra.mxu0 0.0
        %2258 = vmatprep.subr.mxu0 0.0
        %2259 = vmatpush1.msra.mxu0 0.0
        %2260 = vmatprep.subr.mxu0 0.0
        %2261 = vmatpush1.msra.mxu0 0.0
        %2262 = vmatprep.subr.mxu0 0.0
        %2263 = vmatpush1.msra.mxu0 0.0
        %2264 = vmatprep.subr.mxu0 0.0
        %2265 = vmatpush1.msra.mxu0 0.0
        %2266 = vmatprep.subr.mxu0 0.0
        %2267 = vmatpush1.msra.mxu0 0.0
        %2268 = vmatprep.subr.mxu0 0.0
        %2269 = vmatpush1.msra.mxu0 0.0
        %2270 = vmatprep.subr.mxu0 0.0
        %2271 = vmatpush1.msra.mxu0 0.0
        %2272 = vmatprep.subr.mxu0 0.0
        %2273 = vmatpush1.msra.mxu0 0.0
        %2274 = vmatprep.subr.mxu0 0.0
        %2275 = vmatpush1.msra.mxu0 0.0
        %2276 = vmatprep.subr.mxu0 0.0
        %2277 = vmatpush1.msra.mxu0 0.0
        %2278 = vmatprep.subr.mxu0 0.0
        %2279 = vmatpush1.msra.mxu0 0.0
        %2280 = vmatprep.subr.mxu0 0.0
        %2281 = vmatpush1.msra.mxu0 0.0
        %2282 = vmatprep.subr.mxu0 0.0
        %2283 = vmatpush1.msra.mxu0 0.0
        %2284 = vmatprep.subr.mxu0 0.0
        %2285 = vmatpush1.msra.mxu0 0.0
        %2286 = vmatprep.subr.mxu0 0.0
        %2287 = vmatpush1.msra.mxu0 0.0
        %2288 = vmatprep.mubr.f32.mxu0 0.0
        %2289 = vmatmul.mubr.f32.gmra.mrb[0].mxu0 %v2129
        %v2290 = vpop.f32.mrb[0].mxu0
        %v2291 = vadd.f32 0.0, %v2290
        %v2292 = vpop.f32.mrb[0].mxu0
        %2293 = vmatprep.mubr.f32.mxu0 0.0
        %2294 = vmatmul.mubr.f32.gmra.mrb[0].mxu0 %v2132
        %v2295 = vpop.f32.mrb[0].mxu0
        %v2296 = vadd.f32 0.0, %v2295
        %v2297 = vpop.f32.mrb[0].mxu0
        %2298 = vmatprep.mubr.f32.mxu0 0.0
        %2299 = vmatmul.mubr.f32.gmra.mrb[0].mxu0 %v2135
        %v2300 = vpop.f32.mrb[0].mxu0
        %v2301 = vadd.f32 0.0, %v2300
        %v2302 = vpop.f32.mrb[0].mxu0
        %2303 = vmatprep.mubr.f32.mxu0 0.0
        %2304 = vmatmul.mubr.f32.gmra.mrb[0].mxu0 %v2138
        %v2305 = vpop.f32.mrb[0].mxu0
        %v2306 = vadd.f32 0.0, %v2305
        %v2307 = vpop.f32.mrb[0].mxu0
        %2308 = vmatprep.mubr.f32.mxu0 0.0
        %2309 = vmatmul.mubr.f32.gmra.mrb[0].mxu0 %v2141
        %v2310 = vpop.f32.mrb[0].mxu0
        %v2311 = vadd.f32 0.0, %v2310
        %v2312 = vpop.f32.mrb[0].mxu0
        %2313 = vmatprep.mubr.f32.mxu0 0.0
        %2314 = vmatmul.mubr.f32.gmra.mrb[0].mxu0 %v2144
        %v2315 = vpop.f32.mrb[0].mxu0
        %v2316 = vadd.f32 0.0, %v2315
        %v2317 = vpop.f32.mrb[0].mxu0
        %2318 = vmatprep.mubr.f32.mxu0 0.0
        %2319 = vmatmul.mubr.f32.gmra.mrb[0].mxu0 %v2147
        %v2320 = vpop.f32.mrb[0].mxu0
        %v2321 = vadd.f32 0.0, %v2320
        %v2322 = vpop.f32.mrb[0].mxu0
        %2323 = vmatprep.mubr.f32.mxu0 0.0
        %2324 = vmatmul.mubr.f32.gmra.mrb[0].mxu0 %v2150
        %v2325 = vpop.f32.mrb[0].mxu0
        %v2326 = vadd.f32 0.0, %v2325
        %v2327 = vpop.f32.mrb[0].mxu0
        %2328 = vmatprep.mubr.f32.mxu0 0.0
        %2329 = vmatmul.mubr.f32.gmra.mrb[0].mxu0 %v2153
        %v2330 = vpop.f32.mrb[0].mxu0
        %v2331 = vadd.f32 0.0, %v2330
        %v2332 = vpop.f32.mrb[0].mxu0
        %2333 = vmatprep.mubr.f32.mxu0 0.0
        %2334 = vmatmul.mubr.f32.gmra.mrb[0].mxu0 %v2156
        %v2335 = vpop.f32.mrb[0].mxu0
        %v2336 = vadd.f32 0.0, %v2335
        %v2337 = vpop.f32.mrb[0].mxu0
        %2338 = vmatprep.mubr.f32.mxu0 0.0
        %2339 = vmatmul.mubr.f32.gmra.mrb[0].mxu0 %v2159
        %v2340 = vpop.f32.mrb[0].mxu0
        %v2341 = vadd.f32 0.0, %v2340
        %v2342 = vpop.f32.mrb[0].mxu0
        %2343 = vmatprep.mubr.f32.mxu0 0.0
        %2344 = vmatmul.mubr.f32.gmra.mrb[0].mxu0 %v2162
        %v2345 = vpop.f32.mrb[0].mxu0
        %v2346 = vadd.f32 0.0, %v2345
        %v2347 = vpop.f32.mrb[0].mxu0
        %2348 = vmatprep.mubr.f32.mxu0 0.0
        %2349 = vmatmul.mubr.f32.gmra.mrb[0].mxu0 %v2165
        %v2350 = vpop.f32.mrb[0].mxu0
        %v2351 = vadd.f32 0.0, %v2350
        %v2352 = vpop.f32.mrb[0].mxu0
        %2353 = vmatprep.mubr.f32.mxu0 0.0
        %2354 = vmatmul.mubr.f32.gmra.mrb[0].mxu0 %v2168
        %v2355 = vpop.f32.mrb[0].mxu0
        %v2356 = vadd.f32 0.0, %v2355
        %v2357 = vpop.f32.mrb[0].mxu0
        %2358 = vmatprep.mubr.f32.mxu0 0.0
        %2359 = vmatmul.mubr.f32.gmra.mrb[0].mxu0 %v2171
        %v2360 = vpop.f32.mrb[0].mxu0
        %v2361 = vadd.f32 0.0, %v2360
        %v2362 = vpop.f32.mrb[0].mxu0
        %2363 = vmatprep.mubr.f32.mxu0 0.0
        %2364 = vmatmul.mubr.f32.gmra.mrb[0].mxu0 %v2174
        %v2365 = vpop.f32.mrb[0].mxu0
        %v2366 = vadd.f32 0.0, %v2365
        %v2367 = vpop.f32.mrb[0].mxu0
        %2368 = vmatprep.mubr.f32.mxu0 0.0
        %2369 = vmatmul.mubr.f32.gmra.mrb[0].mxu0 %v2177
        %v2370 = vpop.f32.mrb[0].mxu0
        %v2371 = vadd.f32 0.0, %v2370
        %v2372 = vpop.f32.mrb[0].mxu0
        %2373 = vmatprep.mubr.f32.mxu0 0.0
        %2374 = vmatmul.mubr.f32.gmra.mrb[0].mxu0 %v2180
        %v2375 = vpop.f32.mrb[0].mxu0
        %v2376 = vadd.f32 0.0, %v2375
        %v2377 = vpop.f32.mrb[0].mxu0
        %2378 = vmatprep.mubr.f32.mxu0 0.0
        %2379 = vmatmul.mubr.f32.gmra.mrb[0].mxu0 %v2183
        %v2380 = vpop.f32.mrb[0].mxu0
        %v2381 = vadd.f32 0.0, %v2380
        %v2382 = vpop.f32.mrb[0].mxu0
        %2383 = vmatprep.mubr.f32.mxu0 0.0
        %2384 = vmatmul.mubr.f32.gmra.mrb[0].mxu0 %v2186
        %v2385 = vpop.f32.mrb[0].mxu0
        %v2386 = vadd.f32 0.0, %v2385
        %v2387 = vpop.f32.mrb[0].mxu0
        %2388 = vmatprep.mubr.f32.mxu0 0.0
        %2389 = vmatmul.mubr.f32.gmra.mrb[0].mxu0 %v2189
        %v2390 = vpop.f32.mrb[0].mxu0
        %v2391 = vadd.f32 0.0, %v2390
        %v2392 = vpop.f32.mrb[0].mxu0
        %2393 = vmatprep.mubr.f32.mxu0 0.0
        %2394 = vmatmul.mubr.f32.gmra.mrb[0].mxu0 %v2192
        %v2395 = vpop.f32.mrb[0].mxu0
        %v2396 = vadd.f32 0.0, %v2395
        %v2397 = vpop.f32.mrb[0].mxu0
        %2398 = vmatprep.mubr.f32.mxu0 0.0
        %2399 = vmatmul.mubr.f32.gmra.mrb[0].mxu0 %v2195
        %v2400 = vpop.f32.mrb[0].mxu0
        %v2401 = vadd.f32 0.0, %v2400
        %v2402 = vpop.f32.mrb[0].mxu0
        %2403 = vmatprep.mubr.f32.mxu0 0.0
        %2404 = vmatmul.mubr.f32.gmra.mrb[0].mxu0 %v2198
        %v2405 = vpop.f32.mrb[0].mxu0
        %v2406 = vadd.f32 0.0, %v2405
        %v2407 = vpop.f32.mrb[0].mxu0
        %2408 = vmatprep.mubr.f32.mxu0 0.0
        %2409 = vmatmul.mubr.f32.gmra.mrb[0].mxu0 %v2201
        %v2410 = vpop.f32.mrb[0].mxu0
        %v2411 = vadd.f32 0.0, %v2410
        %v2412 = vpop.f32.mrb[0].mxu0
        %2413 = vmatprep.mubr.f32.mxu0 0.0
        %2414 = vmatmul.mubr.f32.gmra.mrb[0].mxu0 %v2204
        %v2415 = vpop.f32.mrb[0].mxu0
        %v2416 = vadd.f32 0.0, %v2415
        %v2417 = vpop.f32.mrb[0].mxu0
        %2418 = vmatprep.mubr.f32.mxu0 0.0
        %2419 = vmatmul.mubr.f32.gmra.mrb[0].mxu0 %v2207
        %v2420 = vpop.f32.mrb[0].mxu0
        %v2421 = vadd.f32 0.0, %v2420
        %v2422 = vpop.f32.mrb[0].mxu0
        %2423 = vmatprep.mubr.f32.mxu0 0.0
        %2424 = vmatmul.mubr.f32.gmra.mrb[0].mxu0 %v2210
        %v2425 = vpop.f32.mrb[0].mxu0
        %v2426 = vadd.f32 0.0, %v2425
        %v2427 = vpop.f32.mrb[0].mxu0
        %2428 = vmatprep.mubr.f32.mxu0 0.0
        %2429 = vmatmul.mubr.f32.gmra.mrb[0].mxu0 %v2213
        %v2430 = vpop.f32.mrb[0].mxu0
        %v2431 = vadd.f32 0.0, %v2430
        %v2432 = vpop.f32.mrb[0].mxu0
        %2433 = vmatprep.mubr.f32.mxu0 0.0
        %2434 = vmatmul.mubr.f32.gmra.mrb[0].mxu0 %v2216
        %v2435 = vpop.f32.mrb[0].mxu0
        %v2436 = vadd.f32 0.0, %v2435
        %v2437 = vpop.f32.mrb[0].mxu0
        %2438 = vmatprep.mubr.f32.mxu0 0.0
        %2439 = vmatmul.mubr.f32.gmra.mrb[0].mxu0 %v2219
        %v2440 = vpop.f32.mrb[0].mxu0
        %v2441 = vadd.f32 0.0, %v2440
        %v2442 = vpop.f32.mrb[0].mxu0
        %2443 = vmatprep.mubr.f32.mxu0 0.0
        %2444 = vmatmul.mubr.f32.gmra.mrb[0].mxu0 %v2222
        %v2445 = vpop.f32.mrb[0].mxu0
        %v2446 = vadd.f32 0.0, %v2445
        %v2447 = vpop.f32.mrb[0].mxu0
        %2448 = vdwg.mxu0
        %v2449 = vlaneseq
        %v2450 = vshrl.u32 %v2449, 7
        %v2451 = vsub.s32 2, %v2450
        %v2452 = vrot.slane %v1035, %v2451
        %vm2453 = vcmp.eq.s32.totalorder %v1117, %v2452
        %vm2454 = vcmp.eq.s32.totalorder %v1118, %v2452
        %vm2455 = vcmp.eq.s32.totalorder %v1119, %v2452
        %vm2456 = vcmp.eq.s32.totalorder %v1120, %v2452
        %vm2457 = vcmp.eq.s32.totalorder %v1121, %v2452
        %vm2458 = vcmp.eq.s32.totalorder %v1122, %v2452
        %vm2459 = vcmp.eq.s32.totalorder %v1123, %v2452
        %vm2460 = vcmp.eq.s32.totalorder %v1124, %v2452
        %vm2461 = vcmp.eq.s32.totalorder %v1125, %v2452
        %vm2462 = vcmp.eq.s32.totalorder %v1126, %v2452
        %vm2463 = vcmp.eq.s32.totalorder %v1127, %v2452
        %vm2464 = vcmp.eq.s32.totalorder %v1128, %v2452
        %vm2465 = vcmp.eq.s32.totalorder %v1129, %v2452
        %vm2466 = vcmp.eq.s32.totalorder %v1130, %v2452
        %vm2467 = vcmp.eq.s32.totalorder %v1131, %v2452
        %vm2468 = vcmp.eq.s32.totalorder %v1132, %v2452
        %vm2469 = vcmp.eq.s32.totalorder %v1133, %v2452
        %vm2470 = vcmp.eq.s32.totalorder %v1134, %v2452
        %vm2471 = vcmp.eq.s32.totalorder %v1135, %v2452
        %vm2472 = vcmp.eq.s32.totalorder %v1136, %v2452
        %vm2473 = vcmp.eq.s32.totalorder %v1137, %v2452
        %vm2474 = vcmp.eq.s32.totalorder %v1138, %v2452
        %vm2475 = vcmp.eq.s32.totalorder %v1139, %v2452
        %vm2476 = vcmp.eq.s32.totalorder %v1140, %v2452
        %vm2477 = vcmp.eq.s32.totalorder %v1141, %v2452
        %vm2478 = vcmp.eq.s32.totalorder %v1142, %v2452
        %vm2479 = vcmp.eq.s32.totalorder %v1143, %v2452
        %vm2480 = vcmp.eq.s32.totalorder %v1144, %v2452
        %vm2481 = vcmp.eq.s32.totalorder %v1145, %v2452
        %vm2482 = vcmp.eq.s32.totalorder %v1146, %v2452
        %vm2483 = vcmp.eq.s32.totalorder %v1147, %v2452
        %vm2484 = vcmp.eq.s32.totalorder %v1148, %v2452
        %v2485 = vsel %vm2453, %v2291, 0.0
        %v2486 = vsel %vm2454, %v2296, 0.0
        %v2487 = vsel %vm2455, %v2301, 0.0
        %v2488 = vsel %vm2456, %v2306, 0.0
        %v2489 = vsel %vm2457, %v2311, 0.0
        %v2490 = vsel %vm2458, %v2316, 0.0
        %v2491 = vsel %vm2459, %v2321, 0.0
        %v2492 = vsel %vm2460, %v2326, 0.0
        %v2493 = vsel %vm2461, %v2331, 0.0
        %v2494 = vsel %vm2462, %v2336, 0.0
        %v2495 = vsel %vm2463, %v2341, 0.0
        %v2496 = vsel %vm2464, %v2346, 0.0
        %v2497 = vsel %vm2465, %v2351, 0.0
        %v2498 = vsel %vm2466, %v2356, 0.0
        %v2499 = vsel %vm2467, %v2361, 0.0
        %v2500 = vsel %vm2468, %v2366, 0.0
        %v2501 = vsel %vm2469, %v2371, 0.0
        %v2502 = vsel %vm2470, %v2376, 0.0
        %v2503 = vsel %vm2471, %v2381, 0.0
        %v2504 = vsel %vm2472, %v2386, 0.0
        %v2505 = vsel %vm2473, %v2391, 0.0
        %v2506 = vsel %vm2474, %v2396, 0.0
        %v2507 = vsel %vm2475, %v2401, 0.0
        %v2508 = vsel %vm2476, %v2406, 0.0
        %v2509 = vsel %vm2477, %v2411, 0.0
        %v2510 = vsel %vm2478, %v2416, 0.0
        %v2511 = vsel %vm2479, %v2421, 0.0
        %v2512 = vsel %vm2480, %v2426, 0.0
        %v2513 = vsel %vm2481, %v2431, 0.0
        %v2514 = vsel %vm2482, %v2436, 0.0
        %v2515 = vsel %vm2483, %v2441, 0.0
        %v2516 = vsel %vm2484, %v2446, 0.0
        %v2517 = vadd.f32 %v2485, %v2486
        %v2518 = vadd.f32 %v2517, %v2487
        %v2519 = vadd.f32 %v2518, %v2488
        %v2520 = vadd.f32 %v2519, %v2489
        %v2521 = vadd.f32 %v2520, %v2490
        %v2522 = vadd.f32 %v2521, %v2491
        %v2523 = vadd.f32 %v2522, %v2492
        %v2524 = vadd.f32 %v2523, %v2493
        %v2525 = vadd.f32 %v2524, %v2494
        %v2526 = vadd.f32 %v2525, %v2495
        %v2527 = vadd.f32 %v2526, %v2496
        %v2528 = vadd.f32 %v2527, %v2497
        %v2529 = vadd.f32 %v2528, %v2498
        %v2530 = vadd.f32 %v2529, %v2499
        %v2531 = vadd.f32 %v2530, %v2500
        %v2532 = vadd.f32 %v2531, %v2501
        %v2533 = vadd.f32 %v2532, %v2502
        %v2534 = vadd.f32 %v2533, %v2503
        %v2535 = vadd.f32 %v2534, %v2504
        %v2536 = vadd.f32 %v2535, %v2505
        %v2537 = vadd.f32 %v2536, %v2506
        %v2538 = vadd.f32 %v2537, %v2507
        %v2539 = vadd.f32 %v2538, %v2508
        %v2540 = vadd.f32 %v2539, %v2509
        %v2541 = vadd.f32 %v2540, %v2510
        %v2542 = vadd.f32 %v2541, %v2511
        %v2543 = vadd.f32 %v2542, %v2512
        %v2544 = vadd.f32 %v2543, %v2513
        %v2545 = vadd.f32 %v2544, %v2514
        %v2546 = vadd.f32 %v2545, %v2515
        %v2547 = vadd.f32 %v2546, %v2516
        %v2548 = vrot.slane %v2547, 4
        %v2549 = vadd.f32 %v2547, %v2548
        %v2550 = vrot.slane %v2549, 2
        %v2551 = vadd.f32 %v2549, %v2550
        %v2552 = vrot.slane %v2551, 1
        %v2553 = vadd.f32 %v2551, %v2552
        %v2554 = vmul.f32 %v1108, %v2553
        %v2556 = vrot.slane %v2554, 2
        %v2558 = vadd.f32 %v2087, %v2556
        %v2559 = vlaneseq
        %v2560 = vshrl.u32 %v2559, 7
        %v2561 = vsub.s32 3, %v2560
        %v2562 = vrot.slane %v1003, %v2561
        %vm2563 = vcmp.eq.s32.totalorder %v1117, %v2562
        %v2564 = vsel %vm2563, 1, 0
        %v2565 = vcvt.s32.f32 %v2564
        %s2566 = scalar_lea.vmem %s11, 768
        %v2567 = vld [vmem:[%s2566] sm:$0xff]
        %v2568 = vld [vmem:[%s2566 + $0x8] sm:$0xff]
        %v2569 = vld [vmem:[%s2566 + $0x10] sm:$0xff]
        %v2570 = vld [vmem:[%s2566 + $0x18] sm:$0xff]
        %v2571 = vld [vmem:[%s2566 + $0x20] sm:$0xff]
        %v2572 = vld [vmem:[%s2566 + $0x28] sm:$0xff]
        %v2573 = vld [vmem:[%s2566 + $0x30] sm:$0xff]
        %v2574 = vld [vmem:[%s2566 + $0x38] sm:$0xff]
        %v2575 = vld [vmem:[%s2566 + $0x40] sm:$0xff]
        %v2576 = vld [vmem:[%s2566 + $0x48] sm:$0xff]
        %v2577 = vld [vmem:[%s2566 + $0x50] sm:$0xff]
        %v2578 = vld [vmem:[%s2566 + $0x58] sm:$0xff]
        %v2579 = vld [vmem:[%s2566 + $0x60] sm:$0xff]
        %v2580 = vld [vmem:[%s2566 + $0x68] sm:$0xff]
        %v2581 = vld [vmem:[%s2566 + $0x70] sm:$0xff]
        %v2582 = vld [vmem:[%s2566 + $0x78] sm:$0xff]
        %v2583 = vld [vmem:[%s2566 + $0x80] sm:$0xff]
        %v2584 = vld [vmem:[%s2566 + $0x88] sm:$0xff]
        %v2585 = vld [vmem:[%s2566 + $0x90] sm:$0xff]
        %v2586 = vld [vmem:[%s2566 + $0x98] sm:$0xff]
        %v2587 = vld [vmem:[%s2566 + $0xa0] sm:$0xff]
        %v2588 = vld [vmem:[%s2566 + $0xa8] sm:$0xff]
        %v2589 = vld [vmem:[%s2566 + $0xb0] sm:$0xff]
        %v2590 = vld [vmem:[%s2566 + $0xb8] sm:$0xff]
        %v2591 = vld [vmem:[%s2566 + $0xc0] sm:$0xff]
        %v2592 = vld [vmem:[%s2566 + $0xc8] sm:$0xff]
        %v2593 = vld [vmem:[%s2566 + $0xd0] sm:$0xff]
        %v2594 = vld [vmem:[%s2566 + $0xd8] sm:$0xff]
        %v2595 = vld [vmem:[%s2566 + $0xe0] sm:$0xff]
        %v2596 = vld [vmem:[%s2566 + $0xe8] sm:$0xff]
        %v2597 = vld [vmem:[%s2566 + $0xf0] sm:$0xff]
        %v2598 = vld [vmem:[%s2566 + $0xf8] sm:$0xff]
        %v2600 = vsel %vm1188, %v2567, 0
        %v2603 = vsel %vm1188, %v2568, 0
        %v2606 = vsel %vm1188, %v2569, 0
        %v2609 = vsel %vm1188, %v2570, 0
        %v2612 = vsel %vm1188, %v2571, 0
        %v2615 = vsel %vm1188, %v2572, 0
        %v2618 = vsel %vm1188, %v2573, 0
        %v2621 = vsel %vm1188, %v2574, 0
        %v2624 = vsel %vm1188, %v2575, 0
        %v2627 = vsel %vm1188, %v2576, 0
        %v2630 = vsel %vm1188, %v2577, 0
        %v2633 = vsel %vm1188, %v2578, 0
        %v2636 = vsel %vm1188, %v2579, 0
        %v2639 = vsel %vm1188, %v2580, 0
        %v2642 = vsel %vm1188, %v2581, 0
        %v2645 = vsel %vm1188, %v2582, 0
        %v2648 = vsel %vm1188, %v2583, 0
        %v2651 = vsel %vm1188, %v2584, 0
        %v2654 = vsel %vm1188, %v2585, 0
        %v2657 = vsel %vm1188, %v2586, 0
        %v2660 = vsel %vm1188, %v2587, 0
        %v2663 = vsel %vm1188, %v2588, 0
        %v2666 = vsel %vm1188, %v2589, 0
        %v2669 = vsel %vm1188, %v2590, 0
        %v2672 = vsel %vm1188, %v2591, 0
        %v2675 = vsel %vm1188, %v2592, 0
        %v2678 = vsel %vm1188, %v2593, 0
        %v2681 = vsel %vm1188, %v2594, 0
        %v2684 = vsel %vm1188, %v2595, 0
        %v2687 = vsel %vm1188, %v2596, 0
        %v2690 = vsel %vm1188, %v2597, 0
        %v2693 = vsel %vm1188, %v2598, 0
        %2695 = vmatprep.subr.mxu0 0.0
        %2696 = vmatpush1.msra.mxu0 %v2565
        %2697 = vmatprep.subr.mxu0 0.0
        %2698 = vmatpush1.msra.mxu0 0.0
        %2699 = vmatprep.subr.mxu0 0.0
        %2700 = vmatpush1.msra.mxu0 0.0
        %2701 = vmatprep.subr.mxu0 0.0
        %2702 = vmatpush1.msra.mxu0 0.0
        %2703 = vmatprep.subr.mxu0 0.0
        %2704 = vmatpush1.msra.mxu0 0.0
        %2705 = vmatprep.subr.mxu0 0.0
        %2706 = vmatpush1.msra.mxu0 0.0
        %2707 = vmatprep.subr.mxu0 0.0
        %2708 = vmatpush1.msra.mxu0 0.0
        %2709 = vmatprep.subr.mxu0 0.0
        %2710 = vmatpush1.msra.mxu0 0.0
        %2711 = vmatprep.subr.mxu0 0.0
        %2712 = vmatpush1.msra.mxu0 0.0
        %2713 = vmatprep.subr.mxu0 0.0
        %2714 = vmatpush1.msra.mxu0 0.0
        %2715 = vmatprep.subr.mxu0 0.0
        %2716 = vmatpush1.msra.mxu0 0.0
        %2717 = vmatprep.subr.mxu0 0.0
        %2718 = vmatpush1.msra.mxu0 0.0
        %2719 = vmatprep.subr.mxu0 0.0
        %2720 = vmatpush1.msra.mxu0 0.0
        %2721 = vmatprep.subr.mxu0 0.0
        %2722 = vmatpush1.msra.mxu0 0.0
        %2723 = vmatprep.subr.mxu0 0.0
        %2724 = vmatpush1.msra.mxu0 0.0
        %2725 = vmatprep.subr.mxu0 0.0
        %2726 = vmatpush1.msra.mxu0 0.0
        %2727 = vmatprep.subr.mxu0 0.0
        %2728 = vmatpush1.msra.mxu0 0.0
        %2729 = vmatprep.subr.mxu0 0.0
        %2730 = vmatpush1.msra.mxu0 0.0
        %2731 = vmatprep.subr.mxu0 0.0
        %2732 = vmatpush1.msra.mxu0 0.0
        %2733 = vmatprep.subr.mxu0 0.0
        %2734 = vmatpush1.msra.mxu0 0.0
        %2735 = vmatprep.subr.mxu0 0.0
        %2736 = vmatpush1.msra.mxu0 0.0
        %2737 = vmatprep.subr.mxu0 0.0
        %2738 = vmatpush1.msra.mxu0 0.0
        %2739 = vmatprep.subr.mxu0 0.0
        %2740 = vmatpush1.msra.mxu0 0.0
        %2741 = vmatprep.subr.mxu0 0.0
        %2742 = vmatpush1.msra.mxu0 0.0
        %2743 = vmatprep.subr.mxu0 0.0
        %2744 = vmatpush1.msra.mxu0 0.0
        %2745 = vmatprep.subr.mxu0 0.0
        %2746 = vmatpush1.msra.mxu0 0.0
        %2747 = vmatprep.subr.mxu0 0.0
        %2748 = vmatpush1.msra.mxu0 0.0
        %2749 = vmatprep.subr.mxu0 0.0
        %2750 = vmatpush1.msra.mxu0 0.0
        %2751 = vmatprep.subr.mxu0 0.0
        %2752 = vmatpush1.msra.mxu0 0.0
        %2753 = vmatprep.subr.mxu0 0.0
        %2754 = vmatpush1.msra.mxu0 0.0
        %2755 = vmatprep.subr.mxu0 0.0
        %2756 = vmatpush1.msra.mxu0 0.0
        %2757 = vmatprep.subr.mxu0 0.0
        %2758 = vmatpush1.msra.mxu0 0.0
        %2759 = vmatprep.mubr.f32.mxu0 0.0
        %2760 = vmatmul.mubr.f32.gmra.mrb[0].mxu0 %v2600
        %v2761 = vpop.f32.mrb[0].mxu0
        %v2762 = vadd.f32 0.0, %v2761
        %v2763 = vpop.f32.mrb[0].mxu0
        %2764 = vmatprep.mubr.f32.mxu0 0.0
        %2765 = vmatmul.mubr.f32.gmra.mrb[0].mxu0 %v2603
        %v2766 = vpop.f32.mrb[0].mxu0
        %v2767 = vadd.f32 0.0, %v2766
        %v2768 = vpop.f32.mrb[0].mxu0
        %2769 = vmatprep.mubr.f32.mxu0 0.0
        %2770 = vmatmul.mubr.f32.gmra.mrb[0].mxu0 %v2606
        %v2771 = vpop.f32.mrb[0].mxu0
        %v2772 = vadd.f32 0.0, %v2771
        %v2773 = vpop.f32.mrb[0].mxu0
        %2774 = vmatprep.mubr.f32.mxu0 0.0
        %2775 = vmatmul.mubr.f32.gmra.mrb[0].mxu0 %v2609
        %v2776 = vpop.f32.mrb[0].mxu0
        %v2777 = vadd.f32 0.0, %v2776
        %v2778 = vpop.f32.mrb[0].mxu0
        %2779 = vmatprep.mubr.f32.mxu0 0.0
        %2780 = vmatmul.mubr.f32.gmra.mrb[0].mxu0 %v2612
        %v2781 = vpop.f32.mrb[0].mxu0
        %v2782 = vadd.f32 0.0, %v2781
        %v2783 = vpop.f32.mrb[0].mxu0
        %2784 = vmatprep.mubr.f32.mxu0 0.0
        %2785 = vmatmul.mubr.f32.gmra.mrb[0].mxu0 %v2615
        %v2786 = vpop.f32.mrb[0].mxu0
        %v2787 = vadd.f32 0.0, %v2786
        %v2788 = vpop.f32.mrb[0].mxu0
        %2789 = vmatprep.mubr.f32.mxu0 0.0
        %2790 = vmatmul.mubr.f32.gmra.mrb[0].mxu0 %v2618
        %v2791 = vpop.f32.mrb[0].mxu0
        %v2792 = vadd.f32 0.0, %v2791
        %v2793 = vpop.f32.mrb[0].mxu0
        %2794 = vmatprep.mubr.f32.mxu0 0.0
        %2795 = vmatmul.mubr.f32.gmra.mrb[0].mxu0 %v2621
        %v2796 = vpop.f32.mrb[0].mxu0
        %v2797 = vadd.f32 0.0, %v2796
        %v2798 = vpop.f32.mrb[0].mxu0
        %2799 = vmatprep.mubr.f32.mxu0 0.0
        %2800 = vmatmul.mubr.f32.gmra.mrb[0].mxu0 %v2624
        %v2801 = vpop.f32.mrb[0].mxu0
        %v2802 = vadd.f32 0.0, %v2801
        %v2803 = vpop.f32.mrb[0].mxu0
        %2804 = vmatprep.mubr.f32.mxu0 0.0
        %2805 = vmatmul.mubr.f32.gmra.mrb[0].mxu0 %v2627
        %v2806 = vpop.f32.mrb[0].mxu0
        %v2807 = vadd.f32 0.0, %v2806
        %v2808 = vpop.f32.mrb[0].mxu0
        %2809 = vmatprep.mubr.f32.mxu0 0.0
        %2810 = vmatmul.mubr.f32.gmra.mrb[0].mxu0 %v2630
        %v2811 = vpop.f32.mrb[0].mxu0
        %v2812 = vadd.f32 0.0, %v2811
        %v2813 = vpop.f32.mrb[0].mxu0
        %2814 = vmatprep.mubr.f32.mxu0 0.0
        %2815 = vmatmul.mubr.f32.gmra.mrb[0].mxu0 %v2633
        %v2816 = vpop.f32.mrb[0].mxu0
        %v2817 = vadd.f32 0.0, %v2816
        %v2818 = vpop.f32.mrb[0].mxu0
        %2819 = vmatprep.mubr.f32.mxu0 0.0
        %2820 = vmatmul.mubr.f32.gmra.mrb[0].mxu0 %v2636
        %v2821 = vpop.f32.mrb[0].mxu0
        %v2822 = vadd.f32 0.0, %v2821
        %v2823 = vpop.f32.mrb[0].mxu0
        %2824 = vmatprep.mubr.f32.mxu0 0.0
        %2825 = vmatmul.mubr.f32.gmra.mrb[0].mxu0 %v2639
        %v2826 = vpop.f32.mrb[0].mxu0
        %v2827 = vadd.f32 0.0, %v2826
        %v2828 = vpop.f32.mrb[0].mxu0
        %2829 = vmatprep.mubr.f32.mxu0 0.0
        %2830 = vmatmul.mubr.f32.gmra.mrb[0].mxu0 %v2642
        %v2831 = vpop.f32.mrb[0].mxu0
        %v2832 = vadd.f32 0.0, %v2831
        %v2833 = vpop.f32.mrb[0].mxu0
        %2834 = vmatprep.mubr.f32.mxu0 0.0
        %2835 = vmatmul.mubr.f32.gmra.mrb[0].mxu0 %v2645
        %v2836 = vpop.f32.mrb[0].mxu0
        %v2837 = vadd.f32 0.0, %v2836
        %v2838 = vpop.f32.mrb[0].mxu0
        %2839 = vmatprep.mubr.f32.mxu0 0.0
        %2840 = vmatmul.mubr.f32.gmra.mrb[0].mxu0 %v2648
        %v2841 = vpop.f32.mrb[0].mxu0
        %v2842 = vadd.f32 0.0, %v2841
        %v2843 = vpop.f32.mrb[0].mxu0
        %2844 = vmatprep.mubr.f32.mxu0 0.0
        %2845 = vmatmul.mubr.f32.gmra.mrb[0].mxu0 %v2651
        %v2846 = vpop.f32.mrb[0].mxu0
        %v2847 = vadd.f32 0.0, %v2846
        %v2848 = vpop.f32.mrb[0].mxu0
        %2849 = vmatprep.mubr.f32.mxu0 0.0
        %2850 = vmatmul.mubr.f32.gmra.mrb[0].mxu0 %v2654
        %v2851 = vpop.f32.mrb[0].mxu0
        %v2852 = vadd.f32 0.0, %v2851
        %v2853 = vpop.f32.mrb[0].mxu0
        %2854 = vmatprep.mubr.f32.mxu0 0.0
        %2855 = vmatmul.mubr.f32.gmra.mrb[0].mxu0 %v2657
        %v2856 = vpop.f32.mrb[0].mxu0
        %v2857 = vadd.f32 0.0, %v2856
        %v2858 = vpop.f32.mrb[0].mxu0
        %2859 = vmatprep.mubr.f32.mxu0 0.0
        %2860 = vmatmul.mubr.f32.gmra.mrb[0].mxu0 %v2660
        %v2861 = vpop.f32.mrb[0].mxu0
        %v2862 = vadd.f32 0.0, %v2861
        %v2863 = vpop.f32.mrb[0].mxu0
        %2864 = vmatprep.mubr.f32.mxu0 0.0
        %2865 = vmatmul.mubr.f32.gmra.mrb[0].mxu0 %v2663
        %v2866 = vpop.f32.mrb[0].mxu0
        %v2867 = vadd.f32 0.0, %v2866
        %v2868 = vpop.f32.mrb[0].mxu0
        %2869 = vmatprep.mubr.f32.mxu0 0.0
        %2870 = vmatmul.mubr.f32.gmra.mrb[0].mxu0 %v2666
        %v2871 = vpop.f32.mrb[0].mxu0
        %v2872 = vadd.f32 0.0, %v2871
        %v2873 = vpop.f32.mrb[0].mxu0
        %2874 = vmatprep.mubr.f32.mxu0 0.0
        %2875 = vmatmul.mubr.f32.gmra.mrb[0].mxu0 %v2669
        %v2876 = vpop.f32.mrb[0].mxu0
        %v2877 = vadd.f32 0.0, %v2876
        %v2878 = vpop.f32.mrb[0].mxu0
        %2879 = vmatprep.mubr.f32.mxu0 0.0
        %2880 = vmatmul.mubr.f32.gmra.mrb[0].mxu0 %v2672
        %v2881 = vpop.f32.mrb[0].mxu0
        %v2882 = vadd.f32 0.0, %v2881
        %v2883 = vpop.f32.mrb[0].mxu0
        %2884 = vmatprep.mubr.f32.mxu0 0.0
        %2885 = vmatmul.mubr.f32.gmra.mrb[0].mxu0 %v2675
        %v2886 = vpop.f32.mrb[0].mxu0
        %v2887 = vadd.f32 0.0, %v2886
        %v2888 = vpop.f32.mrb[0].mxu0
        %2889 = vmatprep.mubr.f32.mxu0 0.0
        %2890 = vmatmul.mubr.f32.gmra.mrb[0].mxu0 %v2678
        %v2891 = vpop.f32.mrb[0].mxu0
        %v2892 = vadd.f32 0.0, %v2891
        %v2893 = vpop.f32.mrb[0].mxu0
        %2894 = vmatprep.mubr.f32.mxu0 0.0
        %2895 = vmatmul.mubr.f32.gmra.mrb[0].mxu0 %v2681
        %v2896 = vpop.f32.mrb[0].mxu0
        %v2897 = vadd.f32 0.0, %v2896
        %v2898 = vpop.f32.mrb[0].mxu0
        %2899 = vmatprep.mubr.f32.mxu0 0.0
        %2900 = vmatmul.mubr.f32.gmra.mrb[0].mxu0 %v2684
        %v2901 = vpop.f32.mrb[0].mxu0
        %v2902 = vadd.f32 0.0, %v2901
        %v2903 = vpop.f32.mrb[0].mxu0
        %2904 = vmatprep.mubr.f32.mxu0 0.0
        %2905 = vmatmul.mubr.f32.gmra.mrb[0].mxu0 %v2687
        %v2906 = vpop.f32.mrb[0].mxu0
        %v2907 = vadd.f32 0.0, %v2906
        %v2908 = vpop.f32.mrb[0].mxu0
        %2909 = vmatprep.mubr.f32.mxu0 0.0
        %2910 = vmatmul.mubr.f32.gmra.mrb[0].mxu0 %v2690
        %v2911 = vpop.f32.mrb[0].mxu0
        %v2912 = vadd.f32 0.0, %v2911
        %v2913 = vpop.f32.mrb[0].mxu0
        %2914 = vmatprep.mubr.f32.mxu0 0.0
        %2915 = vmatmul.mubr.f32.gmra.mrb[0].mxu0 %v2693
        %v2916 = vpop.f32.mrb[0].mxu0
        %v2917 = vadd.f32 0.0, %v2916
        %v2918 = vpop.f32.mrb[0].mxu0
        %2919 = vdwg.mxu0
        %v2920 = vlaneseq
        %v2921 = vshrl.u32 %v2920, 7
        %v2922 = vsub.s32 3, %v2921
        %v2923 = vrot.slane %v1035, %v2922
        %vm2924 = vcmp.eq.s32.totalorder %v1117, %v2923
        %vm2925 = vcmp.eq.s32.totalorder %v1118, %v2923
        %vm2926 = vcmp.eq.s32.totalorder %v1119, %v2923
        %vm2927 = vcmp.eq.s32.totalorder %v1120, %v2923
        %vm2928 = vcmp.eq.s32.totalorder %v1121, %v2923
        %vm2929 = vcmp.eq.s32.totalorder %v1122, %v2923
        %vm2930 = vcmp.eq.s32.totalorder %v1123, %v2923
        %vm2931 = vcmp.eq.s32.totalorder %v1124, %v2923
        %vm2932 = vcmp.eq.s32.totalorder %v1125, %v2923
        %vm2933 = vcmp.eq.s32.totalorder %v1126, %v2923
        %vm2934 = vcmp.eq.s32.totalorder %v1127, %v2923
        %vm2935 = vcmp.eq.s32.totalorder %v1128, %v2923
        %vm2936 = vcmp.eq.s32.totalorder %v1129, %v2923
        %vm2937 = vcmp.eq.s32.totalorder %v1130, %v2923
        %vm2938 = vcmp.eq.s32.totalorder %v1131, %v2923
        %vm2939 = vcmp.eq.s32.totalorder %v1132, %v2923
        %vm2940 = vcmp.eq.s32.totalorder %v1133, %v2923
        %vm2941 = vcmp.eq.s32.totalorder %v1134, %v2923
        %vm2942 = vcmp.eq.s32.totalorder %v1135, %v2923
        %vm2943 = vcmp.eq.s32.totalorder %v1136, %v2923
        %vm2944 = vcmp.eq.s32.totalorder %v1137, %v2923
        %vm2945 = vcmp.eq.s32.totalorder %v1138, %v2923
        %vm2946 = vcmp.eq.s32.totalorder %v1139, %v2923
        %vm2947 = vcmp.eq.s32.totalorder %v1140, %v2923
        %vm2948 = vcmp.eq.s32.totalorder %v1141, %v2923
        %vm2949 = vcmp.eq.s32.totalorder %v1142, %v2923
        %vm2950 = vcmp.eq.s32.totalorder %v1143, %v2923
        %vm2951 = vcmp.eq.s32.totalorder %v1144, %v2923
        %vm2952 = vcmp.eq.s32.totalorder %v1145, %v2923
        %vm2953 = vcmp.eq.s32.totalorder %v1146, %v2923
        %vm2954 = vcmp.eq.s32.totalorder %v1147, %v2923
        %vm2955 = vcmp.eq.s32.totalorder %v1148, %v2923
        %v2956 = vsel %vm2924, %v2762, 0.0
        %v2957 = vsel %vm2925, %v2767, 0.0
        %v2958 = vsel %vm2926, %v2772, 0.0
        %v2959 = vsel %vm2927, %v2777, 0.0
        %v2960 = vsel %vm2928, %v2782, 0.0
        %v2961 = vsel %vm2929, %v2787, 0.0
        %v2962 = vsel %vm2930, %v2792, 0.0
        %v2963 = vsel %vm2931, %v2797, 0.0
        %v2964 = vsel %vm2932, %v2802, 0.0
        %v2965 = vsel %vm2933, %v2807, 0.0
        %v2966 = vsel %vm2934, %v2812, 0.0
        %v2967 = vsel %vm2935, %v2817, 0.0
        %v2968 = vsel %vm2936, %v2822, 0.0
        %v2969 = vsel %vm2937, %v2827, 0.0
        %v2970 = vsel %vm2938, %v2832, 0.0
        %v2971 = vsel %vm2939, %v2837, 0.0
        %v2972 = vsel %vm2940, %v2842, 0.0
        %v2973 = vsel %vm2941, %v2847, 0.0
        %v2974 = vsel %vm2942, %v2852, 0.0
        %v2975 = vsel %vm2943, %v2857, 0.0
        %v2976 = vsel %vm2944, %v2862, 0.0
        %v2977 = vsel %vm2945, %v2867, 0.0
        %v2978 = vsel %vm2946, %v2872, 0.0
        %v2979 = vsel %vm2947, %v2877, 0.0
        %v2980 = vsel %vm2948, %v2882, 0.0
        %v2981 = vsel %vm2949, %v2887, 0.0
        %v2982 = vsel %vm2950, %v2892, 0.0
        %v2983 = vsel %vm2951, %v2897, 0.0
        %v2984 = vsel %vm2952, %v2902, 0.0
        %v2985 = vsel %vm2953, %v2907, 0.0
        %v2986 = vsel %vm2954, %v2912, 0.0
        %v2987 = vsel %vm2955, %v2917, 0.0
        %v2988 = vadd.f32 %v2956, %v2957
        %v2989 = vadd.f32 %v2988, %v2958
        %v2990 = vadd.f32 %v2989, %v2959
        %v2991 = vadd.f32 %v2990, %v2960
        %v2992 = vadd.f32 %v2991, %v2961
        %v2993 = vadd.f32 %v2992, %v2962
        %v2994 = vadd.f32 %v2993, %v2963
        %v2995 = vadd.f32 %v2994, %v2964
        %v2996 = vadd.f32 %v2995, %v2965
        %v2997 = vadd.f32 %v2996, %v2966
        %v2998 = vadd.f32 %v2997, %v2967
        %v2999 = vadd.f32 %v2998, %v2968
        %v3000 = vadd.f32 %v2999, %v2969
        %v3001 = vadd.f32 %v3000, %v2970
        %v3002 = vadd.f32 %v3001, %v2971
        %v3003 = vadd.f32 %v3002, %v2972
        %v3004 = vadd.f32 %v3003, %v2973
        %v3005 = vadd.f32 %v3004, %v2974
        %v3006 = vadd.f32 %v3005, %v2975
        %v3007 = vadd.f32 %v3006, %v2976
        %v3008 = vadd.f32 %v3007, %v2977
        %v3009 = vadd.f32 %v3008, %v2978
        %v3010 = vadd.f32 %v3009, %v2979
        %v3011 = vadd.f32 %v3010, %v2980
        %v3012 = vadd.f32 %v3011, %v2981
        %v3013 = vadd.f32 %v3012, %v2982
        %v3014 = vadd.f32 %v3013, %v2983
        %v3015 = vadd.f32 %v3014, %v2984
        %v3016 = vadd.f32 %v3015, %v2985
        %v3017 = vadd.f32 %v3016, %v2986
        %v3018 = vadd.f32 %v3017, %v2987
        %v3019 = vrot.slane %v3018, 4
        %v3020 = vadd.f32 %v3018, %v3019
        %v3021 = vrot.slane %v3020, 2
        %v3022 = vadd.f32 %v3020, %v3021
        %v3023 = vrot.slane %v3022, 1
        %v3024 = vadd.f32 %v3022, %v3023
        %v3025 = vmul.f32 %v1108, %v3024
        %v3027 = vrot.slane %v3025, 3
        %v3029 = vadd.f32 %v2558, %v3027
        %v3030 = vlaneseq
        %v3031 = vshrl.u32 %v3030, 7
        %v3032 = vsub.s32 4, %v3031
        %v3033 = vrot.slane %v1003, %v3032
        %vm3034 = vcmp.eq.s32.totalorder %v1117, %v3033
        %v3035 = vsel %vm3034, 1, 0
        %v3036 = vcvt.s32.f32 %v3035
        %s3037 = scalar_lea.vmem %s11, 1024
        %v3038 = vld [vmem:[%s3037] sm:$0xff]
        %v3039 = vld [vmem:[%s3037 + $0x8] sm:$0xff]
        %v3040 = vld [vmem:[%s3037 + $0x10] sm:$0xff]
        %v3041 = vld [vmem:[%s3037 + $0x18] sm:$0xff]
        %v3042 = vld [vmem:[%s3037 + $0x20] sm:$0xff]
        %v3043 = vld [vmem:[%s3037 + $0x28] sm:$0xff]
        %v3044 = vld [vmem:[%s3037 + $0x30] sm:$0xff]
        %v3045 = vld [vmem:[%s3037 + $0x38] sm:$0xff]
        %v3046 = vld [vmem:[%s3037 + $0x40] sm:$0xff]
        %v3047 = vld [vmem:[%s3037 + $0x48] sm:$0xff]
        %v3048 = vld [vmem:[%s3037 + $0x50] sm:$0xff]
        %v3049 = vld [vmem:[%s3037 + $0x58] sm:$0xff]
        %v3050 = vld [vmem:[%s3037 + $0x60] sm:$0xff]
        %v3051 = vld [vmem:[%s3037 + $0x68] sm:$0xff]
        %v3052 = vld [vmem:[%s3037 + $0x70] sm:$0xff]
        %v3053 = vld [vmem:[%s3037 + $0x78] sm:$0xff]
        %v3054 = vld [vmem:[%s3037 + $0x80] sm:$0xff]
        %v3055 = vld [vmem:[%s3037 + $0x88] sm:$0xff]
        %v3056 = vld [vmem:[%s3037 + $0x90] sm:$0xff]
        %v3057 = vld [vmem:[%s3037 + $0x98] sm:$0xff]
        %v3058 = vld [vmem:[%s3037 + $0xa0] sm:$0xff]
        %v3059 = vld [vmem:[%s3037 + $0xa8] sm:$0xff]
        %v3060 = vld [vmem:[%s3037 + $0xb0] sm:$0xff]
        %v3061 = vld [vmem:[%s3037 + $0xb8] sm:$0xff]
        %v3062 = vld [vmem:[%s3037 + $0xc0] sm:$0xff]
        %v3063 = vld [vmem:[%s3037 + $0xc8] sm:$0xff]
        %v3064 = vld [vmem:[%s3037 + $0xd0] sm:$0xff]
        %v3065 = vld [vmem:[%s3037 + $0xd8] sm:$0xff]
        %v3066 = vld [vmem:[%s3037 + $0xe0] sm:$0xff]
        %v3067 = vld [vmem:[%s3037 + $0xe8] sm:$0xff]
        %v3068 = vld [vmem:[%s3037 + $0xf0] sm:$0xff]
        %v3069 = vld [vmem:[%s3037 + $0xf8] sm:$0xff]
        %v3071 = vsel %vm1188, %v3038, 0
        %v3074 = vsel %vm1188, %v3039, 0
        %v3077 = vsel %vm1188, %v3040, 0
        %v3080 = vsel %vm1188, %v3041, 0
        %v3083 = vsel %vm1188, %v3042, 0
        %v3086 = vsel %vm1188, %v3043, 0
        %v3089 = vsel %vm1188, %v3044, 0
        %v3092 = vsel %vm1188, %v3045, 0
        %v3095 = vsel %vm1188, %v3046, 0
        %v3098 = vsel %vm1188, %v3047, 0
        %v3101 = vsel %vm1188, %v3048, 0
        %v3104 = vsel %vm1188, %v3049, 0
        %v3107 = vsel %vm1188, %v3050, 0
        %v3110 = vsel %vm1188, %v3051, 0
        %v3113 = vsel %vm1188, %v3052, 0
        %v3116 = vsel %vm1188, %v3053, 0
        %v3119 = vsel %vm1188, %v3054, 0
        %v3122 = vsel %vm1188, %v3055, 0
        %v3125 = vsel %vm1188, %v3056, 0
        %v3128 = vsel %vm1188, %v3057, 0
        %v3131 = vsel %vm1188, %v3058, 0
        %v3134 = vsel %vm1188, %v3059, 0
        %v3137 = vsel %vm1188, %v3060, 0
        %v3140 = vsel %vm1188, %v3061, 0
        %v3143 = vsel %vm1188, %v3062, 0
        %v3146 = vsel %vm1188, %v3063, 0
        %v3149 = vsel %vm1188, %v3064, 0
        %v3152 = vsel %vm1188, %v3065, 0
        %v3155 = vsel %vm1188, %v3066, 0
        %v3158 = vsel %vm1188, %v3067, 0
        %v3161 = vsel %vm1188, %v3068, 0
        %v3164 = vsel %vm1188, %v3069, 0
        %3166 = vmatprep.subr.mxu0 0.0
        %3167 = vmatpush1.msra.mxu0 %v3036
        %3168 = vmatprep.subr.mxu0 0.0
        %3169 = vmatpush1.msra.mxu0 0.0
        %3170 = vmatprep.subr.mxu0 0.0
        %3171 = vmatpush1.msra.mxu0 0.0
        %3172 = vmatprep.subr.mxu0 0.0
        %3173 = vmatpush1.msra.mxu0 0.0
        %3174 = vmatprep.subr.mxu0 0.0
        %3175 = vmatpush1.msra.mxu0 0.0
        %3176 = vmatprep.subr.mxu0 0.0
        %3177 = vmatpush1.msra.mxu0 0.0
        %3178 = vmatprep.subr.mxu0 0.0
        %3179 = vmatpush1.msra.mxu0 0.0
        %3180 = vmatprep.subr.mxu0 0.0
        %3181 = vmatpush1.msra.mxu0 0.0
        %3182 = vmatprep.subr.mxu0 0.0
        %3183 = vmatpush1.msra.mxu0 0.0
        %3184 = vmatprep.subr.mxu0 0.0
        %3185 = vmatpush1.msra.mxu0 0.0
        %3186 = vmatprep.subr.mxu0 0.0
        %3187 = vmatpush1.msra.mxu0 0.0
        %3188 = vmatprep.subr.mxu0 0.0
        %3189 = vmatpush1.msra.mxu0 0.0
        %3190 = vmatprep.subr.mxu0 0.0
        %3191 = vmatpush1.msra.mxu0 0.0
        %3192 = vmatprep.subr.mxu0 0.0
        %3193 = vmatpush1.msra.mxu0 0.0
        %3194 = vmatprep.subr.mxu0 0.0
        %3195 = vmatpush1.msra.mxu0 0.0
        %3196 = vmatprep.subr.mxu0 0.0
        %3197 = vmatpush1.msra.mxu0 0.0
        %3198 = vmatprep.subr.mxu0 0.0
        %3199 = vmatpush1.msra.mxu0 0.0
        %3200 = vmatprep.subr.mxu0 0.0
        %3201 = vmatpush1.msra.mxu0 0.0
        %3202 = vmatprep.subr.mxu0 0.0
        %3203 = vmatpush1.msra.mxu0 0.0
        %3204 = vmatprep.subr.mxu0 0.0
        %3205 = vmatpush1.msra.mxu0 0.0
        %3206 = vmatprep.subr.mxu0 0.0
        %3207 = vmatpush1.msra.mxu0 0.0
        %3208 = vmatprep.subr.mxu0 0.0
        %3209 = vmatpush1.msra.mxu0 0.0
        %3210 = vmatprep.subr.mxu0 0.0
        %3211 = vmatpush1.msra.mxu0 0.0
        %3212 = vmatprep.subr.mxu0 0.0
        %3213 = vmatpush1.msra.mxu0 0.0
        %3214 = vmatprep.subr.mxu0 0.0
        %3215 = vmatpush1.msra.mxu0 0.0
        %3216 = vmatprep.subr.mxu0 0.0
        %3217 = vmatpush1.msra.mxu0 0.0
        %3218 = vmatprep.subr.mxu0 0.0
        %3219 = vmatpush1.msra.mxu0 0.0
        %3220 = vmatprep.subr.mxu0 0.0
        %3221 = vmatpush1.msra.mxu0 0.0
        %3222 = vmatprep.subr.mxu0 0.0
        %3223 = vmatpush1.msra.mxu0 0.0
        %3224 = vmatprep.subr.mxu0 0.0
        %3225 = vmatpush1.msra.mxu0 0.0
        %3226 = vmatprep.subr.mxu0 0.0
        %3227 = vmatpush1.msra.mxu0 0.0
        %3228 = vmatprep.subr.mxu0 0.0
        %3229 = vmatpush1.msra.mxu0 0.0
        %3230 = vmatprep.mubr.f32.mxu0 0.0
        %3231 = vmatmul.mubr.f32.gmra.mrb[0].mxu0 %v3071
        %v3232 = vpop.f32.mrb[0].mxu0
        %v3233 = vadd.f32 0.0, %v3232
        %v3234 = vpop.f32.mrb[0].mxu0
        %3235 = vmatprep.mubr.f32.mxu0 0.0
        %3236 = vmatmul.mubr.f32.gmra.mrb[0].mxu0 %v3074
        %v3237 = vpop.f32.mrb[0].mxu0
        %v3238 = vadd.f32 0.0, %v3237
        %v3239 = vpop.f32.mrb[0].mxu0
        %3240 = vmatprep.mubr.f32.mxu0 0.0
        %3241 = vmatmul.mubr.f32.gmra.mrb[0].mxu0 %v3077
        %v3242 = vpop.f32.mrb[0].mxu0
        %v3243 = vadd.f32 0.0, %v3242
        %v3244 = vpop.f32.mrb[0].mxu0
        %3245 = vmatprep.mubr.f32.mxu0 0.0
        %3246 = vmatmul.mubr.f32.gmra.mrb[0].mxu0 %v3080
        %v3247 = vpop.f32.mrb[0].mxu0
        %v3248 = vadd.f32 0.0, %v3247
        %v3249 = vpop.f32.mrb[0].mxu0
        %3250 = vmatprep.mubr.f32.mxu0 0.0
        %3251 = vmatmul.mubr.f32.gmra.mrb[0].mxu0 %v3083
        %v3252 = vpop.f32.mrb[0].mxu0
        %v3253 = vadd.f32 0.0, %v3252
        %v3254 = vpop.f32.mrb[0].mxu0
        %3255 = vmatprep.mubr.f32.mxu0 0.0
        %3256 = vmatmul.mubr.f32.gmra.mrb[0].mxu0 %v3086
        %v3257 = vpop.f32.mrb[0].mxu0
        %v3258 = vadd.f32 0.0, %v3257
        %v3259 = vpop.f32.mrb[0].mxu0
        %3260 = vmatprep.mubr.f32.mxu0 0.0
        %3261 = vmatmul.mubr.f32.gmra.mrb[0].mxu0 %v3089
        %v3262 = vpop.f32.mrb[0].mxu0
        %v3263 = vadd.f32 0.0, %v3262
        %v3264 = vpop.f32.mrb[0].mxu0
        %3265 = vmatprep.mubr.f32.mxu0 0.0
        %3266 = vmatmul.mubr.f32.gmra.mrb[0].mxu0 %v3092
        %v3267 = vpop.f32.mrb[0].mxu0
        %v3268 = vadd.f32 0.0, %v3267
        %v3269 = vpop.f32.mrb[0].mxu0
        %3270 = vmatprep.mubr.f32.mxu0 0.0
        %3271 = vmatmul.mubr.f32.gmra.mrb[0].mxu0 %v3095
        %v3272 = vpop.f32.mrb[0].mxu0
        %v3273 = vadd.f32 0.0, %v3272
        %v3274 = vpop.f32.mrb[0].mxu0
        %3275 = vmatprep.mubr.f32.mxu0 0.0
        %3276 = vmatmul.mubr.f32.gmra.mrb[0].mxu0 %v3098
        %v3277 = vpop.f32.mrb[0].mxu0
        %v3278 = vadd.f32 0.0, %v3277
        %v3279 = vpop.f32.mrb[0].mxu0
        %3280 = vmatprep.mubr.f32.mxu0 0.0
        %3281 = vmatmul.mubr.f32.gmra.mrb[0].mxu0 %v3101
        %v3282 = vpop.f32.mrb[0].mxu0
        %v3283 = vadd.f32 0.0, %v3282
        %v3284 = vpop.f32.mrb[0].mxu0
        %3285 = vmatprep.mubr.f32.mxu0 0.0
        %3286 = vmatmul.mubr.f32.gmra.mrb[0].mxu0 %v3104
        %v3287 = vpop.f32.mrb[0].mxu0
        %v3288 = vadd.f32 0.0, %v3287
        %v3289 = vpop.f32.mrb[0].mxu0
        %3290 = vmatprep.mubr.f32.mxu0 0.0
        %3291 = vmatmul.mubr.f32.gmra.mrb[0].mxu0 %v3107
        %v3292 = vpop.f32.mrb[0].mxu0
        %v3293 = vadd.f32 0.0, %v3292
        %v3294 = vpop.f32.mrb[0].mxu0
        %3295 = vmatprep.mubr.f32.mxu0 0.0
        %3296 = vmatmul.mubr.f32.gmra.mrb[0].mxu0 %v3110
        %v3297 = vpop.f32.mrb[0].mxu0
        %v3298 = vadd.f32 0.0, %v3297
        %v3299 = vpop.f32.mrb[0].mxu0
        %3300 = vmatprep.mubr.f32.mxu0 0.0
        %3301 = vmatmul.mubr.f32.gmra.mrb[0].mxu0 %v3113
        %v3302 = vpop.f32.mrb[0].mxu0
        %v3303 = vadd.f32 0.0, %v3302
        %v3304 = vpop.f32.mrb[0].mxu0
        %3305 = vmatprep.mubr.f32.mxu0 0.0
        %3306 = vmatmul.mubr.f32.gmra.mrb[0].mxu0 %v3116
        %v3307 = vpop.f32.mrb[0].mxu0
        %v3308 = vadd.f32 0.0, %v3307
        %v3309 = vpop.f32.mrb[0].mxu0
        %3310 = vmatprep.mubr.f32.mxu0 0.0
        %3311 = vmatmul.mubr.f32.gmra.mrb[0].mxu0 %v3119
        %v3312 = vpop.f32.mrb[0].mxu0
        %v3313 = vadd.f32 0.0, %v3312
        %v3314 = vpop.f32.mrb[0].mxu0
        %3315 = vmatprep.mubr.f32.mxu0 0.0
        %3316 = vmatmul.mubr.f32.gmra.mrb[0].mxu0 %v3122
        %v3317 = vpop.f32.mrb[0].mxu0
        %v3318 = vadd.f32 0.0, %v3317
        %v3319 = vpop.f32.mrb[0].mxu0
        %3320 = vmatprep.mubr.f32.mxu0 0.0
        %3321 = vmatmul.mubr.f32.gmra.mrb[0].mxu0 %v3125
        %v3322 = vpop.f32.mrb[0].mxu0
        %v3323 = vadd.f32 0.0, %v3322
        %v3324 = vpop.f32.mrb[0].mxu0
        %3325 = vmatprep.mubr.f32.mxu0 0.0
        %3326 = vmatmul.mubr.f32.gmra.mrb[0].mxu0 %v3128
        %v3327 = vpop.f32.mrb[0].mxu0
        %v3328 = vadd.f32 0.0, %v3327
        %v3329 = vpop.f32.mrb[0].mxu0
        %3330 = vmatprep.mubr.f32.mxu0 0.0
        %3331 = vmatmul.mubr.f32.gmra.mrb[0].mxu0 %v3131
        %v3332 = vpop.f32.mrb[0].mxu0
        %v3333 = vadd.f32 0.0, %v3332
        %v3334 = vpop.f32.mrb[0].mxu0
        %3335 = vmatprep.mubr.f32.mxu0 0.0
        %3336 = vmatmul.mubr.f32.gmra.mrb[0].mxu0 %v3134
        %v3337 = vpop.f32.mrb[0].mxu0
        %v3338 = vadd.f32 0.0, %v3337
        %v3339 = vpop.f32.mrb[0].mxu0
        %3340 = vmatprep.mubr.f32.mxu0 0.0
        %3341 = vmatmul.mubr.f32.gmra.mrb[0].mxu0 %v3137
        %v3342 = vpop.f32.mrb[0].mxu0
        %v3343 = vadd.f32 0.0, %v3342
        %v3344 = vpop.f32.mrb[0].mxu0
        %3345 = vmatprep.mubr.f32.mxu0 0.0
        %3346 = vmatmul.mubr.f32.gmra.mrb[0].mxu0 %v3140
        %v3347 = vpop.f32.mrb[0].mxu0
        %v3348 = vadd.f32 0.0, %v3347
        %v3349 = vpop.f32.mrb[0].mxu0
        %3350 = vmatprep.mubr.f32.mxu0 0.0
        %3351 = vmatmul.mubr.f32.gmra.mrb[0].mxu0 %v3143
        %v3352 = vpop.f32.mrb[0].mxu0
        %v3353 = vadd.f32 0.0, %v3352
        %v3354 = vpop.f32.mrb[0].mxu0
        %3355 = vmatprep.mubr.f32.mxu0 0.0
        %3356 = vmatmul.mubr.f32.gmra.mrb[0].mxu0 %v3146
        %v3357 = vpop.f32.mrb[0].mxu0
        %v3358 = vadd.f32 0.0, %v3357
        %v3359 = vpop.f32.mrb[0].mxu0
        %3360 = vmatprep.mubr.f32.mxu0 0.0
        %3361 = vmatmul.mubr.f32.gmra.mrb[0].mxu0 %v3149
        %v3362 = vpop.f32.mrb[0].mxu0
        %v3363 = vadd.f32 0.0, %v3362
        %v3364 = vpop.f32.mrb[0].mxu0
        %3365 = vmatprep.mubr.f32.mxu0 0.0
        %3366 = vmatmul.mubr.f32.gmra.mrb[0].mxu0 %v3152
        %v3367 = vpop.f32.mrb[0].mxu0
        %v3368 = vadd.f32 0.0, %v3367
        %v3369 = vpop.f32.mrb[0].mxu0
        %3370 = vmatprep.mubr.f32.mxu0 0.0
        %3371 = vmatmul.mubr.f32.gmra.mrb[0].mxu0 %v3155
        %v3372 = vpop.f32.mrb[0].mxu0
        %v3373 = vadd.f32 0.0, %v3372
        %v3374 = vpop.f32.mrb[0].mxu0
        %3375 = vmatprep.mubr.f32.mxu0 0.0
        %3376 = vmatmul.mubr.f32.gmra.mrb[0].mxu0 %v3158
        %v3377 = vpop.f32.mrb[0].mxu0
        %v3378 = vadd.f32 0.0, %v3377
        %v3379 = vpop.f32.mrb[0].mxu0
        %3380 = vmatprep.mubr.f32.mxu0 0.0
        %3381 = vmatmul.mubr.f32.gmra.mrb[0].mxu0 %v3161
        %v3382 = vpop.f32.mrb[0].mxu0
        %v3383 = vadd.f32 0.0, %v3382
        %v3384 = vpop.f32.mrb[0].mxu0
        %3385 = vmatprep.mubr.f32.mxu0 0.0
        %3386 = vmatmul.mubr.f32.gmra.mrb[0].mxu0 %v3164
        %v3387 = vpop.f32.mrb[0].mxu0
        %v3388 = vadd.f32 0.0, %v3387
        %v3389 = vpop.f32.mrb[0].mxu0
        %3390 = vdwg.mxu0
        %v3391 = vlaneseq
        %v3392 = vshrl.u32 %v3391, 7
        %v3393 = vsub.s32 4, %v3392
        %v3394 = vrot.slane %v1035, %v3393
        %vm3395 = vcmp.eq.s32.totalorder %v1117, %v3394
        %vm3396 = vcmp.eq.s32.totalorder %v1118, %v3394
        %vm3397 = vcmp.eq.s32.totalorder %v1119, %v3394
        %vm3398 = vcmp.eq.s32.totalorder %v1120, %v3394
        %vm3399 = vcmp.eq.s32.totalorder %v1121, %v3394
        %vm3400 = vcmp.eq.s32.totalorder %v1122, %v3394
        %vm3401 = vcmp.eq.s32.totalorder %v1123, %v3394
        %vm3402 = vcmp.eq.s32.totalorder %v1124, %v3394
        %vm3403 = vcmp.eq.s32.totalorder %v1125, %v3394
        %vm3404 = vcmp.eq.s32.totalorder %v1126, %v3394
        %vm3405 = vcmp.eq.s32.totalorder %v1127, %v3394
        %vm3406 = vcmp.eq.s32.totalorder %v1128, %v3394
        %vm3407 = vcmp.eq.s32.totalorder %v1129, %v3394
        %vm3408 = vcmp.eq.s32.totalorder %v1130, %v3394
        %vm3409 = vcmp.eq.s32.totalorder %v1131, %v3394
        %vm3410 = vcmp.eq.s32.totalorder %v1132, %v3394
        %vm3411 = vcmp.eq.s32.totalorder %v1133, %v3394
        %vm3412 = vcmp.eq.s32.totalorder %v1134, %v3394
        %vm3413 = vcmp.eq.s32.totalorder %v1135, %v3394
        %vm3414 = vcmp.eq.s32.totalorder %v1136, %v3394
        %vm3415 = vcmp.eq.s32.totalorder %v1137, %v3394
        %vm3416 = vcmp.eq.s32.totalorder %v1138, %v3394
        %vm3417 = vcmp.eq.s32.totalorder %v1139, %v3394
        %vm3418 = vcmp.eq.s32.totalorder %v1140, %v3394
        %vm3419 = vcmp.eq.s32.totalorder %v1141, %v3394
        %vm3420 = vcmp.eq.s32.totalorder %v1142, %v3394
        %vm3421 = vcmp.eq.s32.totalorder %v1143, %v3394
        %vm3422 = vcmp.eq.s32.totalorder %v1144, %v3394
        %vm3423 = vcmp.eq.s32.totalorder %v1145, %v3394
        %vm3424 = vcmp.eq.s32.totalorder %v1146, %v3394
        %vm3425 = vcmp.eq.s32.totalorder %v1147, %v3394
        %vm3426 = vcmp.eq.s32.totalorder %v1148, %v3394
        %v3427 = vsel %vm3395, %v3233, 0.0
        %v3428 = vsel %vm3396, %v3238, 0.0
        %v3429 = vsel %vm3397, %v3243, 0.0
        %v3430 = vsel %vm3398, %v3248, 0.0
        %v3431 = vsel %vm3399, %v3253, 0.0
        %v3432 = vsel %vm3400, %v3258, 0.0
        %v3433 = vsel %vm3401, %v3263, 0.0
        %v3434 = vsel %vm3402, %v3268, 0.0
        %v3435 = vsel %vm3403, %v3273, 0.0
        %v3436 = vsel %vm3404, %v3278, 0.0
        %v3437 = vsel %vm3405, %v3283, 0.0
        %v3438 = vsel %vm3406, %v3288, 0.0
        %v3439 = vsel %vm3407, %v3293, 0.0
        %v3440 = vsel %vm3408, %v3298, 0.0
        %v3441 = vsel %vm3409, %v3303, 0.0
        %v3442 = vsel %vm3410, %v3308, 0.0
        %v3443 = vsel %vm3411, %v3313, 0.0
        %v3444 = vsel %vm3412, %v3318, 0.0
        %v3445 = vsel %vm3413, %v3323, 0.0
        %v3446 = vsel %vm3414, %v3328, 0.0
        %v3447 = vsel %vm3415, %v3333, 0.0
        %v3448 = vsel %vm3416, %v3338, 0.0
        %v3449 = vsel %vm3417, %v3343, 0.0
        %v3450 = vsel %vm3418, %v3348, 0.0
        %v3451 = vsel %vm3419, %v3353, 0.0
        %v3452 = vsel %vm3420, %v3358, 0.0
        %v3453 = vsel %vm3421, %v3363, 0.0
        %v3454 = vsel %vm3422, %v3368, 0.0
        %v3455 = vsel %vm3423, %v3373, 0.0
        %v3456 = vsel %vm3424, %v3378, 0.0
        %v3457 = vsel %vm3425, %v3383, 0.0
        %v3458 = vsel %vm3426, %v3388, 0.0
        %v3459 = vadd.f32 %v3427, %v3428
        %v3460 = vadd.f32 %v3459, %v3429
        %v3461 = vadd.f32 %v3460, %v3430
        %v3462 = vadd.f32 %v3461, %v3431
        %v3463 = vadd.f32 %v3462, %v3432
        %v3464 = vadd.f32 %v3463, %v3433
        %v3465 = vadd.f32 %v3464, %v3434
        %v3466 = vadd.f32 %v3465, %v3435
        %v3467 = vadd.f32 %v3466, %v3436
        %v3468 = vadd.f32 %v3467, %v3437
        %v3469 = vadd.f32 %v3468, %v3438
        %v3470 = vadd.f32 %v3469, %v3439
        %v3471 = vadd.f32 %v3470, %v3440
        %v3472 = vadd.f32 %v3471, %v3441
        %v3473 = vadd.f32 %v3472, %v3442
        %v3474 = vadd.f32 %v3473, %v3443
        %v3475 = vadd.f32 %v3474, %v3444
        %v3476 = vadd.f32 %v3475, %v3445
        %v3477 = vadd.f32 %v3476, %v3446
        %v3478 = vadd.f32 %v3477, %v3447
        %v3479 = vadd.f32 %v3478, %v3448
        %v3480 = vadd.f32 %v3479, %v3449
        %v3481 = vadd.f32 %v3480, %v3450
        %v3482 = vadd.f32 %v3481, %v3451
        %v3483 = vadd.f32 %v3482, %v3452
        %v3484 = vadd.f32 %v3483, %v3453
        %v3485 = vadd.f32 %v3484, %v3454
        %v3486 = vadd.f32 %v3485, %v3455
        %v3487 = vadd.f32 %v3486, %v3456
        %v3488 = vadd.f32 %v3487, %v3457
        %v3489 = vadd.f32 %v3488, %v3458
        %v3490 = vrot.slane %v3489, 4
        %v3491 = vadd.f32 %v3489, %v3490
        %v3492 = vrot.slane %v3491, 2
        %v3493 = vadd.f32 %v3491, %v3492
        %v3494 = vrot.slane %v3493, 1
        %v3495 = vadd.f32 %v3493, %v3494
        %v3496 = vmul.f32 %v1108, %v3495
        %v3498 = vrot.slane %v3496, 4
        %v3500 = vadd.f32 %v3029, %v3498
        %v3501 = vlaneseq
        %v3502 = vshrl.u32 %v3501, 7
        %v3503 = vsub.s32 5, %v3502
        %v3504 = vrot.slane %v1003, %v3503
        %vm3505 = vcmp.eq.s32.totalorder %v1117, %v3504
        %v3506 = vsel %vm3505, 1, 0
        %v3507 = vcvt.s32.f32 %v3506
        %s3508 = scalar_lea.vmem %s11, 1280
        %v3509 = vld [vmem:[%s3508] sm:$0xff]
        %v3510 = vld [vmem:[%s3508 + $0x8] sm:$0xff]
        %v3511 = vld [vmem:[%s3508 + $0x10] sm:$0xff]
        %v3512 = vld [vmem:[%s3508 + $0x18] sm:$0xff]
        %v3513 = vld [vmem:[%s3508 + $0x20] sm:$0xff]
        %v3514 = vld [vmem:[%s3508 + $0x28] sm:$0xff]
        %v3515 = vld [vmem:[%s3508 + $0x30] sm:$0xff]
        %v3516 = vld [vmem:[%s3508 + $0x38] sm:$0xff]
        %v3517 = vld [vmem:[%s3508 + $0x40] sm:$0xff]
        %v3518 = vld [vmem:[%s3508 + $0x48] sm:$0xff]
        %v3519 = vld [vmem:[%s3508 + $0x50] sm:$0xff]
        %v3520 = vld [vmem:[%s3508 + $0x58] sm:$0xff]
        %v3521 = vld [vmem:[%s3508 + $0x60] sm:$0xff]
        %v3522 = vld [vmem:[%s3508 + $0x68] sm:$0xff]
        %v3523 = vld [vmem:[%s3508 + $0x70] sm:$0xff]
        %v3524 = vld [vmem:[%s3508 + $0x78] sm:$0xff]
        %v3525 = vld [vmem:[%s3508 + $0x80] sm:$0xff]
        %v3526 = vld [vmem:[%s3508 + $0x88] sm:$0xff]
        %v3527 = vld [vmem:[%s3508 + $0x90] sm:$0xff]
        %v3528 = vld [vmem:[%s3508 + $0x98] sm:$0xff]
        %v3529 = vld [vmem:[%s3508 + $0xa0] sm:$0xff]
        %v3530 = vld [vmem:[%s3508 + $0xa8] sm:$0xff]
        %v3531 = vld [vmem:[%s3508 + $0xb0] sm:$0xff]
        %v3532 = vld [vmem:[%s3508 + $0xb8] sm:$0xff]
        %v3533 = vld [vmem:[%s3508 + $0xc0] sm:$0xff]
        %v3534 = vld [vmem:[%s3508 + $0xc8] sm:$0xff]
        %v3535 = vld [vmem:[%s3508 + $0xd0] sm:$0xff]
        %v3536 = vld [vmem:[%s3508 + $0xd8] sm:$0xff]
        %v3537 = vld [vmem:[%s3508 + $0xe0] sm:$0xff]
        %v3538 = vld [vmem:[%s3508 + $0xe8] sm:$0xff]
        %v3539 = vld [vmem:[%s3508 + $0xf0] sm:$0xff]
        %v3540 = vld [vmem:[%s3508 + $0xf8] sm:$0xff]
        %v3542 = vsel %vm1188, %v3509, 0
        %v3545 = vsel %vm1188, %v3510, 0
        %v3548 = vsel %vm1188, %v3511, 0
        %v3551 = vsel %vm1188, %v3512, 0
        %v3554 = vsel %vm1188, %v3513, 0
        %v3557 = vsel %vm1188, %v3514, 0
        %v3560 = vsel %vm1188, %v3515, 0
        %v3563 = vsel %vm1188, %v3516, 0
        %v3566 = vsel %vm1188, %v3517, 0
        %v3569 = vsel %vm1188, %v3518, 0
        %v3572 = vsel %vm1188, %v3519, 0
        %v3575 = vsel %vm1188, %v3520, 0
        %v3578 = vsel %vm1188, %v3521, 0
        %v3581 = vsel %vm1188, %v3522, 0
        %v3584 = vsel %vm1188, %v3523, 0
        %v3587 = vsel %vm1188, %v3524, 0
        %v3590 = vsel %vm1188, %v3525, 0
        %v3593 = vsel %vm1188, %v3526, 0
        %v3596 = vsel %vm1188, %v3527, 0
        %v3599 = vsel %vm1188, %v3528, 0
        %v3602 = vsel %vm1188, %v3529, 0
        %v3605 = vsel %vm1188, %v3530, 0
        %v3608 = vsel %vm1188, %v3531, 0
        %v3611 = vsel %vm1188, %v3532, 0
        %v3614 = vsel %vm1188, %v3533, 0
        %v3617 = vsel %vm1188, %v3534, 0
        %v3620 = vsel %vm1188, %v3535, 0
        %v3623 = vsel %vm1188, %v3536, 0
        %v3626 = vsel %vm1188, %v3537, 0
        %v3629 = vsel %vm1188, %v3538, 0
        %v3632 = vsel %vm1188, %v3539, 0
        %v3635 = vsel %vm1188, %v3540, 0
        %3637 = vmatprep.subr.mxu0 0.0
        %3638 = vmatpush1.msra.mxu0 %v3507
        %3639 = vmatprep.subr.mxu0 0.0
        %3640 = vmatpush1.msra.mxu0 0.0
        %3641 = vmatprep.subr.mxu0 0.0
        %3642 = vmatpush1.msra.mxu0 0.0
        %3643 = vmatprep.subr.mxu0 0.0
        %3644 = vmatpush1.msra.mxu0 0.0
        %3645 = vmatprep.subr.mxu0 0.0
        %3646 = vmatpush1.msra.mxu0 0.0
        %3647 = vmatprep.subr.mxu0 0.0
        %3648 = vmatpush1.msra.mxu0 0.0
        %3649 = vmatprep.subr.mxu0 0.0
        %3650 = vmatpush1.msra.mxu0 0.0
        %3651 = vmatprep.subr.mxu0 0.0
        %3652 = vmatpush1.msra.mxu0 0.0
        %3653 = vmatprep.subr.mxu0 0.0
        %3654 = vmatpush1.msra.mxu0 0.0
        %3655 = vmatprep.subr.mxu0 0.0
        %3656 = vmatpush1.msra.mxu0 0.0
        %3657 = vmatprep.subr.mxu0 0.0
        %3658 = vmatpush1.msra.mxu0 0.0
        %3659 = vmatprep.subr.mxu0 0.0
        %3660 = vmatpush1.msra.mxu0 0.0
        %3661 = vmatprep.subr.mxu0 0.0
        %3662 = vmatpush1.msra.mxu0 0.0
        %3663 = vmatprep.subr.mxu0 0.0
        %3664 = vmatpush1.msra.mxu0 0.0
        %3665 = vmatprep.subr.mxu0 0.0
        %3666 = vmatpush1.msra.mxu0 0.0
        %3667 = vmatprep.subr.mxu0 0.0
        %3668 = vmatpush1.msra.mxu0 0.0
        %3669 = vmatprep.subr.mxu0 0.0
        %3670 = vmatpush1.msra.mxu0 0.0
        %3671 = vmatprep.subr.mxu0 0.0
        %3672 = vmatpush1.msra.mxu0 0.0
        %3673 = vmatprep.subr.mxu0 0.0
        %3674 = vmatpush1.msra.mxu0 0.0
        %3675 = vmatprep.subr.mxu0 0.0
        %3676 = vmatpush1.msra.mxu0 0.0
        %3677 = vmatprep.subr.mxu0 0.0
        %3678 = vmatpush1.msra.mxu0 0.0
        %3679 = vmatprep.subr.mxu0 0.0
        %3680 = vmatpush1.msra.mxu0 0.0
        %3681 = vmatprep.subr.mxu0 0.0
        %3682 = vmatpush1.msra.mxu0 0.0
        %3683 = vmatprep.subr.mxu0 0.0
        %3684 = vmatpush1.msra.mxu0 0.0
        %3685 = vmatprep.subr.mxu0 0.0
        %3686 = vmatpush1.msra.mxu0 0.0
        %3687 = vmatprep.subr.mxu0 0.0
        %3688 = vmatpush1.msra.mxu0 0.0
        %3689 = vmatprep.subr.mxu0 0.0
        %3690 = vmatpush1.msra.mxu0 0.0
        %3691 = vmatprep.subr.mxu0 0.0
        %3692 = vmatpush1.msra.mxu0 0.0
        %3693 = vmatprep.subr.mxu0 0.0
        %3694 = vmatpush1.msra.mxu0 0.0
        %3695 = vmatprep.subr.mxu0 0.0
        %3696 = vmatpush1.msra.mxu0 0.0
        %3697 = vmatprep.subr.mxu0 0.0
        %3698 = vmatpush1.msra.mxu0 0.0
        %3699 = vmatprep.subr.mxu0 0.0
        %3700 = vmatpush1.msra.mxu0 0.0
        %3701 = vmatprep.mubr.f32.mxu0 0.0
        %3702 = vmatmul.mubr.f32.gmra.mrb[0].mxu0 %v3542
        %v3703 = vpop.f32.mrb[0].mxu0
        %v3704 = vadd.f32 0.0, %v3703
        %v3705 = vpop.f32.mrb[0].mxu0
        %3706 = vmatprep.mubr.f32.mxu0 0.0
        %3707 = vmatmul.mubr.f32.gmra.mrb[0].mxu0 %v3545
        %v3708 = vpop.f32.mrb[0].mxu0
        %v3709 = vadd.f32 0.0, %v3708
        %v3710 = vpop.f32.mrb[0].mxu0
        %3711 = vmatprep.mubr.f32.mxu0 0.0
        %3712 = vmatmul.mubr.f32.gmra.mrb[0].mxu0 %v3548
        %v3713 = vpop.f32.mrb[0].mxu0
        %v3714 = vadd.f32 0.0, %v3713
        %v3715 = vpop.f32.mrb[0].mxu0
        %3716 = vmatprep.mubr.f32.mxu0 0.0
        %3717 = vmatmul.mubr.f32.gmra.mrb[0].mxu0 %v3551
        %v3718 = vpop.f32.mrb[0].mxu0
        %v3719 = vadd.f32 0.0, %v3718
        %v3720 = vpop.f32.mrb[0].mxu0
        %3721 = vmatprep.mubr.f32.mxu0 0.0
        %3722 = vmatmul.mubr.f32.gmra.mrb[0].mxu0 %v3554
        %v3723 = vpop.f32.mrb[0].mxu0
        %v3724 = vadd.f32 0.0, %v3723
        %v3725 = vpop.f32.mrb[0].mxu0
        %3726 = vmatprep.mubr.f32.mxu0 0.0
        %3727 = vmatmul.mubr.f32.gmra.mrb[0].mxu0 %v3557
        %v3728 = vpop.f32.mrb[0].mxu0
        %v3729 = vadd.f32 0.0, %v3728
        %v3730 = vpop.f32.mrb[0].mxu0
        %3731 = vmatprep.mubr.f32.mxu0 0.0
        %3732 = vmatmul.mubr.f32.gmra.mrb[0].mxu0 %v3560
        %v3733 = vpop.f32.mrb[0].mxu0
        %v3734 = vadd.f32 0.0, %v3733
        %v3735 = vpop.f32.mrb[0].mxu0
        %3736 = vmatprep.mubr.f32.mxu0 0.0
        %3737 = vmatmul.mubr.f32.gmra.mrb[0].mxu0 %v3563
        %v3738 = vpop.f32.mrb[0].mxu0
        %v3739 = vadd.f32 0.0, %v3738
        %v3740 = vpop.f32.mrb[0].mxu0
        %3741 = vmatprep.mubr.f32.mxu0 0.0
        %3742 = vmatmul.mubr.f32.gmra.mrb[0].mxu0 %v3566
        %v3743 = vpop.f32.mrb[0].mxu0
        %v3744 = vadd.f32 0.0, %v3743
        %v3745 = vpop.f32.mrb[0].mxu0
        %3746 = vmatprep.mubr.f32.mxu0 0.0
        %3747 = vmatmul.mubr.f32.gmra.mrb[0].mxu0 %v3569
        %v3748 = vpop.f32.mrb[0].mxu0
        %v3749 = vadd.f32 0.0, %v3748
        %v3750 = vpop.f32.mrb[0].mxu0
        %3751 = vmatprep.mubr.f32.mxu0 0.0
        %3752 = vmatmul.mubr.f32.gmra.mrb[0].mxu0 %v3572
        %v3753 = vpop.f32.mrb[0].mxu0
        %v3754 = vadd.f32 0.0, %v3753
        %v3755 = vpop.f32.mrb[0].mxu0
        %3756 = vmatprep.mubr.f32.mxu0 0.0
        %3757 = vmatmul.mubr.f32.gmra.mrb[0].mxu0 %v3575
        %v3758 = vpop.f32.mrb[0].mxu0
        %v3759 = vadd.f32 0.0, %v3758
        %v3760 = vpop.f32.mrb[0].mxu0
        %3761 = vmatprep.mubr.f32.mxu0 0.0
        %3762 = vmatmul.mubr.f32.gmra.mrb[0].mxu0 %v3578
        %v3763 = vpop.f32.mrb[0].mxu0
        %v3764 = vadd.f32 0.0, %v3763
        %v3765 = vpop.f32.mrb[0].mxu0
        %3766 = vmatprep.mubr.f32.mxu0 0.0
        %3767 = vmatmul.mubr.f32.gmra.mrb[0].mxu0 %v3581
        %v3768 = vpop.f32.mrb[0].mxu0
        %v3769 = vadd.f32 0.0, %v3768
        %v3770 = vpop.f32.mrb[0].mxu0
        %3771 = vmatprep.mubr.f32.mxu0 0.0
        %3772 = vmatmul.mubr.f32.gmra.mrb[0].mxu0 %v3584
        %v3773 = vpop.f32.mrb[0].mxu0
        %v3774 = vadd.f32 0.0, %v3773
        %v3775 = vpop.f32.mrb[0].mxu0
        %3776 = vmatprep.mubr.f32.mxu0 0.0
        %3777 = vmatmul.mubr.f32.gmra.mrb[0].mxu0 %v3587
        %v3778 = vpop.f32.mrb[0].mxu0
        %v3779 = vadd.f32 0.0, %v3778
        %v3780 = vpop.f32.mrb[0].mxu0
        %3781 = vmatprep.mubr.f32.mxu0 0.0
        %3782 = vmatmul.mubr.f32.gmra.mrb[0].mxu0 %v3590
        %v3783 = vpop.f32.mrb[0].mxu0
        %v3784 = vadd.f32 0.0, %v3783
        %v3785 = vpop.f32.mrb[0].mxu0
        %3786 = vmatprep.mubr.f32.mxu0 0.0
        %3787 = vmatmul.mubr.f32.gmra.mrb[0].mxu0 %v3593
        %v3788 = vpop.f32.mrb[0].mxu0
        %v3789 = vadd.f32 0.0, %v3788
        %v3790 = vpop.f32.mrb[0].mxu0
        %3791 = vmatprep.mubr.f32.mxu0 0.0
        %3792 = vmatmul.mubr.f32.gmra.mrb[0].mxu0 %v3596
        %v3793 = vpop.f32.mrb[0].mxu0
        %v3794 = vadd.f32 0.0, %v3793
        %v3795 = vpop.f32.mrb[0].mxu0
        %3796 = vmatprep.mubr.f32.mxu0 0.0
        %3797 = vmatmul.mubr.f32.gmra.mrb[0].mxu0 %v3599
        %v3798 = vpop.f32.mrb[0].mxu0
        %v3799 = vadd.f32 0.0, %v3798
        %v3800 = vpop.f32.mrb[0].mxu0
        %3801 = vmatprep.mubr.f32.mxu0 0.0
        %3802 = vmatmul.mubr.f32.gmra.mrb[0].mxu0 %v3602
        %v3803 = vpop.f32.mrb[0].mxu0
        %v3804 = vadd.f32 0.0, %v3803
        %v3805 = vpop.f32.mrb[0].mxu0
        %3806 = vmatprep.mubr.f32.mxu0 0.0
        %3807 = vmatmul.mubr.f32.gmra.mrb[0].mxu0 %v3605
        %v3808 = vpop.f32.mrb[0].mxu0
        %v3809 = vadd.f32 0.0, %v3808
        %v3810 = vpop.f32.mrb[0].mxu0
        %3811 = vmatprep.mubr.f32.mxu0 0.0
        %3812 = vmatmul.mubr.f32.gmra.mrb[0].mxu0 %v3608
        %v3813 = vpop.f32.mrb[0].mxu0
        %v3814 = vadd.f32 0.0, %v3813
        %v3815 = vpop.f32.mrb[0].mxu0
        %3816 = vmatprep.mubr.f32.mxu0 0.0
        %3817 = vmatmul.mubr.f32.gmra.mrb[0].mxu0 %v3611
        %v3818 = vpop.f32.mrb[0].mxu0
        %v3819 = vadd.f32 0.0, %v3818
        %v3820 = vpop.f32.mrb[0].mxu0
        %3821 = vmatprep.mubr.f32.mxu0 0.0
        %3822 = vmatmul.mubr.f32.gmra.mrb[0].mxu0 %v3614
        %v3823 = vpop.f32.mrb[0].mxu0
        %v3824 = vadd.f32 0.0, %v3823
        %v3825 = vpop.f32.mrb[0].mxu0
        %3826 = vmatprep.mubr.f32.mxu0 0.0
        %3827 = vmatmul.mubr.f32.gmra.mrb[0].mxu0 %v3617
        %v3828 = vpop.f32.mrb[0].mxu0
        %v3829 = vadd.f32 0.0, %v3828
        %v3830 = vpop.f32.mrb[0].mxu0
        %3831 = vmatprep.mubr.f32.mxu0 0.0
        %3832 = vmatmul.mubr.f32.gmra.mrb[0].mxu0 %v3620
        %v3833 = vpop.f32.mrb[0].mxu0
        %v3834 = vadd.f32 0.0, %v3833
        %v3835 = vpop.f32.mrb[0].mxu0
        %3836 = vmatprep.mubr.f32.mxu0 0.0
        %3837 = vmatmul.mubr.f32.gmra.mrb[0].mxu0 %v3623
        %v3838 = vpop.f32.mrb[0].mxu0
        %v3839 = vadd.f32 0.0, %v3838
        %v3840 = vpop.f32.mrb[0].mxu0
        %3841 = vmatprep.mubr.f32.mxu0 0.0
        %3842 = vmatmul.mubr.f32.gmra.mrb[0].mxu0 %v3626
        %v3843 = vpop.f32.mrb[0].mxu0
        %v3844 = vadd.f32 0.0, %v3843
        %v3845 = vpop.f32.mrb[0].mxu0
        %3846 = vmatprep.mubr.f32.mxu0 0.0
        %3847 = vmatmul.mubr.f32.gmra.mrb[0].mxu0 %v3629
        %v3848 = vpop.f32.mrb[0].mxu0
        %v3849 = vadd.f32 0.0, %v3848
        %v3850 = vpop.f32.mrb[0].mxu0
        %3851 = vmatprep.mubr.f32.mxu0 0.0
        %3852 = vmatmul.mubr.f32.gmra.mrb[0].mxu0 %v3632
        %v3853 = vpop.f32.mrb[0].mxu0
        %v3854 = vadd.f32 0.0, %v3853
        %v3855 = vpop.f32.mrb[0].mxu0
        %3856 = vmatprep.mubr.f32.mxu0 0.0
        %3857 = vmatmul.mubr.f32.gmra.mrb[0].mxu0 %v3635
        %v3858 = vpop.f32.mrb[0].mxu0
        %v3859 = vadd.f32 0.0, %v3858
        %v3860 = vpop.f32.mrb[0].mxu0
        %3861 = vdwg.mxu0
        %v3862 = vlaneseq
        %v3863 = vshrl.u32 %v3862, 7
        %v3864 = vsub.s32 5, %v3863
        %v3865 = vrot.slane %v1035, %v3864
        %vm3866 = vcmp.eq.s32.totalorder %v1117, %v3865
        %vm3867 = vcmp.eq.s32.totalorder %v1118, %v3865
        %vm3868 = vcmp.eq.s32.totalorder %v1119, %v3865
        %vm3869 = vcmp.eq.s32.totalorder %v1120, %v3865
        %vm3870 = vcmp.eq.s32.totalorder %v1121, %v3865
        %vm3871 = vcmp.eq.s32.totalorder %v1122, %v3865
        %vm3872 = vcmp.eq.s32.totalorder %v1123, %v3865
        %vm3873 = vcmp.eq.s32.totalorder %v1124, %v3865
        %vm3874 = vcmp.eq.s32.totalorder %v1125, %v3865
        %vm3875 = vcmp.eq.s32.totalorder %v1126, %v3865
        %vm3876 = vcmp.eq.s32.totalorder %v1127, %v3865
        %vm3877 = vcmp.eq.s32.totalorder %v1128, %v3865
        %vm3878 = vcmp.eq.s32.totalorder %v1129, %v3865
        %vm3879 = vcmp.eq.s32.totalorder %v1130, %v3865
        %vm3880 = vcmp.eq.s32.totalorder %v1131, %v3865
        %vm3881 = vcmp.eq.s32.totalorder %v1132, %v3865
        %vm3882 = vcmp.eq.s32.totalorder %v1133, %v3865
        %vm3883 = vcmp.eq.s32.totalorder %v1134, %v3865
        %vm3884 = vcmp.eq.s32.totalorder %v1135, %v3865
        %vm3885 = vcmp.eq.s32.totalorder %v1136, %v3865
        %vm3886 = vcmp.eq.s32.totalorder %v1137, %v3865
        %vm3887 = vcmp.eq.s32.totalorder %v1138, %v3865
        %vm3888 = vcmp.eq.s32.totalorder %v1139, %v3865
        %vm3889 = vcmp.eq.s32.totalorder %v1140, %v3865
        %vm3890 = vcmp.eq.s32.totalorder %v1141, %v3865
        %vm3891 = vcmp.eq.s32.totalorder %v1142, %v3865
        %vm3892 = vcmp.eq.s32.totalorder %v1143, %v3865
        %vm3893 = vcmp.eq.s32.totalorder %v1144, %v3865
        %vm3894 = vcmp.eq.s32.totalorder %v1145, %v3865
        %vm3895 = vcmp.eq.s32.totalorder %v1146, %v3865
        %vm3896 = vcmp.eq.s32.totalorder %v1147, %v3865
        %vm3897 = vcmp.eq.s32.totalorder %v1148, %v3865
        %v3898 = vsel %vm3866, %v3704, 0.0
        %v3899 = vsel %vm3867, %v3709, 0.0
        %v3900 = vsel %vm3868, %v3714, 0.0
        %v3901 = vsel %vm3869, %v3719, 0.0
        %v3902 = vsel %vm3870, %v3724, 0.0
        %v3903 = vsel %vm3871, %v3729, 0.0
        %v3904 = vsel %vm3872, %v3734, 0.0
        %v3905 = vsel %vm3873, %v3739, 0.0
        %v3906 = vsel %vm3874, %v3744, 0.0
        %v3907 = vsel %vm3875, %v3749, 0.0
        %v3908 = vsel %vm3876, %v3754, 0.0
        %v3909 = vsel %vm3877, %v3759, 0.0
        %v3910 = vsel %vm3878, %v3764, 0.0
        %v3911 = vsel %vm3879, %v3769, 0.0
        %v3912 = vsel %vm3880, %v3774, 0.0
        %v3913 = vsel %vm3881, %v3779, 0.0
        %v3914 = vsel %vm3882, %v3784, 0.0
        %v3915 = vsel %vm3883, %v3789, 0.0
        %v3916 = vsel %vm3884, %v3794, 0.0
        %v3917 = vsel %vm3885, %v3799, 0.0
        %v3918 = vsel %vm3886, %v3804, 0.0
        %v3919 = vsel %vm3887, %v3809, 0.0
        %v3920 = vsel %vm3888, %v3814, 0.0
        %v3921 = vsel %vm3889, %v3819, 0.0
        %v3922 = vsel %vm3890, %v3824, 0.0
        %v3923 = vsel %vm3891, %v3829, 0.0
        %v3924 = vsel %vm3892, %v3834, 0.0
        %v3925 = vsel %vm3893, %v3839, 0.0
        %v3926 = vsel %vm3894, %v3844, 0.0
        %v3927 = vsel %vm3895, %v3849, 0.0
        %v3928 = vsel %vm3896, %v3854, 0.0
        %v3929 = vsel %vm3897, %v3859, 0.0
        %v3930 = vadd.f32 %v3898, %v3899
        %v3931 = vadd.f32 %v3930, %v3900
        %v3932 = vadd.f32 %v3931, %v3901
        %v3933 = vadd.f32 %v3932, %v3902
        %v3934 = vadd.f32 %v3933, %v3903
        %v3935 = vadd.f32 %v3934, %v3904
        %v3936 = vadd.f32 %v3935, %v3905
        %v3937 = vadd.f32 %v3936, %v3906
        %v3938 = vadd.f32 %v3937, %v3907
        %v3939 = vadd.f32 %v3938, %v3908
        %v3940 = vadd.f32 %v3939, %v3909
        %v3941 = vadd.f32 %v3940, %v3910
        %v3942 = vadd.f32 %v3941, %v3911
        %v3943 = vadd.f32 %v3942, %v3912
        %v3944 = vadd.f32 %v3943, %v3913
        %v3945 = vadd.f32 %v3944, %v3914
        %v3946 = vadd.f32 %v3945, %v3915
        %v3947 = vadd.f32 %v3946, %v3916
        %v3948 = vadd.f32 %v3947, %v3917
        %v3949 = vadd.f32 %v3948, %v3918
        %v3950 = vadd.f32 %v3949, %v3919
        %v3951 = vadd.f32 %v3950, %v3920
        %v3952 = vadd.f32 %v3951, %v3921
        %v3953 = vadd.f32 %v3952, %v3922
        %v3954 = vadd.f32 %v3953, %v3923
        %v3955 = vadd.f32 %v3954, %v3924
        %v3956 = vadd.f32 %v3955, %v3925
        %v3957 = vadd.f32 %v3956, %v3926
        %v3958 = vadd.f32 %v3957, %v3927
        %v3959 = vadd.f32 %v3958, %v3928
        %v3960 = vadd.f32 %v3959, %v3929
        %v3961 = vrot.slane %v3960, 4
        %v3962 = vadd.f32 %v3960, %v3961
        %v3963 = vrot.slane %v3962, 2
        %v3964 = vadd.f32 %v3962, %v3963
        %v3965 = vrot.slane %v3964, 1
        %v3966 = vadd.f32 %v3964, %v3965
        %v3967 = vmul.f32 %v1108, %v3966
        %v3969 = vrot.slane %v3967, 5
        %v3971 = vadd.f32 %v3500, %v3969
        %v3972 = vlaneseq
        %v3973 = vshrl.u32 %v3972, 7
        %v3974 = vsub.s32 6, %v3973
        %v3975 = vrot.slane %v1003, %v3974
        %vm3976 = vcmp.eq.s32.totalorder %v1117, %v3975
        %v3977 = vsel %vm3976, 1, 0
        %v3978 = vcvt.s32.f32 %v3977
        %s3979 = scalar_lea.vmem %s11, 1536
        %v3980 = vld [vmem:[%s3979] sm:$0xff]
        %v3981 = vld [vmem:[%s3979 + $0x8] sm:$0xff]
        %v3982 = vld [vmem:[%s3979 + $0x10] sm:$0xff]
        %v3983 = vld [vmem:[%s3979 + $0x18] sm:$0xff]
        %v3984 = vld [vmem:[%s3979 + $0x20] sm:$0xff]
        %v3985 = vld [vmem:[%s3979 + $0x28] sm:$0xff]
        %v3986 = vld [vmem:[%s3979 + $0x30] sm:$0xff]
        %v3987 = vld [vmem:[%s3979 + $0x38] sm:$0xff]
        %v3988 = vld [vmem:[%s3979 + $0x40] sm:$0xff]
        %v3989 = vld [vmem:[%s3979 + $0x48] sm:$0xff]
        %v3990 = vld [vmem:[%s3979 + $0x50] sm:$0xff]
        %v3991 = vld [vmem:[%s3979 + $0x58] sm:$0xff]
        %v3992 = vld [vmem:[%s3979 + $0x60] sm:$0xff]
        %v3993 = vld [vmem:[%s3979 + $0x68] sm:$0xff]
        %v3994 = vld [vmem:[%s3979 + $0x70] sm:$0xff]
        %v3995 = vld [vmem:[%s3979 + $0x78] sm:$0xff]
        %v3996 = vld [vmem:[%s3979 + $0x80] sm:$0xff]
        %v3997 = vld [vmem:[%s3979 + $0x88] sm:$0xff]
        %v3998 = vld [vmem:[%s3979 + $0x90] sm:$0xff]
        %v3999 = vld [vmem:[%s3979 + $0x98] sm:$0xff]
        %v4000 = vld [vmem:[%s3979 + $0xa0] sm:$0xff]
        %v4001 = vld [vmem:[%s3979 + $0xa8] sm:$0xff]
        %v4002 = vld [vmem:[%s3979 + $0xb0] sm:$0xff]
        %v4003 = vld [vmem:[%s3979 + $0xb8] sm:$0xff]
        %v4004 = vld [vmem:[%s3979 + $0xc0] sm:$0xff]
        %v4005 = vld [vmem:[%s3979 + $0xc8] sm:$0xff]
        %v4006 = vld [vmem:[%s3979 + $0xd0] sm:$0xff]
        %v4007 = vld [vmem:[%s3979 + $0xd8] sm:$0xff]
        %v4008 = vld [vmem:[%s3979 + $0xe0] sm:$0xff]
        %v4009 = vld [vmem:[%s3979 + $0xe8] sm:$0xff]
        %v4010 = vld [vmem:[%s3979 + $0xf0] sm:$0xff]
        %v4011 = vld [vmem:[%s3979 + $0xf8] sm:$0xff]
        %v4013 = vsel %vm1188, %v3980, 0
        %v4016 = vsel %vm1188, %v3981, 0
        %v4019 = vsel %vm1188, %v3982, 0
        %v4022 = vsel %vm1188, %v3983, 0
        %v4025 = vsel %vm1188, %v3984, 0
        %v4028 = vsel %vm1188, %v3985, 0
        %v4031 = vsel %vm1188, %v3986, 0
        %v4034 = vsel %vm1188, %v3987, 0
        %v4037 = vsel %vm1188, %v3988, 0
        %v4040 = vsel %vm1188, %v3989, 0
        %v4043 = vsel %vm1188, %v3990, 0
        %v4046 = vsel %vm1188, %v3991, 0
        %v4049 = vsel %vm1188, %v3992, 0
        %v4052 = vsel %vm1188, %v3993, 0
        %v4055 = vsel %vm1188, %v3994, 0
        %v4058 = vsel %vm1188, %v3995, 0
        %v4061 = vsel %vm1188, %v3996, 0
        %v4064 = vsel %vm1188, %v3997, 0
        %v4067 = vsel %vm1188, %v3998, 0
        %v4070 = vsel %vm1188, %v3999, 0
        %v4073 = vsel %vm1188, %v4000, 0
        %v4076 = vsel %vm1188, %v4001, 0
        %v4079 = vsel %vm1188, %v4002, 0
        %v4082 = vsel %vm1188, %v4003, 0
        %v4085 = vsel %vm1188, %v4004, 0
        %v4088 = vsel %vm1188, %v4005, 0
        %v4091 = vsel %vm1188, %v4006, 0
        %v4094 = vsel %vm1188, %v4007, 0
        %v4097 = vsel %vm1188, %v4008, 0
        %v4100 = vsel %vm1188, %v4009, 0
        %v4103 = vsel %vm1188, %v4010, 0
        %v4106 = vsel %vm1188, %v4011, 0
        %4108 = vmatprep.subr.mxu0 0.0
        %4109 = vmatpush1.msra.mxu0 %v3978
        %4110 = vmatprep.subr.mxu0 0.0
        %4111 = vmatpush1.msra.mxu0 0.0
        %4112 = vmatprep.subr.mxu0 0.0
        %4113 = vmatpush1.msra.mxu0 0.0
        %4114 = vmatprep.subr.mxu0 0.0
        %4115 = vmatpush1.msra.mxu0 0.0
        %4116 = vmatprep.subr.mxu0 0.0
        %4117 = vmatpush1.msra.mxu0 0.0
        %4118 = vmatprep.subr.mxu0 0.0
        %4119 = vmatpush1.msra.mxu0 0.0
        %4120 = vmatprep.subr.mxu0 0.0
        %4121 = vmatpush1.msra.mxu0 0.0
        %4122 = vmatprep.subr.mxu0 0.0
        %4123 = vmatpush1.msra.mxu0 0.0
        %4124 = vmatprep.subr.mxu0 0.0
        %4125 = vmatpush1.msra.mxu0 0.0
        %4126 = vmatprep.subr.mxu0 0.0
        %4127 = vmatpush1.msra.mxu0 0.0
        %4128 = vmatprep.subr.mxu0 0.0
        %4129 = vmatpush1.msra.mxu0 0.0
        %4130 = vmatprep.subr.mxu0 0.0
        %4131 = vmatpush1.msra.mxu0 0.0
        %4132 = vmatprep.subr.mxu0 0.0
        %4133 = vmatpush1.msra.mxu0 0.0
        %4134 = vmatprep.subr.mxu0 0.0
        %4135 = vmatpush1.msra.mxu0 0.0
        %4136 = vmatprep.subr.mxu0 0.0
        %4137 = vmatpush1.msra.mxu0 0.0
        %4138 = vmatprep.subr.mxu0 0.0
        %4139 = vmatpush1.msra.mxu0 0.0
        %4140 = vmatprep.subr.mxu0 0.0
        %4141 = vmatpush1.msra.mxu0 0.0
        %4142 = vmatprep.subr.mxu0 0.0
        %4143 = vmatpush1.msra.mxu0 0.0
        %4144 = vmatprep.subr.mxu0 0.0
        %4145 = vmatpush1.msra.mxu0 0.0
        %4146 = vmatprep.subr.mxu0 0.0
        %4147 = vmatpush1.msra.mxu0 0.0
        %4148 = vmatprep.subr.mxu0 0.0
        %4149 = vmatpush1.msra.mxu0 0.0
        %4150 = vmatprep.subr.mxu0 0.0
        %4151 = vmatpush1.msra.mxu0 0.0
        %4152 = vmatprep.subr.mxu0 0.0
        %4153 = vmatpush1.msra.mxu0 0.0
        %4154 = vmatprep.subr.mxu0 0.0
        %4155 = vmatpush1.msra.mxu0 0.0
        %4156 = vmatprep.subr.mxu0 0.0
        %4157 = vmatpush1.msra.mxu0 0.0
        %4158 = vmatprep.subr.mxu0 0.0
        %4159 = vmatpush1.msra.mxu0 0.0
        %4160 = vmatprep.subr.mxu0 0.0
        %4161 = vmatpush1.msra.mxu0 0.0
        %4162 = vmatprep.subr.mxu0 0.0
        %4163 = vmatpush1.msra.mxu0 0.0
        %4164 = vmatprep.subr.mxu0 0.0
        %4165 = vmatpush1.msra.mxu0 0.0
        %4166 = vmatprep.subr.mxu0 0.0
        %4167 = vmatpush1.msra.mxu0 0.0
        %4168 = vmatprep.subr.mxu0 0.0
        %4169 = vmatpush1.msra.mxu0 0.0
        %4170 = vmatprep.subr.mxu0 0.0
        %4171 = vmatpush1.msra.mxu0 0.0
        %4172 = vmatprep.mubr.f32.mxu0 0.0
        %4173 = vmatmul.mubr.f32.gmra.mrb[0].mxu0 %v4013
        %v4174 = vpop.f32.mrb[0].mxu0
        %v4175 = vadd.f32 0.0, %v4174
        %v4176 = vpop.f32.mrb[0].mxu0
        %4177 = vmatprep.mubr.f32.mxu0 0.0
        %4178 = vmatmul.mubr.f32.gmra.mrb[0].mxu0 %v4016
        %v4179 = vpop.f32.mrb[0].mxu0
        %v4180 = vadd.f32 0.0, %v4179
        %v4181 = vpop.f32.mrb[0].mxu0
        %4182 = vmatprep.mubr.f32.mxu0 0.0
        %4183 = vmatmul.mubr.f32.gmra.mrb[0].mxu0 %v4019
        %v4184 = vpop.f32.mrb[0].mxu0
        %v4185 = vadd.f32 0.0, %v4184
        %v4186 = vpop.f32.mrb[0].mxu0
        %4187 = vmatprep.mubr.f32.mxu0 0.0
        %4188 = vmatmul.mubr.f32.gmra.mrb[0].mxu0 %v4022
        %v4189 = vpop.f32.mrb[0].mxu0
        %v4190 = vadd.f32 0.0, %v4189
        %v4191 = vpop.f32.mrb[0].mxu0
        %4192 = vmatprep.mubr.f32.mxu0 0.0
        %4193 = vmatmul.mubr.f32.gmra.mrb[0].mxu0 %v4025
        %v4194 = vpop.f32.mrb[0].mxu0
        %v4195 = vadd.f32 0.0, %v4194
        %v4196 = vpop.f32.mrb[0].mxu0
        %4197 = vmatprep.mubr.f32.mxu0 0.0
        %4198 = vmatmul.mubr.f32.gmra.mrb[0].mxu0 %v4028
        %v4199 = vpop.f32.mrb[0].mxu0
        %v4200 = vadd.f32 0.0, %v4199
        %v4201 = vpop.f32.mrb[0].mxu0
        %4202 = vmatprep.mubr.f32.mxu0 0.0
        %4203 = vmatmul.mubr.f32.gmra.mrb[0].mxu0 %v4031
        %v4204 = vpop.f32.mrb[0].mxu0
        %v4205 = vadd.f32 0.0, %v4204
        %v4206 = vpop.f32.mrb[0].mxu0
        %4207 = vmatprep.mubr.f32.mxu0 0.0
        %4208 = vmatmul.mubr.f32.gmra.mrb[0].mxu0 %v4034
        %v4209 = vpop.f32.mrb[0].mxu0
        %v4210 = vadd.f32 0.0, %v4209
        %v4211 = vpop.f32.mrb[0].mxu0
        %4212 = vmatprep.mubr.f32.mxu0 0.0
        %4213 = vmatmul.mubr.f32.gmra.mrb[0].mxu0 %v4037
        %v4214 = vpop.f32.mrb[0].mxu0
        %v4215 = vadd.f32 0.0, %v4214
        %v4216 = vpop.f32.mrb[0].mxu0
        %4217 = vmatprep.mubr.f32.mxu0 0.0
        %4218 = vmatmul.mubr.f32.gmra.mrb[0].mxu0 %v4040
        %v4219 = vpop.f32.mrb[0].mxu0
        %v4220 = vadd.f32 0.0, %v4219
        %v4221 = vpop.f32.mrb[0].mxu0
        %4222 = vmatprep.mubr.f32.mxu0 0.0
        %4223 = vmatmul.mubr.f32.gmra.mrb[0].mxu0 %v4043
        %v4224 = vpop.f32.mrb[0].mxu0
        %v4225 = vadd.f32 0.0, %v4224
        %v4226 = vpop.f32.mrb[0].mxu0
        %4227 = vmatprep.mubr.f32.mxu0 0.0
        %4228 = vmatmul.mubr.f32.gmra.mrb[0].mxu0 %v4046
        %v4229 = vpop.f32.mrb[0].mxu0
        %v4230 = vadd.f32 0.0, %v4229
        %v4231 = vpop.f32.mrb[0].mxu0
        %4232 = vmatprep.mubr.f32.mxu0 0.0
        %4233 = vmatmul.mubr.f32.gmra.mrb[0].mxu0 %v4049
        %v4234 = vpop.f32.mrb[0].mxu0
        %v4235 = vadd.f32 0.0, %v4234
        %v4236 = vpop.f32.mrb[0].mxu0
        %4237 = vmatprep.mubr.f32.mxu0 0.0
        %4238 = vmatmul.mubr.f32.gmra.mrb[0].mxu0 %v4052
        %v4239 = vpop.f32.mrb[0].mxu0
        %v4240 = vadd.f32 0.0, %v4239
        %v4241 = vpop.f32.mrb[0].mxu0
        %4242 = vmatprep.mubr.f32.mxu0 0.0
        %4243 = vmatmul.mubr.f32.gmra.mrb[0].mxu0 %v4055
        %v4244 = vpop.f32.mrb[0].mxu0
        %v4245 = vadd.f32 0.0, %v4244
        %v4246 = vpop.f32.mrb[0].mxu0
        %4247 = vmatprep.mubr.f32.mxu0 0.0
        %4248 = vmatmul.mubr.f32.gmra.mrb[0].mxu0 %v4058
        %v4249 = vpop.f32.mrb[0].mxu0
        %v4250 = vadd.f32 0.0, %v4249
        %v4251 = vpop.f32.mrb[0].mxu0
        %4252 = vmatprep.mubr.f32.mxu0 0.0
        %4253 = vmatmul.mubr.f32.gmra.mrb[0].mxu0 %v4061
        %v4254 = vpop.f32.mrb[0].mxu0
        %v4255 = vadd.f32 0.0, %v4254
        %v4256 = vpop.f32.mrb[0].mxu0
        %4257 = vmatprep.mubr.f32.mxu0 0.0
        %4258 = vmatmul.mubr.f32.gmra.mrb[0].mxu0 %v4064
        %v4259 = vpop.f32.mrb[0].mxu0
        %v4260 = vadd.f32 0.0, %v4259
        %v4261 = vpop.f32.mrb[0].mxu0
        %4262 = vmatprep.mubr.f32.mxu0 0.0
        %4263 = vmatmul.mubr.f32.gmra.mrb[0].mxu0 %v4067
        %v4264 = vpop.f32.mrb[0].mxu0
        %v4265 = vadd.f32 0.0, %v4264
        %v4266 = vpop.f32.mrb[0].mxu0
        %4267 = vmatprep.mubr.f32.mxu0 0.0
        %4268 = vmatmul.mubr.f32.gmra.mrb[0].mxu0 %v4070
        %v4269 = vpop.f32.mrb[0].mxu0
        %v4270 = vadd.f32 0.0, %v4269
        %v4271 = vpop.f32.mrb[0].mxu0
        %4272 = vmatprep.mubr.f32.mxu0 0.0
        %4273 = vmatmul.mubr.f32.gmra.mrb[0].mxu0 %v4073
        %v4274 = vpop.f32.mrb[0].mxu0
        %v4275 = vadd.f32 0.0, %v4274
        %v4276 = vpop.f32.mrb[0].mxu0
        %4277 = vmatprep.mubr.f32.mxu0 0.0
        %4278 = vmatmul.mubr.f32.gmra.mrb[0].mxu0 %v4076
        %v4279 = vpop.f32.mrb[0].mxu0
        %v4280 = vadd.f32 0.0, %v4279
        %v4281 = vpop.f32.mrb[0].mxu0
        %4282 = vmatprep.mubr.f32.mxu0 0.0
        %4283 = vmatmul.mubr.f32.gmra.mrb[0].mxu0 %v4079
        %v4284 = vpop.f32.mrb[0].mxu0
        %v4285 = vadd.f32 0.0, %v4284
        %v4286 = vpop.f32.mrb[0].mxu0
        %4287 = vmatprep.mubr.f32.mxu0 0.0
        %4288 = vmatmul.mubr.f32.gmra.mrb[0].mxu0 %v4082
        %v4289 = vpop.f32.mrb[0].mxu0
        %v4290 = vadd.f32 0.0, %v4289
        %v4291 = vpop.f32.mrb[0].mxu0
        %4292 = vmatprep.mubr.f32.mxu0 0.0
        %4293 = vmatmul.mubr.f32.gmra.mrb[0].mxu0 %v4085
        %v4294 = vpop.f32.mrb[0].mxu0
        %v4295 = vadd.f32 0.0, %v4294
        %v4296 = vpop.f32.mrb[0].mxu0
        %4297 = vmatprep.mubr.f32.mxu0 0.0
        %4298 = vmatmul.mubr.f32.gmra.mrb[0].mxu0 %v4088
        %v4299 = vpop.f32.mrb[0].mxu0
        %v4300 = vadd.f32 0.0, %v4299
        %v4301 = vpop.f32.mrb[0].mxu0
        %4302 = vmatprep.mubr.f32.mxu0 0.0
        %4303 = vmatmul.mubr.f32.gmra.mrb[0].mxu0 %v4091
        %v4304 = vpop.f32.mrb[0].mxu0
        %v4305 = vadd.f32 0.0, %v4304
        %v4306 = vpop.f32.mrb[0].mxu0
        %4307 = vmatprep.mubr.f32.mxu0 0.0
        %4308 = vmatmul.mubr.f32.gmra.mrb[0].mxu0 %v4094
        %v4309 = vpop.f32.mrb[0].mxu0
        %v4310 = vadd.f32 0.0, %v4309
        %v4311 = vpop.f32.mrb[0].mxu0
        %4312 = vmatprep.mubr.f32.mxu0 0.0
        %4313 = vmatmul.mubr.f32.gmra.mrb[0].mxu0 %v4097
        %v4314 = vpop.f32.mrb[0].mxu0
        %v4315 = vadd.f32 0.0, %v4314
        %v4316 = vpop.f32.mrb[0].mxu0
        %4317 = vmatprep.mubr.f32.mxu0 0.0
        %4318 = vmatmul.mubr.f32.gmra.mrb[0].mxu0 %v4100
        %v4319 = vpop.f32.mrb[0].mxu0
        %v4320 = vadd.f32 0.0, %v4319
        %v4321 = vpop.f32.mrb[0].mxu0
        %4322 = vmatprep.mubr.f32.mxu0 0.0
        %4323 = vmatmul.mubr.f32.gmra.mrb[0].mxu0 %v4103
        %v4324 = vpop.f32.mrb[0].mxu0
        %v4325 = vadd.f32 0.0, %v4324
        %v4326 = vpop.f32.mrb[0].mxu0
        %4327 = vmatprep.mubr.f32.mxu0 0.0
        %4328 = vmatmul.mubr.f32.gmra.mrb[0].mxu0 %v4106
        %v4329 = vpop.f32.mrb[0].mxu0
        %v4330 = vadd.f32 0.0, %v4329
        %v4331 = vpop.f32.mrb[0].mxu0
        %4332 = vdwg.mxu0
        %v4333 = vlaneseq
        %v4334 = vshrl.u32 %v4333, 7
        %v4335 = vsub.s32 6, %v4334
        %v4336 = vrot.slane %v1035, %v4335
        %vm4337 = vcmp.eq.s32.totalorder %v1117, %v4336
        %vm4338 = vcmp.eq.s32.totalorder %v1118, %v4336
        %vm4339 = vcmp.eq.s32.totalorder %v1119, %v4336
        %vm4340 = vcmp.eq.s32.totalorder %v1120, %v4336
        %vm4341 = vcmp.eq.s32.totalorder %v1121, %v4336
        %vm4342 = vcmp.eq.s32.totalorder %v1122, %v4336
        %vm4343 = vcmp.eq.s32.totalorder %v1123, %v4336
        %vm4344 = vcmp.eq.s32.totalorder %v1124, %v4336
        %vm4345 = vcmp.eq.s32.totalorder %v1125, %v4336
        %vm4346 = vcmp.eq.s32.totalorder %v1126, %v4336
        %vm4347 = vcmp.eq.s32.totalorder %v1127, %v4336
        %vm4348 = vcmp.eq.s32.totalorder %v1128, %v4336
        %vm4349 = vcmp.eq.s32.totalorder %v1129, %v4336
        %vm4350 = vcmp.eq.s32.totalorder %v1130, %v4336
        %vm4351 = vcmp.eq.s32.totalorder %v1131, %v4336
        %vm4352 = vcmp.eq.s32.totalorder %v1132, %v4336
        %vm4353 = vcmp.eq.s32.totalorder %v1133, %v4336
        %vm4354 = vcmp.eq.s32.totalorder %v1134, %v4336
        %vm4355 = vcmp.eq.s32.totalorder %v1135, %v4336
        %vm4356 = vcmp.eq.s32.totalorder %v1136, %v4336
        %vm4357 = vcmp.eq.s32.totalorder %v1137, %v4336
        %vm4358 = vcmp.eq.s32.totalorder %v1138, %v4336
        %vm4359 = vcmp.eq.s32.totalorder %v1139, %v4336
        %vm4360 = vcmp.eq.s32.totalorder %v1140, %v4336
        %vm4361 = vcmp.eq.s32.totalorder %v1141, %v4336
        %vm4362 = vcmp.eq.s32.totalorder %v1142, %v4336
        %vm4363 = vcmp.eq.s32.totalorder %v1143, %v4336
        %vm4364 = vcmp.eq.s32.totalorder %v1144, %v4336
        %vm4365 = vcmp.eq.s32.totalorder %v1145, %v4336
        %vm4366 = vcmp.eq.s32.totalorder %v1146, %v4336
        %vm4367 = vcmp.eq.s32.totalorder %v1147, %v4336
        %vm4368 = vcmp.eq.s32.totalorder %v1148, %v4336
        %v4369 = vsel %vm4337, %v4175, 0.0
        %v4370 = vsel %vm4338, %v4180, 0.0
        %v4371 = vsel %vm4339, %v4185, 0.0
        %v4372 = vsel %vm4340, %v4190, 0.0
        %v4373 = vsel %vm4341, %v4195, 0.0
        %v4374 = vsel %vm4342, %v4200, 0.0
        %v4375 = vsel %vm4343, %v4205, 0.0
        %v4376 = vsel %vm4344, %v4210, 0.0
        %v4377 = vsel %vm4345, %v4215, 0.0
        %v4378 = vsel %vm4346, %v4220, 0.0
        %v4379 = vsel %vm4347, %v4225, 0.0
        %v4380 = vsel %vm4348, %v4230, 0.0
        %v4381 = vsel %vm4349, %v4235, 0.0
        %v4382 = vsel %vm4350, %v4240, 0.0
        %v4383 = vsel %vm4351, %v4245, 0.0
        %v4384 = vsel %vm4352, %v4250, 0.0
        %v4385 = vsel %vm4353, %v4255, 0.0
        %v4386 = vsel %vm4354, %v4260, 0.0
        %v4387 = vsel %vm4355, %v4265, 0.0
        %v4388 = vsel %vm4356, %v4270, 0.0
        %v4389 = vsel %vm4357, %v4275, 0.0
        %v4390 = vsel %vm4358, %v4280, 0.0
        %v4391 = vsel %vm4359, %v4285, 0.0
        %v4392 = vsel %vm4360, %v4290, 0.0
        %v4393 = vsel %vm4361, %v4295, 0.0
        %v4394 = vsel %vm4362, %v4300, 0.0
        %v4395 = vsel %vm4363, %v4305, 0.0
        %v4396 = vsel %vm4364, %v4310, 0.0
        %v4397 = vsel %vm4365, %v4315, 0.0
        %v4398 = vsel %vm4366, %v4320, 0.0
        %v4399 = vsel %vm4367, %v4325, 0.0
        %v4400 = vsel %vm4368, %v4330, 0.0
        %v4401 = vadd.f32 %v4369, %v4370
        %v4402 = vadd.f32 %v4401, %v4371
        %v4403 = vadd.f32 %v4402, %v4372
        %v4404 = vadd.f32 %v4403, %v4373
        %v4405 = vadd.f32 %v4404, %v4374
        %v4406 = vadd.f32 %v4405, %v4375
        %v4407 = vadd.f32 %v4406, %v4376
        %v4408 = vadd.f32 %v4407, %v4377
        %v4409 = vadd.f32 %v4408, %v4378
        %v4410 = vadd.f32 %v4409, %v4379
        %v4411 = vadd.f32 %v4410, %v4380
        %v4412 = vadd.f32 %v4411, %v4381
        %v4413 = vadd.f32 %v4412, %v4382
        %v4414 = vadd.f32 %v4413, %v4383
        %v4415 = vadd.f32 %v4414, %v4384
        %v4416 = vadd.f32 %v4415, %v4385
        %v4417 = vadd.f32 %v4416, %v4386
        %v4418 = vadd.f32 %v4417, %v4387
        %v4419 = vadd.f32 %v4418, %v4388
        %v4420 = vadd.f32 %v4419, %v4389
        %v4421 = vadd.f32 %v4420, %v4390
        %v4422 = vadd.f32 %v4421, %v4391
        %v4423 = vadd.f32 %v4422, %v4392
        %v4424 = vadd.f32 %v4423, %v4393
        %v4425 = vadd.f32 %v4424, %v4394
        %v4426 = vadd.f32 %v4425, %v4395
        %v4427 = vadd.f32 %v4426, %v4396
        %v4428 = vadd.f32 %v4427, %v4397
        %v4429 = vadd.f32 %v4428, %v4398
        %v4430 = vadd.f32 %v4429, %v4399
        %v4431 = vadd.f32 %v4430, %v4400
        %v4432 = vrot.slane %v4431, 4
        %v4433 = vadd.f32 %v4431, %v4432
        %v4434 = vrot.slane %v4433, 2
        %v4435 = vadd.f32 %v4433, %v4434
        %v4436 = vrot.slane %v4435, 1
        %v4437 = vadd.f32 %v4435, %v4436
        %v4438 = vmul.f32 %v1108, %v4437
        %v4440 = vrot.slane %v4438, 6
        %v4442 = vadd.f32 %v3971, %v4440
        %v4443 = vlaneseq
        %v4444 = vshrl.u32 %v4443, 7
        %v4445 = vsub.s32 7, %v4444
        %v4446 = vrot.slane %v1003, %v4445
        %vm4447 = vcmp.eq.s32.totalorder %v1117, %v4446
        %v4448 = vsel %vm4447, 1, 0
        %v4449 = vcvt.s32.f32 %v4448
        %s4450 = scalar_lea.vmem %s11, 1792
        %v4451 = vld [vmem:[%s4450] sm:$0xff]
        %v4452 = vld [vmem:[%s4450 + $0x8] sm:$0xff]
        %v4453 = vld [vmem:[%s4450 + $0x10] sm:$0xff]
        %v4454 = vld [vmem:[%s4450 + $0x18] sm:$0xff]
        %v4455 = vld [vmem:[%s4450 + $0x20] sm:$0xff]
        %v4456 = vld [vmem:[%s4450 + $0x28] sm:$0xff]
        %v4457 = vld [vmem:[%s4450 + $0x30] sm:$0xff]
        %v4458 = vld [vmem:[%s4450 + $0x38] sm:$0xff]
        %v4459 = vld [vmem:[%s4450 + $0x40] sm:$0xff]
        %v4460 = vld [vmem:[%s4450 + $0x48] sm:$0xff]
        %v4461 = vld [vmem:[%s4450 + $0x50] sm:$0xff]
        %v4462 = vld [vmem:[%s4450 + $0x58] sm:$0xff]
        %v4463 = vld [vmem:[%s4450 + $0x60] sm:$0xff]
        %v4464 = vld [vmem:[%s4450 + $0x68] sm:$0xff]
        %v4465 = vld [vmem:[%s4450 + $0x70] sm:$0xff]
        %v4466 = vld [vmem:[%s4450 + $0x78] sm:$0xff]
        %v4467 = vld [vmem:[%s4450 + $0x80] sm:$0xff]
        %v4468 = vld [vmem:[%s4450 + $0x88] sm:$0xff]
        %v4469 = vld [vmem:[%s4450 + $0x90] sm:$0xff]
        %v4470 = vld [vmem:[%s4450 + $0x98] sm:$0xff]
        %v4471 = vld [vmem:[%s4450 + $0xa0] sm:$0xff]
        %v4472 = vld [vmem:[%s4450 + $0xa8] sm:$0xff]
        %v4473 = vld [vmem:[%s4450 + $0xb0] sm:$0xff]
        %v4474 = vld [vmem:[%s4450 + $0xb8] sm:$0xff]
        %v4475 = vld [vmem:[%s4450 + $0xc0] sm:$0xff]
        %v4476 = vld [vmem:[%s4450 + $0xc8] sm:$0xff]
        %v4477 = vld [vmem:[%s4450 + $0xd0] sm:$0xff]
        %v4478 = vld [vmem:[%s4450 + $0xd8] sm:$0xff]
        %v4479 = vld [vmem:[%s4450 + $0xe0] sm:$0xff]
        %v4480 = vld [vmem:[%s4450 + $0xe8] sm:$0xff]
        %v4481 = vld [vmem:[%s4450 + $0xf0] sm:$0xff]
        %v4482 = vld [vmem:[%s4450 + $0xf8] sm:$0xff]
        %v4484 = vsel %vm1188, %v4451, 0
        %v4487 = vsel %vm1188, %v4452, 0
        %v4490 = vsel %vm1188, %v4453, 0
        %v4493 = vsel %vm1188, %v4454, 0
        %v4496 = vsel %vm1188, %v4455, 0
        %v4499 = vsel %vm1188, %v4456, 0
        %v4502 = vsel %vm1188, %v4457, 0
        %v4505 = vsel %vm1188, %v4458, 0
        %v4508 = vsel %vm1188, %v4459, 0
        %v4511 = vsel %vm1188, %v4460, 0
        %v4514 = vsel %vm1188, %v4461, 0
        %v4517 = vsel %vm1188, %v4462, 0
        %v4520 = vsel %vm1188, %v4463, 0
        %v4523 = vsel %vm1188, %v4464, 0
        %v4526 = vsel %vm1188, %v4465, 0
        %v4529 = vsel %vm1188, %v4466, 0
        %v4532 = vsel %vm1188, %v4467, 0
        %v4535 = vsel %vm1188, %v4468, 0
        %v4538 = vsel %vm1188, %v4469, 0
        %v4541 = vsel %vm1188, %v4470, 0
        %v4544 = vsel %vm1188, %v4471, 0
        %v4547 = vsel %vm1188, %v4472, 0
        %v4550 = vsel %vm1188, %v4473, 0
        %v4553 = vsel %vm1188, %v4474, 0
        %v4556 = vsel %vm1188, %v4475, 0
        %v4559 = vsel %vm1188, %v4476, 0
        %v4562 = vsel %vm1188, %v4477, 0
        %v4565 = vsel %vm1188, %v4478, 0
        %v4568 = vsel %vm1188, %v4479, 0
        %v4571 = vsel %vm1188, %v4480, 0
        %v4574 = vsel %vm1188, %v4481, 0
        %v4577 = vsel %vm1188, %v4482, 0
        %4579 = vmatprep.subr.mxu0 0.0
        %4580 = vmatpush1.msra.mxu0 %v4449
        %4581 = vmatprep.subr.mxu0 0.0
        %4582 = vmatpush1.msra.mxu0 0.0
        %4583 = vmatprep.subr.mxu0 0.0
        %4584 = vmatpush1.msra.mxu0 0.0
        %4585 = vmatprep.subr.mxu0 0.0
        %4586 = vmatpush1.msra.mxu0 0.0
        %4587 = vmatprep.subr.mxu0 0.0
        %4588 = vmatpush1.msra.mxu0 0.0
        %4589 = vmatprep.subr.mxu0 0.0
        %4590 = vmatpush1.msra.mxu0 0.0
        %4591 = vmatprep.subr.mxu0 0.0
        %4592 = vmatpush1.msra.mxu0 0.0
        %4593 = vmatprep.subr.mxu0 0.0
        %4594 = vmatpush1.msra.mxu0 0.0
        %4595 = vmatprep.subr.mxu0 0.0
        %4596 = vmatpush1.msra.mxu0 0.0
        %4597 = vmatprep.subr.mxu0 0.0
        %4598 = vmatpush1.msra.mxu0 0.0
        %4599 = vmatprep.subr.mxu0 0.0
        %4600 = vmatpush1.msra.mxu0 0.0
        %4601 = vmatprep.subr.mxu0 0.0
        %4602 = vmatpush1.msra.mxu0 0.0
        %4603 = vmatprep.subr.mxu0 0.0
        %4604 = vmatpush1.msra.mxu0 0.0
        %4605 = vmatprep.subr.mxu0 0.0
        %4606 = vmatpush1.msra.mxu0 0.0
        %4607 = vmatprep.subr.mxu0 0.0
        %4608 = vmatpush1.msra.mxu0 0.0
        %4609 = vmatprep.subr.mxu0 0.0
        %4610 = vmatpush1.msra.mxu0 0.0
        %4611 = vmatprep.subr.mxu0 0.0
        %4612 = vmatpush1.msra.mxu0 0.0
        %4613 = vmatprep.subr.mxu0 0.0
        %4614 = vmatpush1.msra.mxu0 0.0
        %4615 = vmatprep.subr.mxu0 0.0
        %4616 = vmatpush1.msra.mxu0 0.0
        %4617 = vmatprep.subr.mxu0 0.0
        %4618 = vmatpush1.msra.mxu0 0.0
        %4619 = vmatprep.subr.mxu0 0.0
        %4620 = vmatpush1.msra.mxu0 0.0
        %4621 = vmatprep.subr.mxu0 0.0
        %4622 = vmatpush1.msra.mxu0 0.0
        %4623 = vmatprep.subr.mxu0 0.0
        %4624 = vmatpush1.msra.mxu0 0.0
        %4625 = vmatprep.subr.mxu0 0.0
        %4626 = vmatpush1.msra.mxu0 0.0
        %4627 = vmatprep.subr.mxu0 0.0
        %4628 = vmatpush1.msra.mxu0 0.0
        %4629 = vmatprep.subr.mxu0 0.0
        %4630 = vmatpush1.msra.mxu0 0.0
        %4631 = vmatprep.subr.mxu0 0.0
        %4632 = vmatpush1.msra.mxu0 0.0
        %4633 = vmatprep.subr.mxu0 0.0
        %4634 = vmatpush1.msra.mxu0 0.0
        %4635 = vmatprep.subr.mxu0 0.0
        %4636 = vmatpush1.msra.mxu0 0.0
        %4637 = vmatprep.subr.mxu0 0.0
        %4638 = vmatpush1.msra.mxu0 0.0
        %4639 = vmatprep.subr.mxu0 0.0
        %4640 = vmatpush1.msra.mxu0 0.0
        %4641 = vmatprep.subr.mxu0 0.0
        %4642 = vmatpush1.msra.mxu0 0.0
        %4643 = vmatprep.mubr.f32.mxu0 0.0
        %4644 = vmatmul.mubr.f32.gmra.mrb[0].mxu0 %v4484
        %v4645 = vpop.f32.mrb[0].mxu0
        %v4646 = vadd.f32 0.0, %v4645
        %v4647 = vpop.f32.mrb[0].mxu0
        %4648 = vmatprep.mubr.f32.mxu0 0.0
        %4649 = vmatmul.mubr.f32.gmra.mrb[0].mxu0 %v4487
        %v4650 = vpop.f32.mrb[0].mxu0
        %v4651 = vadd.f32 0.0, %v4650
        %v4652 = vpop.f32.mrb[0].mxu0
        %4653 = vmatprep.mubr.f32.mxu0 0.0
        %4654 = vmatmul.mubr.f32.gmra.mrb[0].mxu0 %v4490
        %v4655 = vpop.f32.mrb[0].mxu0
        %v4656 = vadd.f32 0.0, %v4655
        %v4657 = vpop.f32.mrb[0].mxu0
        %4658 = vmatprep.mubr.f32.mxu0 0.0
        %4659 = vmatmul.mubr.f32.gmra.mrb[0].mxu0 %v4493
        %v4660 = vpop.f32.mrb[0].mxu0
        %v4661 = vadd.f32 0.0, %v4660
        %v4662 = vpop.f32.mrb[0].mxu0
        %4663 = vmatprep.mubr.f32.mxu0 0.0
        %4664 = vmatmul.mubr.f32.gmra.mrb[0].mxu0 %v4496
        %v4665 = vpop.f32.mrb[0].mxu0
        %v4666 = vadd.f32 0.0, %v4665
        %v4667 = vpop.f32.mrb[0].mxu0
        %4668 = vmatprep.mubr.f32.mxu0 0.0
        %4669 = vmatmul.mubr.f32.gmra.mrb[0].mxu0 %v4499
        %v4670 = vpop.f32.mrb[0].mxu0
        %v4671 = vadd.f32 0.0, %v4670
        %v4672 = vpop.f32.mrb[0].mxu0
        %4673 = vmatprep.mubr.f32.mxu0 0.0
        %4674 = vmatmul.mubr.f32.gmra.mrb[0].mxu0 %v4502
        %v4675 = vpop.f32.mrb[0].mxu0
        %v4676 = vadd.f32 0.0, %v4675
        %v4677 = vpop.f32.mrb[0].mxu0
        %4678 = vmatprep.mubr.f32.mxu0 0.0
        %4679 = vmatmul.mubr.f32.gmra.mrb[0].mxu0 %v4505
        %v4680 = vpop.f32.mrb[0].mxu0
        %v4681 = vadd.f32 0.0, %v4680
        %v4682 = vpop.f32.mrb[0].mxu0
        %4683 = vmatprep.mubr.f32.mxu0 0.0
        %4684 = vmatmul.mubr.f32.gmra.mrb[0].mxu0 %v4508
        %v4685 = vpop.f32.mrb[0].mxu0
        %v4686 = vadd.f32 0.0, %v4685
        %v4687 = vpop.f32.mrb[0].mxu0
        %4688 = vmatprep.mubr.f32.mxu0 0.0
        %4689 = vmatmul.mubr.f32.gmra.mrb[0].mxu0 %v4511
        %v4690 = vpop.f32.mrb[0].mxu0
        %v4691 = vadd.f32 0.0, %v4690
        %v4692 = vpop.f32.mrb[0].mxu0
        %4693 = vmatprep.mubr.f32.mxu0 0.0
        %4694 = vmatmul.mubr.f32.gmra.mrb[0].mxu0 %v4514
        %v4695 = vpop.f32.mrb[0].mxu0
        %v4696 = vadd.f32 0.0, %v4695
        %v4697 = vpop.f32.mrb[0].mxu0
        %4698 = vmatprep.mubr.f32.mxu0 0.0
        %4699 = vmatmul.mubr.f32.gmra.mrb[0].mxu0 %v4517
        %v4700 = vpop.f32.mrb[0].mxu0
        %v4701 = vadd.f32 0.0, %v4700
        %v4702 = vpop.f32.mrb[0].mxu0
        %4703 = vmatprep.mubr.f32.mxu0 0.0
        %4704 = vmatmul.mubr.f32.gmra.mrb[0].mxu0 %v4520
        %v4705 = vpop.f32.mrb[0].mxu0
        %v4706 = vadd.f32 0.0, %v4705
        %v4707 = vpop.f32.mrb[0].mxu0
        %4708 = vmatprep.mubr.f32.mxu0 0.0
        %4709 = vmatmul.mubr.f32.gmra.mrb[0].mxu0 %v4523
        %v4710 = vpop.f32.mrb[0].mxu0
        %v4711 = vadd.f32 0.0, %v4710
        %v4712 = vpop.f32.mrb[0].mxu0
        %4713 = vmatprep.mubr.f32.mxu0 0.0
        %4714 = vmatmul.mubr.f32.gmra.mrb[0].mxu0 %v4526
        %v4715 = vpop.f32.mrb[0].mxu0
        %v4716 = vadd.f32 0.0, %v4715
        %v4717 = vpop.f32.mrb[0].mxu0
        %4718 = vmatprep.mubr.f32.mxu0 0.0
        %4719 = vmatmul.mubr.f32.gmra.mrb[0].mxu0 %v4529
        %v4720 = vpop.f32.mrb[0].mxu0
        %v4721 = vadd.f32 0.0, %v4720
        %v4722 = vpop.f32.mrb[0].mxu0
        %4723 = vmatprep.mubr.f32.mxu0 0.0
        %4724 = vmatmul.mubr.f32.gmra.mrb[0].mxu0 %v4532
        %v4725 = vpop.f32.mrb[0].mxu0
        %v4726 = vadd.f32 0.0, %v4725
        %v4727 = vpop.f32.mrb[0].mxu0
        %4728 = vmatprep.mubr.f32.mxu0 0.0
        %4729 = vmatmul.mubr.f32.gmra.mrb[0].mxu0 %v4535
        %v4730 = vpop.f32.mrb[0].mxu0
        %v4731 = vadd.f32 0.0, %v4730
        %v4732 = vpop.f32.mrb[0].mxu0
        %4733 = vmatprep.mubr.f32.mxu0 0.0
        %4734 = vmatmul.mubr.f32.gmra.mrb[0].mxu0 %v4538
        %v4735 = vpop.f32.mrb[0].mxu0
        %v4736 = vadd.f32 0.0, %v4735
        %v4737 = vpop.f32.mrb[0].mxu0
        %4738 = vmatprep.mubr.f32.mxu0 0.0
        %4739 = vmatmul.mubr.f32.gmra.mrb[0].mxu0 %v4541
        %v4740 = vpop.f32.mrb[0].mxu0
        %v4741 = vadd.f32 0.0, %v4740
        %v4742 = vpop.f32.mrb[0].mxu0
        %4743 = vmatprep.mubr.f32.mxu0 0.0
        %4744 = vmatmul.mubr.f32.gmra.mrb[0].mxu0 %v4544
        %v4745 = vpop.f32.mrb[0].mxu0
        %v4746 = vadd.f32 0.0, %v4745
        %v4747 = vpop.f32.mrb[0].mxu0
        %4748 = vmatprep.mubr.f32.mxu0 0.0
        %4749 = vmatmul.mubr.f32.gmra.mrb[0].mxu0 %v4547
        %v4750 = vpop.f32.mrb[0].mxu0
        %v4751 = vadd.f32 0.0, %v4750
        %v4752 = vpop.f32.mrb[0].mxu0
        %4753 = vmatprep.mubr.f32.mxu0 0.0
        %4754 = vmatmul.mubr.f32.gmra.mrb[0].mxu0 %v4550
        %v4755 = vpop.f32.mrb[0].mxu0
        %v4756 = vadd.f32 0.0, %v4755
        %v4757 = vpop.f32.mrb[0].mxu0
        %4758 = vmatprep.mubr.f32.mxu0 0.0
        %4759 = vmatmul.mubr.f32.gmra.mrb[0].mxu0 %v4553
        %v4760 = vpop.f32.mrb[0].mxu0
        %v4761 = vadd.f32 0.0, %v4760
        %v4762 = vpop.f32.mrb[0].mxu0
        %4763 = vmatprep.mubr.f32.mxu0 0.0
        %4764 = vmatmul.mubr.f32.gmra.mrb[0].mxu0 %v4556
        %v4765 = vpop.f32.mrb[0].mxu0
        %v4766 = vadd.f32 0.0, %v4765
        %v4767 = vpop.f32.mrb[0].mxu0
        %4768 = vmatprep.mubr.f32.mxu0 0.0
        %4769 = vmatmul.mubr.f32.gmra.mrb[0].mxu0 %v4559
        %v4770 = vpop.f32.mrb[0].mxu0
        %v4771 = vadd.f32 0.0, %v4770
        %v4772 = vpop.f32.mrb[0].mxu0
        %4773 = vmatprep.mubr.f32.mxu0 0.0
        %4774 = vmatmul.mubr.f32.gmra.mrb[0].mxu0 %v4562
        %v4775 = vpop.f32.mrb[0].mxu0
        %v4776 = vadd.f32 0.0, %v4775
        %v4777 = vpop.f32.mrb[0].mxu0
        %4778 = vmatprep.mubr.f32.mxu0 0.0
        %4779 = vmatmul.mubr.f32.gmra.mrb[0].mxu0 %v4565
        %v4780 = vpop.f32.mrb[0].mxu0
        %v4781 = vadd.f32 0.0, %v4780
        %v4782 = vpop.f32.mrb[0].mxu0
        %4783 = vmatprep.mubr.f32.mxu0 0.0
        %4784 = vmatmul.mubr.f32.gmra.mrb[0].mxu0 %v4568
        %v4785 = vpop.f32.mrb[0].mxu0
        %v4786 = vadd.f32 0.0, %v4785
        %v4787 = vpop.f32.mrb[0].mxu0
        %4788 = vmatprep.mubr.f32.mxu0 0.0
        %4789 = vmatmul.mubr.f32.gmra.mrb[0].mxu0 %v4571
        %v4790 = vpop.f32.mrb[0].mxu0
        %v4791 = vadd.f32 0.0, %v4790
        %v4792 = vpop.f32.mrb[0].mxu0
        %4793 = vmatprep.mubr.f32.mxu0 0.0
        %4794 = vmatmul.mubr.f32.gmra.mrb[0].mxu0 %v4574
        %v4795 = vpop.f32.mrb[0].mxu0
        %v4796 = vadd.f32 0.0, %v4795
        %v4797 = vpop.f32.mrb[0].mxu0
        %4798 = vmatprep.mubr.f32.mxu0 0.0
        %4799 = vmatmul.mubr.f32.gmra.mrb[0].mxu0 %v4577
        %v4800 = vpop.f32.mrb[0].mxu0
        %v4801 = vadd.f32 0.0, %v4800
        %v4802 = vpop.f32.mrb[0].mxu0
        %4803 = vdwg.mxu0
        %v4804 = vlaneseq
        %v4805 = vshrl.u32 %v4804, 7
        %v4806 = vsub.s32 7, %v4805
        %v4807 = vrot.slane %v1035, %v4806
        %vm4808 = vcmp.eq.s32.totalorder %v1117, %v4807
        %vm4809 = vcmp.eq.s32.totalorder %v1118, %v4807
        %vm4810 = vcmp.eq.s32.totalorder %v1119, %v4807
        %vm4811 = vcmp.eq.s32.totalorder %v1120, %v4807
        %vm4812 = vcmp.eq.s32.totalorder %v1121, %v4807
        %vm4813 = vcmp.eq.s32.totalorder %v1122, %v4807
        %vm4814 = vcmp.eq.s32.totalorder %v1123, %v4807
        %vm4815 = vcmp.eq.s32.totalorder %v1124, %v4807
        %vm4816 = vcmp.eq.s32.totalorder %v1125, %v4807
        %vm4817 = vcmp.eq.s32.totalorder %v1126, %v4807
        %vm4818 = vcmp.eq.s32.totalorder %v1127, %v4807
        %vm4819 = vcmp.eq.s32.totalorder %v1128, %v4807
        %vm4820 = vcmp.eq.s32.totalorder %v1129, %v4807
        %vm4821 = vcmp.eq.s32.totalorder %v1130, %v4807
        %vm4822 = vcmp.eq.s32.totalorder %v1131, %v4807
        %vm4823 = vcmp.eq.s32.totalorder %v1132, %v4807
        %vm4824 = vcmp.eq.s32.totalorder %v1133, %v4807
        %vm4825 = vcmp.eq.s32.totalorder %v1134, %v4807
        %vm4826 = vcmp.eq.s32.totalorder %v1135, %v4807
        %vm4827 = vcmp.eq.s32.totalorder %v1136, %v4807
        %vm4828 = vcmp.eq.s32.totalorder %v1137, %v4807
        %vm4829 = vcmp.eq.s32.totalorder %v1138, %v4807
        %vm4830 = vcmp.eq.s32.totalorder %v1139, %v4807
        %vm4831 = vcmp.eq.s32.totalorder %v1140, %v4807
        %vm4832 = vcmp.eq.s32.totalorder %v1141, %v4807
        %vm4833 = vcmp.eq.s32.totalorder %v1142, %v4807
        %vm4834 = vcmp.eq.s32.totalorder %v1143, %v4807
        %vm4835 = vcmp.eq.s32.totalorder %v1144, %v4807
        %vm4836 = vcmp.eq.s32.totalorder %v1145, %v4807
        %vm4837 = vcmp.eq.s32.totalorder %v1146, %v4807
        %vm4838 = vcmp.eq.s32.totalorder %v1147, %v4807
        %vm4839 = vcmp.eq.s32.totalorder %v1148, %v4807
        %v4840 = vsel %vm4808, %v4646, 0.0
        %v4841 = vsel %vm4809, %v4651, 0.0
        %v4842 = vsel %vm4810, %v4656, 0.0
        %v4843 = vsel %vm4811, %v4661, 0.0
        %v4844 = vsel %vm4812, %v4666, 0.0
        %v4845 = vsel %vm4813, %v4671, 0.0
        %v4846 = vsel %vm4814, %v4676, 0.0
        %v4847 = vsel %vm4815, %v4681, 0.0
        %v4848 = vsel %vm4816, %v4686, 0.0
        %v4849 = vsel %vm4817, %v4691, 0.0
        %v4850 = vsel %vm4818, %v4696, 0.0
        %v4851 = vsel %vm4819, %v4701, 0.0
        %v4852 = vsel %vm4820, %v4706, 0.0
        %v4853 = vsel %vm4821, %v4711, 0.0
        %v4854 = vsel %vm4822, %v4716, 0.0
        %v4855 = vsel %vm4823, %v4721, 0.0
        %v4856 = vsel %vm4824, %v4726, 0.0
        %v4857 = vsel %vm4825, %v4731, 0.0
        %v4858 = vsel %vm4826, %v4736, 0.0
        %v4859 = vsel %vm4827, %v4741, 0.0
        %v4860 = vsel %vm4828, %v4746, 0.0
        %v4861 = vsel %vm4829, %v4751, 0.0
        %v4862 = vsel %vm4830, %v4756, 0.0
        %v4863 = vsel %vm4831, %v4761, 0.0
        %v4864 = vsel %vm4832, %v4766, 0.0
        %v4865 = vsel %vm4833, %v4771, 0.0
        %v4866 = vsel %vm4834, %v4776, 0.0
        %v4867 = vsel %vm4835, %v4781, 0.0
        %v4868 = vsel %vm4836, %v4786, 0.0
        %v4869 = vsel %vm4837, %v4791, 0.0
        %v4870 = vsel %vm4838, %v4796, 0.0
        %v4871 = vsel %vm4839, %v4801, 0.0
        %v4872 = vadd.f32 %v4840, %v4841
        %v4873 = vadd.f32 %v4872, %v4842
        %v4874 = vadd.f32 %v4873, %v4843
        %v4875 = vadd.f32 %v4874, %v4844
        %v4876 = vadd.f32 %v4875, %v4845
        %v4877 = vadd.f32 %v4876, %v4846
        %v4878 = vadd.f32 %v4877, %v4847
        %v4879 = vadd.f32 %v4878, %v4848
        %v4880 = vadd.f32 %v4879, %v4849
        %v4881 = vadd.f32 %v4880, %v4850
        %v4882 = vadd.f32 %v4881, %v4851
        %v4883 = vadd.f32 %v4882, %v4852
        %v4884 = vadd.f32 %v4883, %v4853
        %v4885 = vadd.f32 %v4884, %v4854
        %v4886 = vadd.f32 %v4885, %v4855
        %v4887 = vadd.f32 %v4886, %v4856
        %v4888 = vadd.f32 %v4887, %v4857
        %v4889 = vadd.f32 %v4888, %v4858
        %v4890 = vadd.f32 %v4889, %v4859
        %v4891 = vadd.f32 %v4890, %v4860
        %v4892 = vadd.f32 %v4891, %v4861
        %v4893 = vadd.f32 %v4892, %v4862
        %v4894 = vadd.f32 %v4893, %v4863
        %v4895 = vadd.f32 %v4894, %v4864
        %v4896 = vadd.f32 %v4895, %v4865
        %v4897 = vadd.f32 %v4896, %v4866
        %v4898 = vadd.f32 %v4897, %v4867
        %v4899 = vadd.f32 %v4898, %v4868
        %v4900 = vadd.f32 %v4899, %v4869
        %v4901 = vadd.f32 %v4900, %v4870
        %v4902 = vadd.f32 %v4901, %v4871
        %v4903 = vrot.slane %v4902, 4
        %v4904 = vadd.f32 %v4902, %v4903
        %v4905 = vrot.slane %v4904, 2
        %v4906 = vadd.f32 %v4904, %v4905
        %v4907 = vrot.slane %v4906, 1
        %v4908 = vadd.f32 %v4906, %v4907
        %v4909 = vmul.f32 %v1108, %v4908
        %v4911 = vrot.slane %v4909, 7
        %v4913 = vadd.f32 %v4442, %v4911
        %v4914 = vmax.f32 %v1115, 1e-12
        %v4915 = vrcp.pop %v4914
        %v4916 = vmul.f32 %v4914, %v4915
        %v4917 = vsub.f32 2.0, %v4916
        %v4918 = vmul.f32 %v4915, %v4917
        %v4919 = vmul.f32 %v4913, %v4918
        %4920 = vst [vmem:[%s461] sm:$0x1] %v4919
        %s4921 = sand.u32 %s296, 1
        %s4922 = scalar_lea.sflag [#allocation4], %s4921
        %s4923 = sand.u32 %s296, 1
        %s4924 = scalar_lea.vmem [#allocation3], %s4923
        // Predicated region
        $region107: #{tpu_custom_call.1} parent=101 // pred_check
          %p4925 = pneg %p306
        $region108: #{tpu_custom_call.1} parent=101 // pred_check_branch
          %4927 = sbr.rel (%p4925) target = $region110
        $region109: #{tpu_custom_call.1} parent=101 // pred_region
          %s4929 = ssub.s32 16, 16
          %4930 = vsyncadd %s4922, %s4929
          %s4931 = smul.addr %s26, 16
          %s4932 = scalar_lea.hbm %s12, %s4931
          %s4934 = sshll.u32 %s4924, 4
          %s4935 = int_to_ptr.vmem [resolvable:$true] %s4934
          %4937 = dma.vmem_to_hbm [thread:$0]  %s4935, 16, %s4932, %s4922
        $region110: #{tpu_custom_call.1} parent=101 // pred_fallthru
          _
      $region102: #{tpu_custom_call.1} parent=5 // pred_fallthru
        _
      %p4938 = scmp.le.s32.totalorder 2, %s21
      // Predicated region
      $region111: #{tpu_custom_call.1} parent=5 // pred_check
        %p4939 = pneg %p4938
      $region112: #{tpu_custom_call.1} parent=5 // pred_check_branch
        %4941 = sbr.rel (%p4939) target = $region114
      $region113: #{tpu_custom_call.1} parent=5 // pred_region
        %s4942 = ssub.s32 %s21, 2
        // Predicated region
        $region115: #{tpu_custom_call.1} parent=113 // pred_check
          %p4943 = pneg %p312
        $region116: #{tpu_custom_call.1} parent=113 // pred_check_branch
          %4945 = sbr.rel (%p4943) target = $region118
        $region117: #{tpu_custom_call.1} parent=113 // pred_region
          %s4946 = sand.u32 %s297, 1
          %s4947 = scalar_lea.sflag [#allocation4], %s4946
          %s4948 = sand.u32 %s297, 1
          %s4949 = scalar_lea.vmem [#allocation3], %s4948
          %4950 = dma.done %s4947, 16
        $region118: #{tpu_custom_call.1} parent=113 // pred_fallthru
          _
      $region114: #{tpu_custom_call.1} parent=5 // pred_fallthru
        _
    $region6: #{tpu_custom_call.1} parent=1 // loop_footer
      %s25 = sadd.s32 1, %s21
    $region7: #{tpu_custom_call.1} parent=1 // loop_footer_branch
      %20 = sbr.rel target = $region3
    $region8: #{tpu_custom_call.1} parent=1 // loop_exit
      _
    %4951 = vsyncpa [#allocation4], 1
    %s4952 = scalar_lea.sflag [#allocation4], 1
    %4953 = vsyncpa %s4952, 1

</llo_original>
